<compile_context>
chip_gen: v7x
topology: tpu7x:2x2x1
jax: 0.10.0
libtpu: 0.0.40
codegen_flags: <defaults>
</compile_context>

<pallas_src>
import numpy as np
import jax
import jax.numpy as jnp
from jax import lax
from jax.experimental import pallas as pl
from jax.experimental.pallas import tpu as pltpu


# ------------------------------ fused kernel --------------------------------

def _make_fused_kernel(n, h, w, cin, mid, cout):
    M = n * h * w
    M2 = n * (h // 2) * (w // 2)

    def kernel(x_ref, w14_ref, w2_ref, b2_ref, w3_ref, b3_ref,
               rr_ref, cc_ref, src_ref, out_ref):
        x = x_ref[...]                       # (cin+1, M); last row is ones
        rr = rr_ref[...]                     # (1, M) int32 row-in-image
        cc = cc_ref[...]                     # (1, M) int32 col-in-image

        # conv_1_bottleneck + conv (shortcut), both 1x1 + ReLU, fused into one
        # MXU dot; biases folded into the last weight column (ones row of x).
        y1z = jnp.maximum(
            jnp.dot(w14_ref[...], x, preferred_element_type=jnp.float32), 0.0)
        y1 = y1z[:mid]                       # (mid,  M) bottleneck branch
        z = y1z[mid:]                        # (cout, M) shortcut branch, >= 0

        # conv_2_bottleneck (3x3, stride 2, pad 1): stride-1 full map as the
        # sum of 9 per-tap dots.  Each tap = pltpu.roll (XLU) + 0/1 boundary
        # mask (VPU); every roll-wraparound / row- / batch-boundary position
        # is killed by the mask, so zero padding is exact.
        full = None
        for dh in range(3):
            for dw in range(3):
                t = dh * 3 + dw
                d = (dh - 1) * w + (dw - 1)
                if d == 0:
                    tap = y1                 # center tap: no shift, no mask
                else:
                    shifted = pltpu.roll(y1, (-d) % M, axis=1)
                    conds = []
                    if dh == 0:
                        conds.append(rr >= 1)
                    if dh == 2:
                        conds.append(rr <= h - 2)
                    if dw == 0:
                        conds.append(cc >= 1)
                    if dw == 2:
                        conds.append(cc <= w - 2)
                    valid = conds[0]
                    for c in conds[1:]:
                        valid = valid & c
                    tap = shifted * valid.astype(jnp.float32)
                contrib = jnp.dot(w2_ref[t], tap,
                                  preferred_element_type=jnp.float32)
                full = contrib if full is None else full + contrib   # (mid, M)

        # MaxPool2d(3, stride=2, ceil_mode=True): stride-1 running max of z.
        # Masked-to-zero taps are exact because z >= 0 post-ReLU and every
        # ceil_mode window contains at least one valid element.
        mfull = z
        for dh in range(3):
            for dw in range(3):
                if dh == 0 and dw == 0:
                    continue
                d = dh * w + dw
                shifted = pltpu.roll(z, (-d) % M, axis=1)
                conds = []
                if dh > 0:
                    conds.append(rr < h - dh)
                if dw > 0:
                    conds.append(cc < w - dw)
                valid = conds[0]
                for c in conds[1:]:
                    valid = valid & c
                mfull = jnp.maximum(mfull, shifted * valid.astype(jnp.float32))

        # Shared stride-2 subsample: ONE gather-as-matmul for both branches.
        # The 0/1 selection matrix is generated in-kernel (zero HBM bytes).
        p_iota = lax.broadcasted_iota(jnp.int32, (M, 1), 0)
        sel = (p_iota == src_ref[...]).astype(jnp.float32)        # (M, M2)
        stacked = jnp.concatenate([full, mfull], axis=0)          # (mid+cout, M)
        picked = jnp.dot(stacked, sel,
                         preferred_element_type=jnp.float32)      # (mid+cout, M2)

        # conv_3_bottleneck (1x1) + ReLU on the subsampled conv2 output.
        y2 = jnp.maximum(picked[:mid] + b2_ref[...], 0.0)          # (mid, M2)
        out1 = jnp.maximum(
            jnp.dot(w3_ref[...], y2, preferred_element_type=jnp.float32)
            + b3_ref[...], 0.0)                                    # (cout, M2)

        # Concatenated output (channels on sublanes, spatial lane-dense, 128).
        out_ref[0:cout, :] = out1.astype(out_ref.dtype)
        out_ref[cout:2 * cout, :] = picked[mid:].astype(out_ref.dtype)

    return kernel


# --------------------- one-time parameter / constant prep -------------------

def prepare_constants(params, x_shape):
    """Hoisted preprocessing: fused/reshaped weights + tiny int32 index vecs."""
    n, cin, h, w = x_shape
    assert h % 2 == 0 and w % 2 == 0  # torch.cat needs matching spatial dims
    mid = params["w1"].shape[0]
    cout = params["w3"].shape[0]
    oh, ow = h // 2, w // 2
    M, M2 = n * h * w, n * oh * ow

    w1 = np.asarray(params["w1"], np.float32).reshape(mid, cin)
    w4 = np.asarray(params["w4"], np.float32).reshape(cout, cin)
    b1 = np.asarray(params["b1"], np.float32).reshape(mid, 1)
    b4 = np.asarray(params["b4"], np.float32).reshape(cout, 1)
    # conv1 + conv fused; biases folded as an extra column (ones row of x).
    w14 = np.concatenate(
        [np.concatenate([w1, b1], axis=1),
         np.concatenate([w4, b4], axis=1)], axis=0)            # (mid+cout, cin+1)

    # (co, ci, kh, kw) -> (kh*kw, co, ci): one (mid, mid) weight per tap.
    w2t = np.transpose(np.asarray(params["w2"], np.float32),
                       (2, 3, 0, 1)).reshape(9, mid, mid)
    w3_ = np.asarray(params["w3"], np.float32).reshape(cout, mid)
    b2 = np.asarray(params["b2"], np.float32).reshape(mid, 1)
    b3 = np.asarray(params["b3"], np.float32).reshape(cout, 1)

    # Tiny int32 index vectors (~5 KB): per-position row/col within the image
    # and, for each stride-2 output position, its flat source index.  The 9
    # boundary masks and the (M, M2) selection matrix are rebuilt in-kernel.
    pos = np.arange(h * w, dtype=np.int32)
    rr = np.tile(pos // w, n).reshape(1, M).astype(np.int32)
    cc = np.tile(pos % w, n).reshape(1, M).astype(np.int32)
    q = np.arange(M2, dtype=np.int32)
    b_idx, rem = q // (oh * ow), q % (oh * ow)
    src = (b_idx * h * w + 2 * (rem // ow) * w
           + 2 * (rem % ow)).reshape(1, M2).astype(np.int32)

    return {"w14": jnp.asarray(w14), "w2t": jnp.asarray(w2t),
            "b2": jnp.asarray(b2), "w3": jnp.asarray(w3_), "b3": jnp.asarray(b3),
            "rr": jnp.asarray(rr), "cc": jnp.asarray(cc), "src": jnp.asarray(src)}


# ------------------------------ forward pass ---------------------------------

def bottleneck_forward(x_nchw, consts):
    n, cin, h, w = x_nchw.shape
    assert h % 2 == 0 and w % 2 == 0
    mid = consts["b2"].shape[0]
    cout = consts["w3"].shape[0]
    oh, ow = h // 2, w // 2
    M, M2 = n * h * w, n * oh * ow

    # Boundary layout glue: NCHW -> (C, N*H*W) lane-dense, plus a ones row so
    # the conv1/conv4 biases fold into the fused weight matrix.
    x_flat = jnp.transpose(x_nchw, (1, 0, 2, 3)).reshape(cin, M).astype(jnp.float32)
    x_aug = jnp.concatenate([x_flat, jnp.ones((1, M), jnp.float32)], axis=0)

    kernel = _make_fused_kernel(n, h, w, cin, mid, cout)

    vmem = pl.BlockSpec(memory_space=pltpu.MemorySpace.VMEM)
    out_flat = pl.pallas_call(
        kernel,
        out_shape=jax.ShapeDtypeStruct((2 * cout, M2), jnp.float32),
        in_specs=[vmem] * 9,        # single invocation, whole operands in VMEM
        out_specs=vmem,             # no trivial grid / no useless double-buffer
    )(x_aug, consts["w14"], consts["w2t"], consts["b2"], consts["w3"],
      consts["b3"], consts["rr"], consts["cc"], consts["src"])

    # (2*cout, n*oh*ow) -> NCHW, matching torch.cat(dim=1).
    out = out_flat.reshape(2 * cout, n, oh, ow)
    return jnp.transpose(out, (1, 0, 2, 3))


# --------------------------- parameters (synthetic) --------------------------

def init_params(key, in_channels, out_channels):
    mid = in_channels // 2
    ks = jax.random.split(key, 8)

    def u(k, shape, fan_in):
        bound = 1.0 / np.sqrt(fan_in)
        return jax.random.uniform(k, shape, jnp.float32, -bound, bound)

    return {
        "w1": u(ks[0], (mid, in_channels, 1, 1), in_channels),           # conv_1_bottleneck
        "b1": u(ks[1], (mid,), in_channels),
        "w2": u(ks[2], (mid, mid, 3, 3), mid * 9),                       # conv_2_bottleneck
        "b2": u(ks[3], (mid,), mid * 9),
        "w3": u(ks[4], (out_channels, mid, 1, 1), mid),                  # conv_3_bottleneck
        "b3": u(ks[5], (out_channels,), mid),
        "w4": u(ks[6], (out_channels, in_channels, 1, 1), in_channels),  # conv
        "b4": u(ks[7], (out_channels,), in_channels),
    }


# ------------------------------ pure-JAX reference ---------------------------

def reference_forward(x, params):
    def conv(x, w, b, stride=1, pad=0):
        y = lax.conv_general_dilated(
            x, w, (stride, stride), [(pad, pad), (pad, pad)],
            dimension_numbers=("NCHW", "OIHW", "NCHW"))
        return y + b.reshape(1, -1, 1, 1)

    out1 = jax.nn.relu(conv(x, params["w1"], params["b1"]))
    out1 = jax.nn.relu(conv(out1, params["w2"], params["b2"], stride=2, pad=1))
    out1 = jax.nn.relu(conv(out1, params["w3"], params["b3"]))
    out2 = jax.nn.relu(conv(x, params["w4"], params["b4"]))
    n, c, h, w = out2.shape
    hpool = -((h - 3) // -2) + 1
    wpool = -((w - 3) // -2) + 1
    pad_h = 2 * (hpool - 1) + 3 - h
    pad_w = 2 * (wpool - 1) + 3 - w
    out2 = lax.reduce_window(out2, -jnp.inf, lax.max, (1, 1, 3, 3), (1, 1, 2, 2),
                             [(0, 0), (0, 0), (0, pad_h), (0, pad_w)])
    return jnp.concatenate([out1, out2], axis=1)


# ------------------------------------ main -----------------------------------

if __name__ == "__main__":
    key = jax.random.PRNGKey(0)
    kx, kp = jax.random.split(key)
    in_channels, out_channels = 4, 8
    x = jax.random.normal(kx, (2, in_channels, 16, 16), jnp.float32)
    params = init_params(kp, in_channels, out_channels)

    consts = prepare_constants(params, x.shape)      # one-time preprocessing
    fwd = jax.jit(bottleneck_forward)

    out = jax.block_until_ready(fwd(x, consts))
    ref = jax.block_until_ready(reference_forward(x, params))

    assert out.shape == (2, 2 * out_channels, 8, 8), out.shape
    assert np.allclose(np.asarray(out), np.asarray(ref), atol=1e-4, rtol=1e-4)
    print("KERNEL_OK")
</pallas_src>

<mosaic_0001>
module attributes {stable_mosaic.version = 11 : i64} {
  func.func @kernel(%arg0: memref<5x512xf32, #tpu.memory_space<vmem>>, %arg1: memref<10x5xf32, #tpu.memory_space<vmem>>, %arg2: memref<9x2x2xf32, #tpu.memory_space<vmem>>, %arg3: memref<2x1xf32, #tpu.memory_space<vmem>>, %arg4: memref<8x2xf32, #tpu.memory_space<vmem>>, %arg5: memref<8x1xf32, #tpu.memory_space<vmem>>, %arg6: memref<1x512xi32, #tpu.memory_space<vmem>>, %arg7: memref<1x512xi32, #tpu.memory_space<vmem>>, %arg8: memref<1x128xi32, #tpu.memory_space<vmem>>, %arg9: memref<16x128xf32, #tpu.memory_space<vmem>>) attributes {dimension_semantics = [], scalar_prefetch = 0 : i64, scratch_operands = 0 : i64, tpu.core_type = #tpu.core_type<tc>} {
    %c0 = arith.constant 0 : index
    %c0_0 = arith.constant 0 : index
    %0 = vector.load %arg0[%c0, %c0_0] : memref<5x512xf32, #tpu.memory_space<vmem>>, vector<5x512xf32>
    %c0_1 = arith.constant 0 : index
    %c0_2 = arith.constant 0 : index
    %1 = vector.load %arg6[%c0_1, %c0_2] : memref<1x512xi32, #tpu.memory_space<vmem>>, vector<1x512xi32>
    %c0_3 = arith.constant 0 : index
    %c0_4 = arith.constant 0 : index
    %2 = vector.load %arg7[%c0_3, %c0_4] : memref<1x512xi32, #tpu.memory_space<vmem>>, vector<1x512xi32>
    %c0_5 = arith.constant 0 : index
    %c0_6 = arith.constant 0 : index
    %3 = vector.load %arg1[%c0_5, %c0_6] : memref<10x5xf32, #tpu.memory_space<vmem>>, vector<10x5xf32>
    %cst = arith.constant dense<0.000000e+00> : vector<10x512xf32>
    %4 = tpu.matmul %3, %0, %cst {dimension_numbers = #tpu.dot_dimension_numbers<[1], [0], [0], [1], [0, 0, 1, 1], [], []>} : vector<10x5xf32>, vector<5x512xf32>, vector<10x512xf32> -> vector<10x512xf32>
    %cst_7 = arith.constant 0.000000e+00 : f32
    %5 = vector.broadcast %cst_7 : f32 to vector<10x512xf32>
    %6 = arith.maximumf %4, %5 : vector<10x512xf32>
    %7 = vector.extract_strided_slice %6 {offsets = [0, 0], sizes = [2, 512], strides = [1, 1]} : vector<10x512xf32> to vector<2x512xf32>
    %8 = vector.extract_strided_slice %6 {offsets = [2, 0], sizes = [8, 512], strides = [1, 1]} : vector<10x512xf32> to vector<8x512xf32>
    %c17_i32 = arith.constant 17 : i32
    %9 = tpu.dynamic_rotate %7 by %c17_i32 dim 1 : vector<2x512xf32>, i32 -> vector<2x512xf32>
    %c1_i32 = arith.constant 1 : i32
    %10 = vector.broadcast %c1_i32 : i32 to vector<1x512xi32>
    %11 = arith.cmpi sge, %1, %10 : vector<1x512xi32>
    %c1_i32_8 = arith.constant 1 : i32
    %12 = vector.broadcast %c1_i32_8 : i32 to vector<1x512xi32>
    %13 = arith.cmpi sge, %2, %12 : vector<1x512xi32>
    %14 = arith.andi %11, %13 : vector<1x512xi1>
    %15 = arith.extui %14 : vector<1x512xi1> to vector<1x512xi32>
    %16 = arith.sitofp %15 : vector<1x512xi32> to vector<1x512xf32>
    %17 = vector.broadcast %16 : vector<1x512xf32> to vector<2x512xf32>
    %18 = arith.mulf %9, %17 : vector<2x512xf32>
    %c0_9 = arith.constant 0 : index
    %c0_10 = arith.constant 0 : index
    %c0_11 = arith.constant 0 : index
    %19 = vector.load %arg2[%c0_9, %c0_10, %c0_11] : memref<9x2x2xf32, #tpu.memory_space<vmem>>, vector<1x2x2xf32>
    %20 = vector.shape_cast %19 : vector<1x2x2xf32> to vector<2x2xf32>
    %cst_12 = arith.constant dense<0.000000e+00> : vector<2x512xf32>
    %21 = tpu.matmul %20, %18, %cst_12 {dimension_numbers = #tpu.dot_dimension_numbers<[1], [0], [0], [1], [0, 0, 1, 1], [], []>} : vector<2x2xf32>, vector<2x512xf32>, vector<2x512xf32> -> vector<2x512xf32>
    %c16_i32 = arith.constant 16 : i32
    %22 = tpu.dynamic_rotate %7 by %c16_i32 dim 1 : vector<2x512xf32>, i32 -> vector<2x512xf32>
    %c1_i32_13 = arith.constant 1 : i32
    %23 = vector.broadcast %c1_i32_13 : i32 to vector<1x512xi32>
    %24 = arith.cmpi sge, %1, %23 : vector<1x512xi32>
    %25 = arith.extui %24 : vector<1x512xi1> to vector<1x512xi32>
    %26 = arith.sitofp %25 : vector<1x512xi32> to vector<1x512xf32>
    %27 = vector.broadcast %26 : vector<1x512xf32> to vector<2x512xf32>
    %28 = arith.mulf %22, %27 : vector<2x512xf32>
    %c1 = arith.constant 1 : index
    %c0_14 = arith.constant 0 : index
    %c0_15 = arith.constant 0 : index
    %29 = vector.load %arg2[%c1, %c0_14, %c0_15] : memref<9x2x2xf32, #tpu.memory_space<vmem>>, vector<1x2x2xf32>
    %30 = vector.shape_cast %29 : vector<1x2x2xf32> to vector<2x2xf32>
    %cst_16 = arith.constant dense<0.000000e+00> : vector<2x512xf32>
    %31 = tpu.matmul %30, %28, %cst_16 {dimension_numbers = #tpu.dot_dimension_numbers<[1], [0], [0], [1], [0, 0, 1, 1], [], []>} : vector<2x2xf32>, vector<2x512xf32>, vector<2x512xf32> -> vector<2x512xf32>
    %32 = arith.addf %21, %31 : vector<2x512xf32>
    %c15_i32 = arith.constant 15 : i32
    %33 = tpu.dynamic_rotate %7 by %c15_i32 dim 1 : vector<2x512xf32>, i32 -> vector<2x512xf32>
    %c1_i32_17 = arith.constant 1 : i32
    %34 = vector.broadcast %c1_i32_17 : i32 to vector<1x512xi32>
    %35 = arith.cmpi sge, %1, %34 : vector<1x512xi32>
    %c14_i32 = arith.constant 14 : i32
    %36 = vector.broadcast %c14_i32 : i32 to vector<1x512xi32>
    %37 = arith.cmpi sle, %2, %36 : vector<1x512xi32>
    %38 = arith.andi %35, %37 : vector<1x512xi1>
    %39 = arith.extui %38 : vector<1x512xi1> to vector<1x512xi32>
    %40 = arith.sitofp %39 : vector<1x512xi32> to vector<1x512xf32>
    %41 = vector.broadcast %40 : vector<1x512xf32> to vector<2x512xf32>
    %42 = arith.mulf %33, %41 : vector<2x512xf32>
    %c2 = arith.constant 2 : index
    %c0_18 = arith.constant 0 : index
    %c0_19 = arith.constant 0 : index
    %43 = vector.load %arg2[%c2, %c0_18, %c0_19] : memref<9x2x2xf32, #tpu.memory_space<vmem>>, vector<1x2x2xf32>
    %44 = vector.shape_cast %43 : vector<1x2x2xf32> to vector<2x2xf32>
    %cst_20 = arith.constant dense<0.000000e+00> : vector<2x512xf32>
    %45 = tpu.matmul %44, %42, %cst_20 {dimension_numbers = #tpu.dot_dimension_numbers<[1], [0], [0], [1], [0, 0, 1, 1], [], []>} : vector<2x2xf32>, vector<2x512xf32>, vector<2x512xf32> -> vector<2x512xf32>
    %46 = arith.addf %32, %45 : vector<2x512xf32>
    %c1_i32_21 = arith.constant 1 : i32
    %47 = tpu.dynamic_rotate %7 by %c1_i32_21 dim 1 : vector<2x512xf32>, i32 -> vector<2x512xf32>
    %c1_i32_22 = arith.constant 1 : i32
    %48 = vector.broadcast %c1_i32_22 : i32 to vector<1x512xi32>
    %49 = arith.cmpi sge, %2, %48 : vector<1x512xi32>
    %50 = arith.extui %49 : vector<1x512xi1> to vector<1x512xi32>
    %51 = arith.sitofp %50 : vector<1x512xi32> to vector<1x512xf32>
    %52 = vector.broadcast %51 : vector<1x512xf32> to vector<2x512xf32>
    %53 = arith.mulf %47, %52 : vector<2x512xf32>
    %c3 = arith.constant 3 : index
    %c0_23 = arith.constant 0 : index
    %c0_24 = arith.constant 0 : index
    %54 = vector.load %arg2[%c3, %c0_23, %c0_24] : memref<9x2x2xf32, #tpu.memory_space<vmem>>, vector<1x2x2xf32>
    %55 = vector.shape_cast %54 : vector<1x2x2xf32> to vector<2x2xf32>
    %cst_25 = arith.constant dense<0.000000e+00> : vector<2x512xf32>
    %56 = tpu.matmul %55, %53, %cst_25 {dimension_numbers = #tpu.dot_dimension_numbers<[1], [0], [0], [1], [0, 0, 1, 1], [], []>} : vector<2x2xf32>, vector<2x512xf32>, vector<2x512xf32> -> vector<2x512xf32>
    %57 = arith.addf %46, %56 : vector<2x512xf32>
    %c4 = arith.constant 4 : index
    %c0_26 = arith.constant 0 : index
    %c0_27 = arith.constant 0 : index
    %58 = vector.load %arg2[%c4, %c0_26, %c0_27] : memref<9x2x2xf32, #tpu.memory_space<vmem>>, vector<1x2x2xf32>
    %59 = vector.shape_cast %58 : vector<1x2x2xf32> to vector<2x2xf32>
    %cst_28 = arith.constant dense<0.000000e+00> : vector<2x512xf32>
    %60 = tpu.matmul %59, %7, %cst_28 {dimension_numbers = #tpu.dot_dimension_numbers<[1], [0], [0], [1], [0, 0, 1, 1], [], []>} : vector<2x2xf32>, vector<2x512xf32>, vector<2x512xf32> -> vector<2x512xf32>
    %61 = arith.addf %57, %60 : vector<2x512xf32>
    %c511_i32 = arith.constant 511 : i32
    %62 = tpu.dynamic_rotate %7 by %c511_i32 dim 1 : vector<2x512xf32>, i32 -> vector<2x512xf32>
    %c14_i32_29 = arith.constant 14 : i32
    %63 = vector.broadcast %c14_i32_29 : i32 to vector<1x512xi32>
    %64 = arith.cmpi sle, %2, %63 : vector<1x512xi32>
    %65 = arith.extui %64 : vector<1x512xi1> to vector<1x512xi32>
    %66 = arith.sitofp %65 : vector<1x512xi32> to vector<1x512xf32>
    %67 = vector.broadcast %66 : vector<1x512xf32> to vector<2x512xf32>
    %68 = arith.mulf %62, %67 : vector<2x512xf32>
    %c5 = arith.constant 5 : index
    %c0_30 = arith.constant 0 : index
    %c0_31 = arith.constant 0 : index
    %69 = vector.load %arg2[%c5, %c0_30, %c0_31] : memref<9x2x2xf32, #tpu.memory_space<vmem>>, vector<1x2x2xf32>
    %70 = vector.shape_cast %69 : vector<1x2x2xf32> to vector<2x2xf32>
    %cst_32 = arith.constant dense<0.000000e+00> : vector<2x512xf32>
    %71 = tpu.matmul %70, %68, %cst_32 {dimension_numbers = #tpu.dot_dimension_numbers<[1], [0], [0], [1], [0, 0, 1, 1], [], []>} : vector<2x2xf32>, vector<2x512xf32>, vector<2x512xf32> -> vector<2x512xf32>
    %72 = arith.addf %61, %71 : vector<2x512xf32>
    %c497_i32 = arith.constant 497 : i32
    %73 = tpu.dynamic_rotate %7 by %c497_i32 dim 1 : vector<2x512xf32>, i32 -> vector<2x512xf32>
    %c14_i32_33 = arith.constant 14 : i32
    %74 = vector.broadcast %c14_i32_33 : i32 to vector<1x512xi32>
    %75 = arith.cmpi sle, %1, %74 : vector<1x512xi32>
    %c1_i32_34 = arith.constant 1 : i32
    %76 = vector.broadcast %c1_i32_34 : i32 to vector<1x512xi32>
    %77 = arith.cmpi sge, %2, %76 : vector<1x512xi32>
    %78 = arith.andi %75, %77 : vector<1x512xi1>
    %79 = arith.extui %78 : vector<1x512xi1> to vector<1x512xi32>
    %80 = arith.sitofp %79 : vector<1x512xi32> to vector<1x512xf32>
    %81 = vector.broadcast %80 : vector<1x512xf32> to vector<2x512xf32>
    %82 = arith.mulf %73, %81 : vector<2x512xf32>
    %c6 = arith.constant 6 : index
    %c0_35 = arith.constant 0 : index
    %c0_36 = arith.constant 0 : index
    %83 = vector.load %arg2[%c6, %c0_35, %c0_36] : memref<9x2x2xf32, #tpu.memory_space<vmem>>, vector<1x2x2xf32>
    %84 = vector.shape_cast %83 : vector<1x2x2xf32> to vector<2x2xf32>
    %cst_37 = arith.constant dense<0.000000e+00> : vector<2x512xf32>
    %85 = tpu.matmul %84, %82, %cst_37 {dimension_numbers = #tpu.dot_dimension_numbers<[1], [0], [0], [1], [0, 0, 1, 1], [], []>} : vector<2x2xf32>, vector<2x512xf32>, vector<2x512xf32> -> vector<2x512xf32>
    %86 = arith.addf %72, %85 : vector<2x512xf32>
    %c496_i32 = arith.constant 496 : i32
    %87 = tpu.dynamic_rotate %7 by %c496_i32 dim 1 : vector<2x512xf32>, i32 -> vector<2x512xf32>
    %c14_i32_38 = arith.constant 14 : i32
    %88 = vector.broadcast %c14_i32_38 : i32 to vector<1x512xi32>
    %89 = arith.cmpi sle, %1, %88 : vector<1x512xi32>
    %90 = arith.extui %89 : vector<1x512xi1> to vector<1x512xi32>
    %91 = arith.sitofp %90 : vector<1x512xi32> to vector<1x512xf32>
    %92 = vector.broadcast %91 : vector<1x512xf32> to vector<2x512xf32>
    %93 = arith.mulf %87, %92 : vector<2x512xf32>
    %c7 = arith.constant 7 : index
    %c0_39 = arith.constant 0 : index
    %c0_40 = arith.constant 0 : index
    %94 = vector.load %arg2[%c7, %c0_39, %c0_40] : memref<9x2x2xf32, #tpu.memory_space<vmem>>, vector<1x2x2xf32>
    %95 = vector.shape_cast %94 : vector<1x2x2xf32> to vector<2x2xf32>
    %cst_41 = arith.constant dense<0.000000e+00> : vector<2x512xf32>
    %96 = tpu.matmul %95, %93, %cst_41 {dimension_numbers = #tpu.dot_dimension_numbers<[1], [0], [0], [1], [0, 0, 1, 1], [], []>} : vector<2x2xf32>, vector<2x512xf32>, vector<2x512xf32> -> vector<2x512xf32>
    %97 = arith.addf %86, %96 : vector<2x512xf32>
    %c495_i32 = arith.constant 495 : i32
    %98 = tpu.dynamic_rotate %7 by %c495_i32 dim 1 : vector<2x512xf32>, i32 -> vector<2x512xf32>
    %c14_i32_42 = arith.constant 14 : i32
    %99 = vector.broadcast %c14_i32_42 : i32 to vector<1x512xi32>
    %100 = arith.cmpi sle, %1, %99 : vector<1x512xi32>
    %c14_i32_43 = arith.constant 14 : i32
    %101 = vector.broadcast %c14_i32_43 : i32 to vector<1x512xi32>
    %102 = arith.cmpi sle, %2, %101 : vector<1x512xi32>
    %103 = arith.andi %100, %102 : vector<1x512xi1>
    %104 = arith.extui %103 : vector<1x512xi1> to vector<1x512xi32>
    %105 = arith.sitofp %104 : vector<1x512xi32> to vector<1x512xf32>
    %106 = vector.broadcast %105 : vector<1x512xf32> to vector<2x512xf32>
    %107 = arith.mulf %98, %106 : vector<2x512xf32>
    %c8 = arith.constant 8 : index
    %c0_44 = arith.constant 0 : index
    %c0_45 = arith.constant 0 : index
    %108 = vector.load %arg2[%c8, %c0_44, %c0_45] : memref<9x2x2xf32, #tpu.memory_space<vmem>>, vector<1x2x2xf32>
    %109 = vector.shape_cast %108 : vector<1x2x2xf32> to vector<2x2xf32>
    %cst_46 = arith.constant dense<0.000000e+00> : vector<2x512xf32>
    %110 = tpu.matmul %109, %107, %cst_46 {dimension_numbers = #tpu.dot_dimension_numbers<[1], [0], [0], [1], [0, 0, 1, 1], [], []>} : vector<2x2xf32>, vector<2x512xf32>, vector<2x512xf32> -> vector<2x512xf32>
    %111 = arith.addf %97, %110 : vector<2x512xf32>
    %c511_i32_47 = arith.constant 511 : i32
    %112 = tpu.dynamic_rotate %8 by %c511_i32_47 dim 1 : vector<8x512xf32>, i32 -> vector<8x512xf32>
    %c15_i32_48 = arith.constant 15 : i32
    %113 = vector.broadcast %c15_i32_48 : i32 to vector<1x512xi32>
    %114 = arith.cmpi slt, %2, %113 : vector<1x512xi32>
    %115 = arith.extui %114 : vector<1x512xi1> to vector<1x512xi32>
    %116 = arith.sitofp %115 : vector<1x512xi32> to vector<1x512xf32>
    %117 = vector.broadcast %116 : vector<1x512xf32> to vector<8x512xf32>
    %118 = arith.mulf %112, %117 : vector<8x512xf32>
    %119 = arith.maximumf %8, %118 : vector<8x512xf32>
    %c510_i32 = arith.constant 510 : i32
    %120 = tpu.dynamic_rotate %8 by %c510_i32 dim 1 : vector<8x512xf32>, i32 -> vector<8x512xf32>
    %c14_i32_49 = arith.constant 14 : i32
    %121 = vector.broadcast %c14_i32_49 : i32 to vector<1x512xi32>
    %122 = arith.cmpi slt, %2, %121 : vector<1x512xi32>
    %123 = arith.extui %122 : vector<1x512xi1> to vector<1x512xi32>
    %124 = arith.sitofp %123 : vector<1x512xi32> to vector<1x512xf32>
    %125 = vector.broadcast %124 : vector<1x512xf32> to vector<8x512xf32>
    %126 = arith.mulf %120, %125 : vector<8x512xf32>
    %127 = arith.maximumf %119, %126 : vector<8x512xf32>
    %c496_i32_50 = arith.constant 496 : i32
    %128 = tpu.dynamic_rotate %8 by %c496_i32_50 dim 1 : vector<8x512xf32>, i32 -> vector<8x512xf32>
    %c15_i32_51 = arith.constant 15 : i32
    %129 = vector.broadcast %c15_i32_51 : i32 to vector<1x512xi32>
    %130 = arith.cmpi slt, %1, %129 : vector<1x512xi32>
    %131 = arith.extui %130 : vector<1x512xi1> to vector<1x512xi32>
    %132 = arith.sitofp %131 : vector<1x512xi32> to vector<1x512xf32>
    %133 = vector.broadcast %132 : vector<1x512xf32> to vector<8x512xf32>
    %134 = arith.mulf %128, %133 : vector<8x512xf32>
    %135 = arith.maximumf %127, %134 : vector<8x512xf32>
    %c495_i32_52 = arith.constant 495 : i32
    %136 = tpu.dynamic_rotate %8 by %c495_i32_52 dim 1 : vector<8x512xf32>, i32 -> vector<8x512xf32>
    %c15_i32_53 = arith.constant 15 : i32
    %137 = vector.broadcast %c15_i32_53 : i32 to vector<1x512xi32>
    %138 = arith.cmpi slt, %1, %137 : vector<1x512xi32>
    %c15_i32_54 = arith.constant 15 : i32
    %139 = vector.broadcast %c15_i32_54 : i32 to vector<1x512xi32>
    %140 = arith.cmpi slt, %2, %139 : vector<1x512xi32>
    %141 = arith.andi %138, %140 : vector<1x512xi1>
    %142 = arith.extui %141 : vector<1x512xi1> to vector<1x512xi32>
    %143 = arith.sitofp %142 : vector<1x512xi32> to vector<1x512xf32>
    %144 = vector.broadcast %143 : vector<1x512xf32> to vector<8x512xf32>
    %145 = arith.mulf %136, %144 : vector<8x512xf32>
    %146 = arith.maximumf %135, %145 : vector<8x512xf32>
    %c494_i32 = arith.constant 494 : i32
    %147 = tpu.dynamic_rotate %8 by %c494_i32 dim 1 : vector<8x512xf32>, i32 -> vector<8x512xf32>
    %c15_i32_55 = arith.constant 15 : i32
    %148 = vector.broadcast %c15_i32_55 : i32 to vector<1x512xi32>
    %149 = arith.cmpi slt, %1, %148 : vector<1x512xi32>
    %c14_i32_56 = arith.constant 14 : i32
    %150 = vector.broadcast %c14_i32_56 : i32 to vector<1x512xi32>
    %151 = arith.cmpi slt, %2, %150 : vector<1x512xi32>
    %152 = arith.andi %149, %151 : vector<1x512xi1>
    %153 = arith.extui %152 : vector<1x512xi1> to vector<1x512xi32>
    %154 = arith.sitofp %153 : vector<1x512xi32> to vector<1x512xf32>
    %155 = vector.broadcast %154 : vector<1x512xf32> to vector<8x512xf32>
    %156 = arith.mulf %147, %155 : vector<8x512xf32>
    %157 = arith.maximumf %146, %156 : vector<8x512xf32>
    %c480_i32 = arith.constant 480 : i32
    %158 = tpu.dynamic_rotate %8 by %c480_i32 dim 1 : vector<8x512xf32>, i32 -> vector<8x512xf32>
    %c14_i32_57 = arith.constant 14 : i32
    %159 = vector.broadcast %c14_i32_57 : i32 to vector<1x512xi32>
    %160 = arith.cmpi slt, %1, %159 : vector<1x512xi32>
    %161 = arith.extui %160 : vector<1x512xi1> to vector<1x512xi32>
    %162 = arith.sitofp %161 : vector<1x512xi32> to vector<1x512xf32>
    %163 = vector.broadcast %162 : vector<1x512xf32> to vector<8x512xf32>
    %164 = arith.mulf %158, %163 : vector<8x512xf32>
    %165 = arith.maximumf %157, %164 : vector<8x512xf32>
    %c479_i32 = arith.constant 479 : i32
    %166 = tpu.dynamic_rotate %8 by %c479_i32 dim 1 : vector<8x512xf32>, i32 -> vector<8x512xf32>
    %c14_i32_58 = arith.constant 14 : i32
    %167 = vector.broadcast %c14_i32_58 : i32 to vector<1x512xi32>
    %168 = arith.cmpi slt, %1, %167 : vector<1x512xi32>
    %c15_i32_59 = arith.constant 15 : i32
    %169 = vector.broadcast %c15_i32_59 : i32 to vector<1x512xi32>
    %170 = arith.cmpi slt, %2, %169 : vector<1x512xi32>
    %171 = arith.andi %168, %170 : vector<1x512xi1>
    %172 = arith.extui %171 : vector<1x512xi1> to vector<1x512xi32>
    %173 = arith.sitofp %172 : vector<1x512xi32> to vector<1x512xf32>
    %174 = vector.broadcast %173 : vector<1x512xf32> to vector<8x512xf32>
    %175 = arith.mulf %166, %174 : vector<8x512xf32>
    %176 = arith.maximumf %165, %175 : vector<8x512xf32>
    %c478_i32 = arith.constant 478 : i32
    %177 = tpu.dynamic_rotate %8 by %c478_i32 dim 1 : vector<8x512xf32>, i32 -> vector<8x512xf32>
    %c14_i32_60 = arith.constant 14 : i32
    %178 = vector.broadcast %c14_i32_60 : i32 to vector<1x512xi32>
    %179 = arith.cmpi slt, %1, %178 : vector<1x512xi32>
    %c14_i32_61 = arith.constant 14 : i32
    %180 = vector.broadcast %c14_i32_61 : i32 to vector<1x512xi32>
    %181 = arith.cmpi slt, %2, %180 : vector<1x512xi32>
    %182 = arith.andi %179, %181 : vector<1x512xi1>
    %183 = arith.extui %182 : vector<1x512xi1> to vector<1x512xi32>
    %184 = arith.sitofp %183 : vector<1x512xi32> to vector<1x512xf32>
    %185 = vector.broadcast %184 : vector<1x512xf32> to vector<8x512xf32>
    %186 = arith.mulf %177, %185 : vector<8x512xf32>
    %187 = arith.maximumf %176, %186 : vector<8x512xf32>
    %188 = tpu.iota {dimensions = array<i32: 0>} : vector<512x1xi32>
    %c0_62 = arith.constant 0 : index
    %c0_63 = arith.constant 0 : index
    %189 = vector.load %arg8[%c0_62, %c0_63] : memref<1x128xi32, #tpu.memory_space<vmem>>, vector<1x128xi32>
    %190 = vector.broadcast %188 : vector<512x1xi32> to vector<512x128xi32>
    %191 = vector.broadcast %189 : vector<1x128xi32> to vector<512x128xi32>
    %192 = arith.cmpi eq, %190, %191 : vector<512x128xi32>
    %193 = arith.extui %192 : vector<512x128xi1> to vector<512x128xi32>
    %194 = arith.sitofp %193 : vector<512x128xi32> to vector<512x128xf32>
    %195 = tpu.concatenate %111, %187 in 0 : vector<2x512xf32>, vector<8x512xf32> -> vector<10x512xf32>
    %cst_64 = arith.constant dense<0.000000e+00> : vector<10x128xf32>
    %196 = tpu.matmul %195, %194, %cst_64 {dimension_numbers = #tpu.dot_dimension_numbers<[1], [0], [0], [1], [0, 0, 1, 1], [], []>} : vector<10x512xf32>, vector<512x128xf32>, vector<10x128xf32> -> vector<10x128xf32>
    %197 = vector.extract_strided_slice %196 {offsets = [0, 0], sizes = [2, 128], strides = [1, 1]} : vector<10x128xf32> to vector<2x128xf32>
    %c0_65 = arith.constant 0 : index
    %c0_66 = arith.constant 0 : index
    %198 = vector.load %arg3[%c0_65, %c0_66] : memref<2x1xf32, #tpu.memory_space<vmem>>, vector<2x1xf32>
    %199 = vector.broadcast %198 : vector<2x1xf32> to vector<2x128xf32>
    %200 = arith.addf %197, %199 : vector<2x128xf32>
    %cst_67 = arith.constant 0.000000e+00 : f32
    %201 = vector.broadcast %cst_67 : f32 to vector<2x128xf32>
    %202 = arith.maximumf %200, %201 : vector<2x128xf32>
    %c0_68 = arith.constant 0 : index
    %c0_69 = arith.constant 0 : index
    %203 = vector.load %arg4[%c0_68, %c0_69] : memref<8x2xf32, #tpu.memory_space<vmem>>, vector<8x2xf32>
    %cst_70 = arith.constant dense<0.000000e+00> : vector<8x128xf32>
    %204 = tpu.matmul %203, %202, %cst_70 {dimension_numbers = #tpu.dot_dimension_numbers<[1], [0], [0], [1], [0, 0, 1, 1], [], []>} : vector<8x2xf32>, vector<2x128xf32>, vector<8x128xf32> -> vector<8x128xf32>
    %c0_71 = arith.constant 0 : index
    %c0_72 = arith.constant 0 : index
    %205 = vector.load %arg5[%c0_71, %c0_72] : memref<8x1xf32, #tpu.memory_space<vmem>>, vector<8x1xf32>
    %206 = vector.broadcast %205 : vector<8x1xf32> to vector<8x128xf32>
    %207 = arith.addf %204, %206 : vector<8x128xf32>
    %cst_73 = arith.constant 0.000000e+00 : f32
    %208 = vector.broadcast %cst_73 : f32 to vector<8x128xf32>
    %209 = arith.maximumf %207, %208 : vector<8x128xf32>
    %c0_74 = arith.constant 0 : index
    %c0_75 = arith.constant 0 : index
    %210 = vector.load %arg9[%c0_74, %c0_75] : memref<16x128xf32, #tpu.memory_space<vmem>>, vector<8x128xf32>
    tpu.vector_store %arg9[%c0_74, %c0_75], %209 {strides = array<i32>} : memref<16x128xf32, #tpu.memory_space<vmem>>, vector<8x128xf32>,
    %211 = vector.extract_strided_slice %196 {offsets = [2, 0], sizes = [8, 128], strides = [1, 1]} : vector<10x128xf32> to vector<8x128xf32>
    %c8_76 = arith.constant 8 : index
    %c0_77 = arith.constant 0 : index
    %212 = vector.load %arg9[%c8_76, %c0_77] : memref<16x128xf32, #tpu.memory_space<vmem>>, vector<8x128xf32>
    tpu.vector_store %arg9[%c8_76, %c0_77], %211 {strides = array<i32>} : memref<16x128xf32, #tpu.memory_space<vmem>>, vector<8x128xf32>,
    return
  }
}

</mosaic_0001>

<llo_original>
// kernel: bottleneck_forward.1
$region0: #{bottleneck_forward.1}
  #allocation0 [shape = 'u32[]', space=smem, size = 0x4, offset = 0x4, fixed_abs, tag = 'smem constant byte address 0x4 - core index']
  #allocation1 [shape = 'u32[144,128]{1,0:T(1,128)}', space=vmem, size = 0x12000, scoped, tag = 'internal scratch']
  %s0 = inlined_call_operand.vmem [shape: f32[5,512], index: 0, kind: input, shape index: {}]
  %s1 = inlined_call_operand.vmem [shape: f32[10,5], index: 1, kind: input, shape index: {}]
  %s2 = inlined_call_operand.vmem [shape: f32[9,2,2], index: 2, kind: input, shape index: {}]
  %s3 = inlined_call_operand.vmem [shape: f32[2,1], index: 3, kind: input, shape index: {}]
  %s4 = inlined_call_operand.vmem [shape: f32[8,2], index: 4, kind: input, shape index: {}]
  %s5 = inlined_call_operand.vmem [shape: f32[8,1], index: 5, kind: input, shape index: {}]
  %s6 = inlined_call_operand.vmem [shape: s32[1,512], index: 6, kind: input, shape index: {}]
  %s7 = inlined_call_operand.vmem [shape: s32[1,512], index: 7, kind: input, shape index: {}]
  %s8 = inlined_call_operand.vmem [shape: s32[1,128], index: 8, kind: input, shape index: {}]
  %s9 = inlined_call_operand.vmem [shape: f32[16,128], index: 9, kind: output, shape index: {}]
  %s10 = sld [smem:[#allocation0]]
  $region46: #{bottleneck_forward.1} parent=0
    _
  %s12 = ssub.s32 1, %s10
  %s13 = scalar_select 0, %s12, %s10
  // Predicated region
  $region2: #{bottleneck_forward.1} parent=0 // pred_check
    _
  $region3: #{bottleneck_forward.1} parent=0 // pred_check_branch
    %15 = sbr.rel (0) target = $region5
  $region4: #{bottleneck_forward.1} parent=0 // pred_region
    _
  $region5: #{bottleneck_forward.1} parent=0 // pred_fallthru
    _
  // Predicated region
  $region6: #{bottleneck_forward.1} parent=0 // pred_check
    _
  $region7: #{bottleneck_forward.1} parent=0 // pred_check_branch
    %17 = sbr.rel (0) target = $region9
  $region8: #{bottleneck_forward.1} parent=0 // pred_region
    _
  $region9: #{bottleneck_forward.1} parent=0 // pred_fallthru
    _
  // Predicated region
  $region10: #{bottleneck_forward.1} parent=0 // pred_check
    _
  $region11: #{bottleneck_forward.1} parent=0 // pred_check_branch
    %19 = sbr.rel (0) target = $region13
  $region12: #{bottleneck_forward.1} parent=0 // pred_region
    _
  $region13: #{bottleneck_forward.1} parent=0 // pred_fallthru
    _
  // Predicated region
  $region14: #{bottleneck_forward.1} parent=0 // pred_check
    _
  $region15: #{bottleneck_forward.1} parent=0 // pred_check_branch
    %21 = sbr.rel (0) target = $region17
  $region16: #{bottleneck_forward.1} parent=0 // pred_region
    _
  $region17: #{bottleneck_forward.1} parent=0 // pred_fallthru
    _
  // Predicated region
  $region18: #{bottleneck_forward.1} parent=0 // pred_check
    _
  $region19: #{bottleneck_forward.1} parent=0 // pred_check_branch
    %23 = sbr.rel (0) target = $region21
  $region20: #{bottleneck_forward.1} parent=0 // pred_region
    _
  $region21: #{bottleneck_forward.1} parent=0 // pred_fallthru
    _
  // Predicated region
  $region22: #{bottleneck_forward.1} parent=0 // pred_check
    _
  $region23: #{bottleneck_forward.1} parent=0 // pred_check_branch
    %25 = sbr.rel (0) target = $region25
  $region24: #{bottleneck_forward.1} parent=0 // pred_region
    _
  $region25: #{bottleneck_forward.1} parent=0 // pred_fallthru
    _
  // Predicated region
  $region26: #{bottleneck_forward.1} parent=0 // pred_check
    _
  $region27: #{bottleneck_forward.1} parent=0 // pred_check_branch
    %27 = sbr.rel (0) target = $region29
  $region28: #{bottleneck_forward.1} parent=0 // pred_region
    _
  $region29: #{bottleneck_forward.1} parent=0 // pred_fallthru
    _
  // Predicated region
  $region30: #{bottleneck_forward.1} parent=0 // pred_check
    _
  $region31: #{bottleneck_forward.1} parent=0 // pred_check_branch
    %29 = sbr.rel (0) target = $region33
  $region32: #{bottleneck_forward.1} parent=0 // pred_region
    _
  $region33: #{bottleneck_forward.1} parent=0 // pred_fallthru
    _
  // Predicated region
  $region34: #{bottleneck_forward.1} parent=0 // pred_check
    _
  $region35: #{bottleneck_forward.1} parent=0 // pred_check_branch
    %31 = sbr.rel (0) target = $region37
  $region36: #{bottleneck_forward.1} parent=0 // pred_region
    _
  $region37: #{bottleneck_forward.1} parent=0 // pred_fallthru
    _
  %v32 = vld [vmem:[%s0] sm:$0x1f]
  %v33 = vld [vmem:[%s0 + $0x8] sm:$0x1f]
  %v34 = vld [vmem:[%s0 + $0x10] sm:$0x1f]
  %v35 = vld [vmem:[%s0 + $0x18] sm:$0x1f]
  %v36 = vld [vmem:[%s6] sm:$0xf]
  %v37 = vld [vmem:[%s7] sm:$0xf]
  %v38 = vld [vmem:[%s1] sm:$0xff]
  %v39 = vld [vmem:[%s1 + $0x8] sm:$0x3]
  %vm40 = vcmask 39936
  %v42 = vsel %vm40, %v38, 0
  %v45 = vsel %vm40, %v39, 0
  %vm47 = vcmask 1044480
  %v49 = vsel %vm47, %v32, 0
  %v52 = vsel %vm47, %v33, 0
  %v55 = vsel %vm47, %v34, 0
  %v58 = vsel %vm47, %v35, 0
  %60 = vmatprep.subr.mxu0 %v52
  %61 = vmatpush1.msra.mxu0 %v49
  %62 = vmatprep.subr.mxu0 0.0
  %63 = vmatpush1.msra.mxu0 0.0
  %64 = vmatprep.subr.mxu0 0.0
  %65 = vmatpush1.msra.mxu0 0.0
  %66 = vmatprep.subr.mxu0 0.0
  %67 = vmatpush1.msra.mxu0 0.0
  %68 = vmatprep.subr.mxu0 0.0
  %69 = vmatpush1.msra.mxu0 0.0
  %70 = vmatprep.subr.mxu0 0.0
  %71 = vmatpush1.msra.mxu0 0.0
  %72 = vmatprep.subr.mxu0 0.0
  %73 = vmatpush1.msra.mxu0 0.0
  %74 = vmatprep.subr.mxu0 0.0
  %75 = vmatpush1.msra.mxu0 0.0
  %76 = vmatprep.subr.mxu0 0.0
  %77 = vmatpush1.msra.mxu0 0.0
  %78 = vmatprep.subr.mxu0 0.0
  %79 = vmatpush1.msra.mxu0 0.0
  %80 = vmatprep.subr.mxu0 0.0
  %81 = vmatpush1.msra.mxu0 0.0
  %82 = vmatprep.subr.mxu0 0.0
  %83 = vmatpush1.msra.mxu0 0.0
  %84 = vmatprep.subr.mxu0 0.0
  %85 = vmatpush1.msra.mxu0 0.0
  %86 = vmatprep.subr.mxu0 0.0
  %87 = vmatpush1.msra.mxu0 0.0
  %88 = vmatprep.subr.mxu0 0.0
  %89 = vmatpush1.msra.mxu0 0.0
  %90 = vmatprep.subr.mxu0 0.0
  %91 = vmatpush1.msra.mxu0 0.0
  %92 = vmatprep.subr.mxu0 0.0
  %93 = vmatpush1.msra.mxu0 0.0
  %94 = vmatprep.subr.mxu0 0.0
  %95 = vmatpush1.msra.mxu0 0.0
  %96 = vmatprep.subr.mxu0 0.0
  %97 = vmatpush1.msra.mxu0 0.0
  %98 = vmatprep.subr.mxu0 0.0
  %99 = vmatpush1.msra.mxu0 0.0
  %100 = vmatprep.subr.mxu0 0.0
  %101 = vmatpush1.msra.mxu0 0.0
  %102 = vmatprep.subr.mxu0 0.0
  %103 = vmatpush1.msra.mxu0 0.0
  %104 = vmatprep.subr.mxu0 0.0
  %105 = vmatpush1.msra.mxu0 0.0
  %106 = vmatprep.subr.mxu0 0.0
  %107 = vmatpush1.msra.mxu0 0.0
  %108 = vmatprep.subr.mxu0 0.0
  %109 = vmatpush1.msra.mxu0 0.0
  %110 = vmatprep.subr.mxu0 0.0
  %111 = vmatpush1.msra.mxu0 0.0
  %112 = vmatprep.subr.mxu0 0.0
  %113 = vmatpush1.msra.mxu0 0.0
  %114 = vmatprep.subr.mxu0 0.0
  %115 = vmatpush1.msra.mxu0 0.0
  %116 = vmatprep.subr.mxu0 0.0
  %117 = vmatpush1.msra.mxu0 0.0
  %118 = vmatprep.subr.mxu0 0.0
  %119 = vmatpush1.msra.mxu0 0.0
  %120 = vmatprep.subr.mxu0 0.0
  %121 = vmatpush1.msra.mxu0 0.0
  %122 = vmatprep.subr.mxu0 0.0
  %123 = vmatpush1.msra.mxu0 0.0
  %124 = vmatprep.mubr.f32.mxu0 0.0
  %125 = vmatmul.mubr.f32.gmra.mrb[0].mxu0 %v42
  %v126 = vpop.f32.mrb[0].mxu0
  %v127 = vadd.f32 0.0, %v126
  %v128 = vpop.f32.mrb[0].mxu0
  %v129 = vadd.f32 0.0, %v128
  %130 = vmatprep.mubr.f32.mxu0 0.0
  %131 = vmatmul.mubr.f32.gmra.mrb[0].mxu0 %v45
  %v132 = vpop.f32.mrb[0].mxu0
  %v133 = vadd.f32 0.0, %v132
  %v134 = vpop.f32.mrb[0].mxu0
  %v135 = vadd.f32 0.0, %v134
  %136 = vdwg.mxu0
  %137 = vmatprep.subr.mxu0 %v58
  %138 = vmatpush1.msra.mxu0 %v55
  %139 = vmatprep.subr.mxu0 0.0
  %140 = vmatpush1.msra.mxu0 0.0
  %141 = vmatprep.subr.mxu0 0.0
  %142 = vmatpush1.msra.mxu0 0.0
  %143 = vmatprep.subr.mxu0 0.0
  %144 = vmatpush1.msra.mxu0 0.0
  %145 = vmatprep.subr.mxu0 0.0
  %146 = vmatpush1.msra.mxu0 0.0
  %147 = vmatprep.subr.mxu0 0.0
  %148 = vmatpush1.msra.mxu0 0.0
  %149 = vmatprep.subr.mxu0 0.0
  %150 = vmatpush1.msra.mxu0 0.0
  %151 = vmatprep.subr.mxu0 0.0
  %152 = vmatpush1.msra.mxu0 0.0
  %153 = vmatprep.subr.mxu0 0.0
  %154 = vmatpush1.msra.mxu0 0.0
  %155 = vmatprep.subr.mxu0 0.0
  %156 = vmatpush1.msra.mxu0 0.0
  %157 = vmatprep.subr.mxu0 0.0
  %158 = vmatpush1.msra.mxu0 0.0
  %159 = vmatprep.subr.mxu0 0.0
  %160 = vmatpush1.msra.mxu0 0.0
  %161 = vmatprep.subr.mxu0 0.0
  %162 = vmatpush1.msra.mxu0 0.0
  %163 = vmatprep.subr.mxu0 0.0
  %164 = vmatpush1.msra.mxu0 0.0
  %165 = vmatprep.subr.mxu0 0.0
  %166 = vmatpush1.msra.mxu0 0.0
  %167 = vmatprep.subr.mxu0 0.0
  %168 = vmatpush1.msra.mxu0 0.0
  %169 = vmatprep.subr.mxu0 0.0
  %170 = vmatpush1.msra.mxu0 0.0
  %171 = vmatprep.subr.mxu0 0.0
  %172 = vmatpush1.msra.mxu0 0.0
  %173 = vmatprep.subr.mxu0 0.0
  %174 = vmatpush1.msra.mxu0 0.0
  %175 = vmatprep.subr.mxu0 0.0
  %176 = vmatpush1.msra.mxu0 0.0
  %177 = vmatprep.subr.mxu0 0.0
  %178 = vmatpush1.msra.mxu0 0.0
  %179 = vmatprep.subr.mxu0 0.0
  %180 = vmatpush1.msra.mxu0 0.0
  %181 = vmatprep.subr.mxu0 0.0
  %182 = vmatpush1.msra.mxu0 0.0
  %183 = vmatprep.subr.mxu0 0.0
  %184 = vmatpush1.msra.mxu0 0.0
  %185 = vmatprep.subr.mxu0 0.0
  %186 = vmatpush1.msra.mxu0 0.0
  %187 = vmatprep.subr.mxu0 0.0
  %188 = vmatpush1.msra.mxu0 0.0
  %189 = vmatprep.subr.mxu0 0.0
  %190 = vmatpush1.msra.mxu0 0.0
  %191 = vmatprep.subr.mxu0 0.0
  %192 = vmatpush1.msra.mxu0 0.0
  %193 = vmatprep.subr.mxu0 0.0
  %194 = vmatpush1.msra.mxu0 0.0
  %195 = vmatprep.subr.mxu0 0.0
  %196 = vmatpush1.msra.mxu0 0.0
  %197 = vmatprep.subr.mxu0 0.0
  %198 = vmatpush1.msra.mxu0 0.0
  %199 = vmatprep.subr.mxu0 0.0
  %200 = vmatpush1.msra.mxu0 0.0
  %201 = vmatprep.mubr.f32.mxu0 0.0
  %202 = vmatmul.mubr.f32.gmra.mrb[0].mxu0 %v42
  %v203 = vpop.f32.mrb[0].mxu0
  %v204 = vadd.f32 0.0, %v203
  %v205 = vpop.f32.mrb[0].mxu0
  %v206 = vadd.f32 0.0, %v205
  %207 = vmatprep.mubr.f32.mxu0 0.0
  %208 = vmatmul.mubr.f32.gmra.mrb[0].mxu0 %v45
  %v209 = vpop.f32.mrb[0].mxu0
  %v210 = vadd.f32 0.0, %v209
  %v211 = vpop.f32.mrb[0].mxu0
  %v212 = vadd.f32 0.0, %v211
  %213 = vdwg.mxu0
  %v214 = vmax.f32 %v127, 0.0
  %v215 = vmax.f32 %v129, 0.0
  %v216 = vmax.f32 %v204, 0.0
  %v217 = vmax.f32 %v206, 0.0
  %v218 = vmax.f32 %v133, 0.0
  %v219 = vmax.f32 %v135, 0.0
  %v220 = vmax.f32 %v210, 0.0
  %v221 = vmax.f32 %v212, 0.0
  %222 = vrot.lane.b32.xlu0 %v214, 17
  %v223 = vpop.permute.xlu0 %222
  %224 = vrot.lane.b32.xlu0 %v215, 17
  %v225 = vpop.permute.xlu0 %224
  %226 = vrot.lane.b32.xlu0 %v216, 17
  %v227 = vpop.permute.xlu0 %226
  %228 = vrot.lane.b32.xlu0 %v217, 17
  %v229 = vpop.permute.xlu0 %228
  %v230 = vlaneseq
  %v231 = vand.u32 %v230, 127
  %vm232 = vcmp.lt.s32.totalorder %v231, 17
  %v233 = vsel %vm232, %v227, %v229
  %v234 = vsel %vm232, %v225, %v227
  %v235 = vsel %vm232, %v223, %v225
  %v236 = vsel %vm232, %v229, %v223
  %vm237 = vcmp.ge.s32.totalorder %v36, 1
  %vm238 = vcmp.ge.s32.totalorder %v37, 1
  %vm239 = vmand %vm237, %vm238
  %v240 = vsel %vm239, 1, 0
  %v241 = vcvt.s32.f32 %v240
  %v243 = vlaneseq
  %v244 = vshrl.u32 %v243, 7
  %v245 = vsub.s32 0, %v244
  %v246 = vrot.slane %v241, %v245
  %v247 = vlaneseq
  %v248 = vshrl.u32 %v247, 7
  %v249 = vsub.s32 1, %v248
  %v250 = vrot.slane %v241, %v249
  %v251 = vlaneseq
  %v252 = vshrl.u32 %v251, 7
  %v253 = vsub.s32 2, %v252
  %v254 = vrot.slane %v241, %v253
  %v255 = vlaneseq
  %v256 = vshrl.u32 %v255, 7
  %v257 = vsub.s32 3, %v256
  %v258 = vrot.slane %v241, %v257
  %v263 = vmul.f32 %v236, %v246
  %v264 = vmul.f32 %v235, %v250
  %v265 = vmul.f32 %v234, %v254
  %v266 = vmul.f32 %v233, %v258
  %v267 = vld [vmem:[%s2] sm:$0x3]
  %268 = vrot.lane.b32.xlu0 %v214, 16
  %v269 = vpop.permute.xlu0 %268
  %270 = vrot.lane.b32.xlu0 %v215, 16
  %v271 = vpop.permute.xlu0 %270
  %272 = vrot.lane.b32.xlu0 %v216, 16
  %v273 = vpop.permute.xlu0 %272
  %274 = vrot.lane.b32.xlu0 %v217, 16
  %v275 = vpop.permute.xlu0 %274
  %vm276 = vcmp.lt.s32.totalorder %v231, 16
  %v277 = vsel %vm276, %v273, %v275
  %v278 = vsel %vm276, %v271, %v273
  %v279 = vsel %vm276, %v269, %v271
  %v280 = vsel %vm276, %v275, %v269
  %v281 = vsel %vm237, 1, 0
  %v282 = vcvt.s32.f32 %v281
  %v284 = vlaneseq
  %v285 = vshrl.u32 %v284, 7
  %v286 = vsub.s32 0, %v285
  %v287 = vrot.slane %v282, %v286
  %v288 = vlaneseq
  %v289 = vshrl.u32 %v288, 7
  %v290 = vsub.s32 1, %v289
  %v291 = vrot.slane %v282, %v290
  %v292 = vlaneseq
  %v293 = vshrl.u32 %v292, 7
  %v294 = vsub.s32 2, %v293
  %v295 = vrot.slane %v282, %v294
  %v296 = vlaneseq
  %v297 = vshrl.u32 %v296, 7
  %v298 = vsub.s32 3, %v297
  %v299 = vrot.slane %v282, %v298
  %v304 = vmul.f32 %v280, %v287
  %v305 = vmul.f32 %v279, %v291
  %v306 = vmul.f32 %v278, %v295
  %v307 = vmul.f32 %v277, %v299
  %s308 = scalar_lea.vmem %s2, 2
  %v309 = vld [vmem:[%s308] sm:$0x3]
  %vm310 = vcmask 15360
  %v312 = vsel %vm310, %v309, 0
  %vm314 = vcmask 1041408
  %v316 = vsel %vm314, %v304, 0
  %v319 = vsel %vm314, %v305, 0
  %v322 = vsel %vm314, %v306, 0
  %v325 = vsel %vm314, %v307, 0
  %327 = vmatprep.subr.mxu0 %v319
  %328 = vmatpush1.msra.mxu0 %v316
  %329 = vmatprep.subr.mxu0 0.0
  %330 = vmatpush1.msra.mxu0 0.0
  %331 = vmatprep.subr.mxu0 0.0
  %332 = vmatpush1.msra.mxu0 0.0
  %333 = vmatprep.subr.mxu0 0.0
  %334 = vmatpush1.msra.mxu0 0.0
  %335 = vmatprep.subr.mxu0 0.0
  %336 = vmatpush1.msra.mxu0 0.0
  %337 = vmatprep.subr.mxu0 0.0
  %338 = vmatpush1.msra.mxu0 0.0
  %339 = vmatprep.subr.mxu0 0.0
  %340 = vmatpush1.msra.mxu0 0.0
  %341 = vmatprep.subr.mxu0 0.0
  %342 = vmatpush1.msra.mxu0 0.0
  %343 = vmatprep.subr.mxu0 0.0
  %344 = vmatpush1.msra.mxu0 0.0
  %345 = vmatprep.subr.mxu0 0.0
  %346 = vmatpush1.msra.mxu0 0.0
  %347 = vmatprep.subr.mxu0 0.0
  %348 = vmatpush1.msra.mxu0 0.0
  %349 = vmatprep.subr.mxu0 0.0
  %350 = vmatpush1.msra.mxu0 0.0
  %351 = vmatprep.subr.mxu0 0.0
  %352 = vmatpush1.msra.mxu0 0.0
  %353 = vmatprep.subr.mxu0 0.0
  %354 = vmatpush1.msra.mxu0 0.0
  %355 = vmatprep.subr.mxu0 0.0
  %356 = vmatpush1.msra.mxu0 0.0
  %357 = vmatprep.subr.mxu0 0.0
  %358 = vmatpush1.msra.mxu0 0.0
  %359 = vmatprep.subr.mxu0 0.0
  %360 = vmatpush1.msra.mxu0 0.0
  %361 = vmatprep.subr.mxu0 0.0
  %362 = vmatpush1.msra.mxu0 0.0
  %363 = vmatprep.subr.mxu0 0.0
  %364 = vmatpush1.msra.mxu0 0.0
  %365 = vmatprep.subr.mxu0 0.0
  %366 = vmatpush1.msra.mxu0 0.0
  %367 = vmatprep.subr.mxu0 0.0
  %368 = vmatpush1.msra.mxu0 0.0
  %369 = vmatprep.subr.mxu0 0.0
  %370 = vmatpush1.msra.mxu0 0.0
  %371 = vmatprep.subr.mxu0 0.0
  %372 = vmatpush1.msra.mxu0 0.0
  %373 = vmatprep.subr.mxu0 0.0
  %374 = vmatpush1.msra.mxu0 0.0
  %375 = vmatprep.subr.mxu0 0.0
  %376 = vmatpush1.msra.mxu0 0.0
  %377 = vmatprep.subr.mxu0 0.0
  %378 = vmatpush1.msra.mxu0 0.0
  %379 = vmatprep.subr.mxu0 0.0
  %380 = vmatpush1.msra.mxu0 0.0
  %381 = vmatprep.subr.mxu0 0.0
  %382 = vmatpush1.msra.mxu0 0.0
  %383 = vmatprep.subr.mxu0 0.0
  %384 = vmatpush1.msra.mxu0 0.0
  %385 = vmatprep.subr.mxu0 0.0
  %386 = vmatpush1.msra.mxu0 0.0
  %387 = vmatprep.subr.mxu0 0.0
  %388 = vmatpush1.msra.mxu0 0.0
  %389 = vmatprep.subr.mxu0 0.0
  %390 = vmatpush1.msra.mxu0 0.0
  %391 = vmatprep.mubr.f32.mxu0 0.0
  %392 = vmatmul.mubr.f32.gmra.mrb[0].mxu0 %v312
  %v393 = vpop.f32.mrb[0].mxu0
  %v394 = vadd.f32 0.0, %v393
  %v395 = vpop.f32.mrb[0].mxu0
  %v396 = vadd.f32 0.0, %v395
  %397 = vdwg.mxu0
  %398 = vmatprep.subr.mxu0 %v325
  %399 = vmatpush1.msra.mxu0 %v322
  %400 = vmatprep.subr.mxu0 0.0
  %401 = vmatpush1.msra.mxu0 0.0
  %402 = vmatprep.subr.mxu0 0.0
  %403 = vmatpush1.msra.mxu0 0.0
  %404 = vmatprep.subr.mxu0 0.0
  %405 = vmatpush1.msra.mxu0 0.0
  %406 = vmatprep.subr.mxu0 0.0
  %407 = vmatpush1.msra.mxu0 0.0
  %408 = vmatprep.subr.mxu0 0.0
  %409 = vmatpush1.msra.mxu0 0.0
  %410 = vmatprep.subr.mxu0 0.0
  %411 = vmatpush1.msra.mxu0 0.0
  %412 = vmatprep.subr.mxu0 0.0
  %413 = vmatpush1.msra.mxu0 0.0
  %414 = vmatprep.subr.mxu0 0.0
  %415 = vmatpush1.msra.mxu0 0.0
  %416 = vmatprep.subr.mxu0 0.0
  %417 = vmatpush1.msra.mxu0 0.0
  %418 = vmatprep.subr.mxu0 0.0
  %419 = vmatpush1.msra.mxu0 0.0
  %420 = vmatprep.subr.mxu0 0.0
  %421 = vmatpush1.msra.mxu0 0.0
  %422 = vmatprep.subr.mxu0 0.0
  %423 = vmatpush1.msra.mxu0 0.0
  %424 = vmatprep.subr.mxu0 0.0
  %425 = vmatpush1.msra.mxu0 0.0
  %426 = vmatprep.subr.mxu0 0.0
  %427 = vmatpush1.msra.mxu0 0.0
  %428 = vmatprep.subr.mxu0 0.0
  %429 = vmatpush1.msra.mxu0 0.0
  %430 = vmatprep.subr.mxu0 0.0
  %431 = vmatpush1.msra.mxu0 0.0
  %432 = vmatprep.subr.mxu0 0.0
  %433 = vmatpush1.msra.mxu0 0.0
  %434 = vmatprep.subr.mxu0 0.0
  %435 = vmatpush1.msra.mxu0 0.0
  %436 = vmatprep.subr.mxu0 0.0
  %437 = vmatpush1.msra.mxu0 0.0
  %438 = vmatprep.subr.mxu0 0.0
  %439 = vmatpush1.msra.mxu0 0.0
  %440 = vmatprep.subr.mxu0 0.0
  %441 = vmatpush1.msra.mxu0 0.0
  %442 = vmatprep.subr.mxu0 0.0
  %443 = vmatpush1.msra.mxu0 0.0
  %444 = vmatprep.subr.mxu0 0.0
  %445 = vmatpush1.msra.mxu0 0.0
  %446 = vmatprep.subr.mxu0 0.0
  %447 = vmatpush1.msra.mxu0 0.0
  %448 = vmatprep.subr.mxu0 0.0
  %449 = vmatpush1.msra.mxu0 0.0
  %450 = vmatprep.subr.mxu0 0.0
  %451 = vmatpush1.msra.mxu0 0.0
  %452 = vmatprep.subr.mxu0 0.0
  %453 = vmatpush1.msra.mxu0 0.0
  %454 = vmatprep.subr.mxu0 0.0
  %455 = vmatpush1.msra.mxu0 0.0
  %456 = vmatprep.subr.mxu0 0.0
  %457 = vmatpush1.msra.mxu0 0.0
  %458 = vmatprep.subr.mxu0 0.0
  %459 = vmatpush1.msra.mxu0 0.0
  %460 = vmatprep.subr.mxu0 0.0
  %461 = vmatpush1.msra.mxu0 0.0
  %462 = vmatprep.mubr.f32.mxu0 0.0
  %463 = vmatmul.mubr.f32.gmra.mrb[0].mxu0 %v312
  %v464 = vpop.f32.mrb[0].mxu0
  %v465 = vadd.f32 0.0, %v464
  %v466 = vpop.f32.mrb[0].mxu0
  %v467 = vadd.f32 0.0, %v466
  %468 = vdwg.mxu0
  %v470 = vsel %vm310, %v267, 0
  %v473 = vsel %vm314, %v263, 0
  %v476 = vsel %vm314, %v264, 0
  %v479 = vsel %vm314, %v265, 0
  %v482 = vsel %vm314, %v266, 0
  %484 = vmatprep.subr.mxu0 %v476
  %485 = vmatpush1.msra.mxu0 %v473
  %486 = vmatprep.subr.mxu0 0.0
  %487 = vmatpush1.msra.mxu0 0.0
  %488 = vmatprep.subr.mxu0 0.0
  %489 = vmatpush1.msra.mxu0 0.0
  %490 = vmatprep.subr.mxu0 0.0
  %491 = vmatpush1.msra.mxu0 0.0
  %492 = vmatprep.subr.mxu0 0.0
  %493 = vmatpush1.msra.mxu0 0.0
  %494 = vmatprep.subr.mxu0 0.0
  %495 = vmatpush1.msra.mxu0 0.0
  %496 = vmatprep.subr.mxu0 0.0
  %497 = vmatpush1.msra.mxu0 0.0
  %498 = vmatprep.subr.mxu0 0.0
  %499 = vmatpush1.msra.mxu0 0.0
  %500 = vmatprep.subr.mxu0 0.0
  %501 = vmatpush1.msra.mxu0 0.0
  %502 = vmatprep.subr.mxu0 0.0
  %503 = vmatpush1.msra.mxu0 0.0
  %504 = vmatprep.subr.mxu0 0.0
  %505 = vmatpush1.msra.mxu0 0.0
  %506 = vmatprep.subr.mxu0 0.0
  %507 = vmatpush1.msra.mxu0 0.0
  %508 = vmatprep.subr.mxu0 0.0
  %509 = vmatpush1.msra.mxu0 0.0
  %510 = vmatprep.subr.mxu0 0.0
  %511 = vmatpush1.msra.mxu0 0.0
  %512 = vmatprep.subr.mxu0 0.0
  %513 = vmatpush1.msra.mxu0 0.0
  %514 = vmatprep.subr.mxu0 0.0
  %515 = vmatpush1.msra.mxu0 0.0
  %516 = vmatprep.subr.mxu0 0.0
  %517 = vmatpush1.msra.mxu0 0.0
  %518 = vmatprep.subr.mxu0 0.0
  %519 = vmatpush1.msra.mxu0 0.0
  %520 = vmatprep.subr.mxu0 0.0
  %521 = vmatpush1.msra.mxu0 0.0
  %522 = vmatprep.subr.mxu0 0.0
  %523 = vmatpush1.msra.mxu0 0.0
  %524 = vmatprep.subr.mxu0 0.0
  %525 = vmatpush1.msra.mxu0 0.0
  %526 = vmatprep.subr.mxu0 0.0
  %527 = vmatpush1.msra.mxu0 0.0
  %528 = vmatprep.subr.mxu0 0.0
  %529 = vmatpush1.msra.mxu0 0.0
  %530 = vmatprep.subr.mxu0 0.0
  %531 = vmatpush1.msra.mxu0 0.0
  %532 = vmatprep.subr.mxu0 0.0
  %533 = vmatpush1.msra.mxu0 0.0
  %534 = vmatprep.subr.mxu0 0.0
  %535 = vmatpush1.msra.mxu0 0.0
  %536 = vmatprep.subr.mxu0 0.0
  %537 = vmatpush1.msra.mxu0 0.0
  %538 = vmatprep.subr.mxu0 0.0
  %539 = vmatpush1.msra.mxu0 0.0
  %540 = vmatprep.subr.mxu0 0.0
  %541 = vmatpush1.msra.mxu0 0.0
  %542 = vmatprep.subr.mxu0 0.0
  %543 = vmatpush1.msra.mxu0 0.0
  %544 = vmatprep.subr.mxu0 0.0
  %545 = vmatpush1.msra.mxu0 0.0
  %546 = vmatprep.subr.mxu0 0.0
  %547 = vmatpush1.msra.mxu0 0.0
  %548 = vmatprep.mubr.f32.mxu0 0.0
  %549 = vmatmul.mubr.f32.gmra.mrb[0].mxu0 %v470
  %v550 = vpop.f32.mrb[0].mxu0
  %v551 = vadd.f32 %v394, %v550
  %v552 = vpop.f32.mrb[0].mxu0
  %v553 = vadd.f32 %v396, %v552
  %554 = vdwg.mxu0
  %555 = vmatprep.subr.mxu0 %v482
  %556 = vmatpush1.msra.mxu0 %v479
  %557 = vmatprep.subr.mxu0 0.0
  %558 = vmatpush1.msra.mxu0 0.0
  %559 = vmatprep.subr.mxu0 0.0
  %560 = vmatpush1.msra.mxu0 0.0
  %561 = vmatprep.subr.mxu0 0.0
  %562 = vmatpush1.msra.mxu0 0.0
  %563 = vmatprep.subr.mxu0 0.0
  %564 = vmatpush1.msra.mxu0 0.0
  %565 = vmatprep.subr.mxu0 0.0
  %566 = vmatpush1.msra.mxu0 0.0
  %567 = vmatprep.subr.mxu0 0.0
  %568 = vmatpush1.msra.mxu0 0.0
  %569 = vmatprep.subr.mxu0 0.0
  %570 = vmatpush1.msra.mxu0 0.0
  %571 = vmatprep.subr.mxu0 0.0
  %572 = vmatpush1.msra.mxu0 0.0
  %573 = vmatprep.subr.mxu0 0.0
  %574 = vmatpush1.msra.mxu0 0.0
  %575 = vmatprep.subr.mxu0 0.0
  %576 = vmatpush1.msra.mxu0 0.0
  %577 = vmatprep.subr.mxu0 0.0
  %578 = vmatpush1.msra.mxu0 0.0
  %579 = vmatprep.subr.mxu0 0.0
  %580 = vmatpush1.msra.mxu0 0.0
  %581 = vmatprep.subr.mxu0 0.0
  %582 = vmatpush1.msra.mxu0 0.0
  %583 = vmatprep.subr.mxu0 0.0
  %584 = vmatpush1.msra.mxu0 0.0
  %585 = vmatprep.subr.mxu0 0.0
  %586 = vmatpush1.msra.mxu0 0.0
  %587 = vmatprep.subr.mxu0 0.0
  %588 = vmatpush1.msra.mxu0 0.0
  %589 = vmatprep.subr.mxu0 0.0
  %590 = vmatpush1.msra.mxu0 0.0
  %591 = vmatprep.subr.mxu0 0.0
  %592 = vmatpush1.msra.mxu0 0.0
  %593 = vmatprep.subr.mxu0 0.0
  %594 = vmatpush1.msra.mxu0 0.0
  %595 = vmatprep.subr.mxu0 0.0
  %596 = vmatpush1.msra.mxu0 0.0
  %597 = vmatprep.subr.mxu0 0.0
  %598 = vmatpush1.msra.mxu0 0.0
  %599 = vmatprep.subr.mxu0 0.0
  %600 = vmatpush1.msra.mxu0 0.0
  %601 = vmatprep.subr.mxu0 0.0
  %602 = vmatpush1.msra.mxu0 0.0
  %603 = vmatprep.subr.mxu0 0.0
  %604 = vmatpush1.msra.mxu0 0.0
  %605 = vmatprep.subr.mxu0 0.0
  %606 = vmatpush1.msra.mxu0 0.0
  %607 = vmatprep.subr.mxu0 0.0
  %608 = vmatpush1.msra.mxu0 0.0
  %609 = vmatprep.subr.mxu0 0.0
  %610 = vmatpush1.msra.mxu0 0.0
  %611 = vmatprep.subr.mxu0 0.0
  %612 = vmatpush1.msra.mxu0 0.0
  %613 = vmatprep.subr.mxu0 0.0
  %614 = vmatpush1.msra.mxu0 0.0
  %615 = vmatprep.subr.mxu0 0.0
  %616 = vmatpush1.msra.mxu0 0.0
  %617 = vmatprep.subr.mxu0 0.0
  %618 = vmatpush1.msra.mxu0 0.0
  %619 = vmatprep.mubr.f32.mxu0 0.0
  %620 = vmatmul.mubr.f32.gmra.mrb[0].mxu0 %v470
  %v621 = vpop.f32.mrb[0].mxu0
  %v622 = vadd.f32 %v465, %v621
  %v623 = vpop.f32.mrb[0].mxu0
  %v624 = vadd.f32 %v467, %v623
  %625 = vdwg.mxu0
  %626 = vrot.lane.b32.xlu0 %v214, 15
  %v627 = vpop.permute.xlu0 %626
  %628 = vrot.lane.b32.xlu0 %v215, 15
  %v629 = vpop.permute.xlu0 %628
  %630 = vrot.lane.b32.xlu0 %v216, 15
  %v631 = vpop.permute.xlu0 %630
  %632 = vrot.lane.b32.xlu0 %v217, 15
  %v633 = vpop.permute.xlu0 %632
  %vm634 = vcmp.lt.s32.totalorder %v231, 15
  %v635 = vsel %vm634, %v631, %v633
  %v636 = vsel %vm634, %v629, %v631
  %v637 = vsel %vm634, %v627, %v629
  %v638 = vsel %vm634, %v633, %v627
  %vm639 = vcmp.le.s32.totalorder %v37, 14
  %vm640 = vmand %vm237, %vm639
  %v641 = vsel %vm640, 1, 0
  %v642 = vcvt.s32.f32 %v641
  %v644 = vlaneseq
  %v645 = vshrl.u32 %v644, 7
  %v646 = vsub.s32 0, %v645
  %v647 = vrot.slane %v642, %v646
  %v648 = vlaneseq
  %v649 = vshrl.u32 %v648, 7
  %v650 = vsub.s32 1, %v649
  %v651 = vrot.slane %v642, %v650
  %v652 = vlaneseq
  %v653 = vshrl.u32 %v652, 7
  %v654 = vsub.s32 2, %v653
  %v655 = vrot.slane %v642, %v654
  %v656 = vlaneseq
  %v657 = vshrl.u32 %v656, 7
  %v658 = vsub.s32 3, %v657
  %v659 = vrot.slane %v642, %v658
  %v664 = vmul.f32 %v638, %v647
  %v665 = vmul.f32 %v637, %v651
  %v666 = vmul.f32 %v636, %v655
  %v667 = vmul.f32 %v635, %v659
  %s668 = scalar_lea.vmem %s2, 4
  %v669 = vld [vmem:[%s668] sm:$0x3]
  %v671 = vsel %vm310, %v669, 0
  %v674 = vsel %vm314, %v664, 0
  %v677 = vsel %vm314, %v665, 0
  %v680 = vsel %vm314, %v666, 0
  %v683 = vsel %vm314, %v667, 0
  %685 = vmatprep.subr.mxu0 %v677
  %686 = vmatpush1.msra.mxu0 %v674
  %687 = vmatprep.subr.mxu0 0.0
  %688 = vmatpush1.msra.mxu0 0.0
  %689 = vmatprep.subr.mxu0 0.0
  %690 = vmatpush1.msra.mxu0 0.0
  %691 = vmatprep.subr.mxu0 0.0
  %692 = vmatpush1.msra.mxu0 0.0
  %693 = vmatprep.subr.mxu0 0.0
  %694 = vmatpush1.msra.mxu0 0.0
  %695 = vmatprep.subr.mxu0 0.0
  %696 = vmatpush1.msra.mxu0 0.0
  %697 = vmatprep.subr.mxu0 0.0
  %698 = vmatpush1.msra.mxu0 0.0
  %699 = vmatprep.subr.mxu0 0.0
  %700 = vmatpush1.msra.mxu0 0.0
  %701 = vmatprep.subr.mxu0 0.0
  %702 = vmatpush1.msra.mxu0 0.0
  %703 = vmatprep.subr.mxu0 0.0
  %704 = vmatpush1.msra.mxu0 0.0
  %705 = vmatprep.subr.mxu0 0.0
  %706 = vmatpush1.msra.mxu0 0.0
  %707 = vmatprep.subr.mxu0 0.0
  %708 = vmatpush1.msra.mxu0 0.0
  %709 = vmatprep.subr.mxu0 0.0
  %710 = vmatpush1.msra.mxu0 0.0
  %711 = vmatprep.subr.mxu0 0.0
  %712 = vmatpush1.msra.mxu0 0.0
  %713 = vmatprep.subr.mxu0 0.0
  %714 = vmatpush1.msra.mxu0 0.0
  %715 = vmatprep.subr.mxu0 0.0
  %716 = vmatpush1.msra.mxu0 0.0
  %717 = vmatprep.subr.mxu0 0.0
  %718 = vmatpush1.msra.mxu0 0.0
  %719 = vmatprep.subr.mxu0 0.0
  %720 = vmatpush1.msra.mxu0 0.0
  %721 = vmatprep.subr.mxu0 0.0
  %722 = vmatpush1.msra.mxu0 0.0
  %723 = vmatprep.subr.mxu0 0.0
  %724 = vmatpush1.msra.mxu0 0.0
  %725 = vmatprep.subr.mxu0 0.0
  %726 = vmatpush1.msra.mxu0 0.0
  %727 = vmatprep.subr.mxu0 0.0
  %728 = vmatpush1.msra.mxu0 0.0
  %729 = vmatprep.subr.mxu0 0.0
  %730 = vmatpush1.msra.mxu0 0.0
  %731 = vmatprep.subr.mxu0 0.0
  %732 = vmatpush1.msra.mxu0 0.0
  %733 = vmatprep.subr.mxu0 0.0
  %734 = vmatpush1.msra.mxu0 0.0
  %735 = vmatprep.subr.mxu0 0.0
  %736 = vmatpush1.msra.mxu0 0.0
  %737 = vmatprep.subr.mxu0 0.0
  %738 = vmatpush1.msra.mxu0 0.0
  %739 = vmatprep.subr.mxu0 0.0
  %740 = vmatpush1.msra.mxu0 0.0
  %741 = vmatprep.subr.mxu0 0.0
  %742 = vmatpush1.msra.mxu0 0.0
  %743 = vmatprep.subr.mxu0 0.0
  %744 = vmatpush1.msra.mxu0 0.0
  %745 = vmatprep.subr.mxu0 0.0
  %746 = vmatpush1.msra.mxu0 0.0
  %747 = vmatprep.subr.mxu0 0.0
  %748 = vmatpush1.msra.mxu0 0.0
  %749 = vmatprep.mubr.f32.mxu0 0.0
  %750 = vmatmul.mubr.f32.gmra.mrb[0].mxu0 %v671
  %v751 = vpop.f32.mrb[0].mxu0
  %v752 = vadd.f32 0.0, %v751
  %v753 = vpop.f32.mrb[0].mxu0
  %v754 = vadd.f32 0.0, %v753
  %755 = vdwg.mxu0
  %756 = vmatprep.subr.mxu0 %v683
  %757 = vmatpush1.msra.mxu0 %v680
  %758 = vmatprep.subr.mxu0 0.0
  %759 = vmatpush1.msra.mxu0 0.0
  %760 = vmatprep.subr.mxu0 0.0
  %761 = vmatpush1.msra.mxu0 0.0
  %762 = vmatprep.subr.mxu0 0.0
  %763 = vmatpush1.msra.mxu0 0.0
  %764 = vmatprep.subr.mxu0 0.0
  %765 = vmatpush1.msra.mxu0 0.0
  %766 = vmatprep.subr.mxu0 0.0
  %767 = vmatpush1.msra.mxu0 0.0
  %768 = vmatprep.subr.mxu0 0.0
  %769 = vmatpush1.msra.mxu0 0.0
  %770 = vmatprep.subr.mxu0 0.0
  %771 = vmatpush1.msra.mxu0 0.0
  %772 = vmatprep.subr.mxu0 0.0
  %773 = vmatpush1.msra.mxu0 0.0
  %774 = vmatprep.subr.mxu0 0.0
  %775 = vmatpush1.msra.mxu0 0.0
  %776 = vmatprep.subr.mxu0 0.0
  %777 = vmatpush1.msra.mxu0 0.0
  %778 = vmatprep.subr.mxu0 0.0
  %779 = vmatpush1.msra.mxu0 0.0
  %780 = vmatprep.subr.mxu0 0.0
  %781 = vmatpush1.msra.mxu0 0.0
  %782 = vmatprep.subr.mxu0 0.0
  %783 = vmatpush1.msra.mxu0 0.0
  %784 = vmatprep.subr.mxu0 0.0
  %785 = vmatpush1.msra.mxu0 0.0
  %786 = vmatprep.subr.mxu0 0.0
  %787 = vmatpush1.msra.mxu0 0.0
  %788 = vmatprep.subr.mxu0 0.0
  %789 = vmatpush1.msra.mxu0 0.0
  %790 = vmatprep.subr.mxu0 0.0
  %791 = vmatpush1.msra.mxu0 0.0
  %792 = vmatprep.subr.mxu0 0.0
  %793 = vmatpush1.msra.mxu0 0.0
  %794 = vmatprep.subr.mxu0 0.0
  %795 = vmatpush1.msra.mxu0 0.0
  %796 = vmatprep.subr.mxu0 0.0
  %797 = vmatpush1.msra.mxu0 0.0
  %798 = vmatprep.subr.mxu0 0.0
  %799 = vmatpush1.msra.mxu0 0.0
  %800 = vmatprep.subr.mxu0 0.0
  %801 = vmatpush1.msra.mxu0 0.0
  %802 = vmatprep.subr.mxu0 0.0
  %803 = vmatpush1.msra.mxu0 0.0
  %804 = vmatprep.subr.mxu0 0.0
  %805 = vmatpush1.msra.mxu0 0.0
  %806 = vmatprep.subr.mxu0 0.0
  %807 = vmatpush1.msra.mxu0 0.0
  %808 = vmatprep.subr.mxu0 0.0
  %809 = vmatpush1.msra.mxu0 0.0
  %810 = vmatprep.subr.mxu0 0.0
  %811 = vmatpush1.msra.mxu0 0.0
  %812 = vmatprep.subr.mxu0 0.0
  %813 = vmatpush1.msra.mxu0 0.0
  %814 = vmatprep.subr.mxu0 0.0
  %815 = vmatpush1.msra.mxu0 0.0
  %816 = vmatprep.subr.mxu0 0.0
  %817 = vmatpush1.msra.mxu0 0.0
  %818 = vmatprep.subr.mxu0 0.0
  %819 = vmatpush1.msra.mxu0 0.0
  %820 = vmatprep.mubr.f32.mxu0 0.0
  %821 = vmatmul.mubr.f32.gmra.mrb[0].mxu0 %v671
  %v822 = vpop.f32.mrb[0].mxu0
  %v823 = vadd.f32 0.0, %v822
  %v824 = vpop.f32.mrb[0].mxu0
  %v825 = vadd.f32 0.0, %v824
  %826 = vdwg.mxu0
  %v827 = vadd.f32 %v551, %v752
  %v828 = vadd.f32 %v553, %v754
  %v829 = vadd.f32 %v622, %v823
  %v830 = vadd.f32 %v624, %v825
  %831 = vrot.lane.b32.xlu0 %v214, 1
  %v832 = vpop.permute.xlu0 %831
  %833 = vrot.lane.b32.xlu0 %v215, 1
  %v834 = vpop.permute.xlu0 %833
  %835 = vrot.lane.b32.xlu0 %v216, 1
  %v836 = vpop.permute.xlu0 %835
  %837 = vrot.lane.b32.xlu0 %v217, 1
  %v838 = vpop.permute.xlu0 %837
  %vm839 = vcmp.lt.s32.totalorder %v231, 1
  %v840 = vsel %vm839, %v836, %v838
  %v841 = vsel %vm839, %v834, %v836
  %v842 = vsel %vm839, %v832, %v834
  %v843 = vsel %vm839, %v838, %v832
  %v844 = vsel %vm238, 1, 0
  %v845 = vcvt.s32.f32 %v844
  %v847 = vlaneseq
  %v848 = vshrl.u32 %v847, 7
  %v849 = vsub.s32 0, %v848
  %v850 = vrot.slane %v845, %v849
  %v851 = vlaneseq
  %v852 = vshrl.u32 %v851, 7
  %v853 = vsub.s32 1, %v852
  %v854 = vrot.slane %v845, %v853
  %v855 = vlaneseq
  %v856 = vshrl.u32 %v855, 7
  %v857 = vsub.s32 2, %v856
  %v858 = vrot.slane %v845, %v857
  %v859 = vlaneseq
  %v860 = vshrl.u32 %v859, 7
  %v861 = vsub.s32 3, %v860
  %v862 = vrot.slane %v845, %v861
  %v867 = vmul.f32 %v843, %v850
  %v868 = vmul.f32 %v842, %v854
  %v869 = vmul.f32 %v841, %v858
  %v870 = vmul.f32 %v840, %v862
  %s871 = scalar_lea.vmem %s2, 6
  %v872 = vld [vmem:[%s871] sm:$0x3]
  %v874 = vsel %vm310, %v872, 0
  %v877 = vsel %vm314, %v867, 0
  %v880 = vsel %vm314, %v868, 0
  %v883 = vsel %vm314, %v869, 0
  %v886 = vsel %vm314, %v870, 0
  %888 = vmatprep.subr.mxu0 %v880
  %889 = vmatpush1.msra.mxu0 %v877
  %890 = vmatprep.subr.mxu0 0.0
  %891 = vmatpush1.msra.mxu0 0.0
  %892 = vmatprep.subr.mxu0 0.0
  %893 = vmatpush1.msra.mxu0 0.0
  %894 = vmatprep.subr.mxu0 0.0
  %895 = vmatpush1.msra.mxu0 0.0
  %896 = vmatprep.subr.mxu0 0.0
  %897 = vmatpush1.msra.mxu0 0.0
  %898 = vmatprep.subr.mxu0 0.0
  %899 = vmatpush1.msra.mxu0 0.0
  %900 = vmatprep.subr.mxu0 0.0
  %901 = vmatpush1.msra.mxu0 0.0
  %902 = vmatprep.subr.mxu0 0.0
  %903 = vmatpush1.msra.mxu0 0.0
  %904 = vmatprep.subr.mxu0 0.0
  %905 = vmatpush1.msra.mxu0 0.0
  %906 = vmatprep.subr.mxu0 0.0
  %907 = vmatpush1.msra.mxu0 0.0
  %908 = vmatprep.subr.mxu0 0.0
  %909 = vmatpush1.msra.mxu0 0.0
  %910 = vmatprep.subr.mxu0 0.0
  %911 = vmatpush1.msra.mxu0 0.0
  %912 = vmatprep.subr.mxu0 0.0
  %913 = vmatpush1.msra.mxu0 0.0
  %914 = vmatprep.subr.mxu0 0.0
  %915 = vmatpush1.msra.mxu0 0.0
  %916 = vmatprep.subr.mxu0 0.0
  %917 = vmatpush1.msra.mxu0 0.0
  %918 = vmatprep.subr.mxu0 0.0
  %919 = vmatpush1.msra.mxu0 0.0
  %920 = vmatprep.subr.mxu0 0.0
  %921 = vmatpush1.msra.mxu0 0.0
  %922 = vmatprep.subr.mxu0 0.0
  %923 = vmatpush1.msra.mxu0 0.0
  %924 = vmatprep.subr.mxu0 0.0
  %925 = vmatpush1.msra.mxu0 0.0
  %926 = vmatprep.subr.mxu0 0.0
  %927 = vmatpush1.msra.mxu0 0.0
  %928 = vmatprep.subr.mxu0 0.0
  %929 = vmatpush1.msra.mxu0 0.0
  %930 = vmatprep.subr.mxu0 0.0
  %931 = vmatpush1.msra.mxu0 0.0
  %932 = vmatprep.subr.mxu0 0.0
  %933 = vmatpush1.msra.mxu0 0.0
  %934 = vmatprep.subr.mxu0 0.0
  %935 = vmatpush1.msra.mxu0 0.0
  %936 = vmatprep.subr.mxu0 0.0
  %937 = vmatpush1.msra.mxu0 0.0
  %938 = vmatprep.subr.mxu0 0.0
  %939 = vmatpush1.msra.mxu0 0.0
  %940 = vmatprep.subr.mxu0 0.0
  %941 = vmatpush1.msra.mxu0 0.0
  %942 = vmatprep.subr.mxu0 0.0
  %943 = vmatpush1.msra.mxu0 0.0
  %944 = vmatprep.subr.mxu0 0.0
  %945 = vmatpush1.msra.mxu0 0.0
  %946 = vmatprep.subr.mxu0 0.0
  %947 = vmatpush1.msra.mxu0 0.0
  %948 = vmatprep.subr.mxu0 0.0
  %949 = vmatpush1.msra.mxu0 0.0
  %950 = vmatprep.subr.mxu0 0.0
  %951 = vmatpush1.msra.mxu0 0.0
  %952 = vmatprep.mubr.f32.mxu0 0.0
  %953 = vmatmul.mubr.f32.gmra.mrb[0].mxu0 %v874
  %v954 = vpop.f32.mrb[0].mxu0
  %v955 = vadd.f32 0.0, %v954
  %v956 = vpop.f32.mrb[0].mxu0
  %v957 = vadd.f32 0.0, %v956
  %958 = vdwg.mxu0
  %959 = vmatprep.subr.mxu0 %v886
  %960 = vmatpush1.msra.mxu0 %v883
  %961 = vmatprep.subr.mxu0 0.0
  %962 = vmatpush1.msra.mxu0 0.0
  %963 = vmatprep.subr.mxu0 0.0
  %964 = vmatpush1.msra.mxu0 0.0
  %965 = vmatprep.subr.mxu0 0.0
  %966 = vmatpush1.msra.mxu0 0.0
  %967 = vmatprep.subr.mxu0 0.0
  %968 = vmatpush1.msra.mxu0 0.0
  %969 = vmatprep.subr.mxu0 0.0
  %970 = vmatpush1.msra.mxu0 0.0
  %971 = vmatprep.subr.mxu0 0.0
  %972 = vmatpush1.msra.mxu0 0.0
  %973 = vmatprep.subr.mxu0 0.0
  %974 = vmatpush1.msra.mxu0 0.0
  %975 = vmatprep.subr.mxu0 0.0
  %976 = vmatpush1.msra.mxu0 0.0
  %977 = vmatprep.subr.mxu0 0.0
  %978 = vmatpush1.msra.mxu0 0.0
  %979 = vmatprep.subr.mxu0 0.0
  %980 = vmatpush1.msra.mxu0 0.0
  %981 = vmatprep.subr.mxu0 0.0
  %982 = vmatpush1.msra.mxu0 0.0
  %983 = vmatprep.subr.mxu0 0.0
  %984 = vmatpush1.msra.mxu0 0.0
  %985 = vmatprep.subr.mxu0 0.0
  %986 = vmatpush1.msra.mxu0 0.0
  %987 = vmatprep.subr.mxu0 0.0
  %988 = vmatpush1.msra.mxu0 0.0
  %989 = vmatprep.subr.mxu0 0.0
  %990 = vmatpush1.msra.mxu0 0.0
  %991 = vmatprep.subr.mxu0 0.0
  %992 = vmatpush1.msra.mxu0 0.0
  %993 = vmatprep.subr.mxu0 0.0
  %994 = vmatpush1.msra.mxu0 0.0
  %995 = vmatprep.subr.mxu0 0.0
  %996 = vmatpush1.msra.mxu0 0.0
  %997 = vmatprep.subr.mxu0 0.0
  %998 = vmatpush1.msra.mxu0 0.0
  %999 = vmatprep.subr.mxu0 0.0
  %1000 = vmatpush1.msra.mxu0 0.0
  %1001 = vmatprep.subr.mxu0 0.0
  %1002 = vmatpush1.msra.mxu0 0.0
  %1003 = vmatprep.subr.mxu0 0.0
  %1004 = vmatpush1.msra.mxu0 0.0
  %1005 = vmatprep.subr.mxu0 0.0
  %1006 = vmatpush1.msra.mxu0 0.0
  %1007 = vmatprep.subr.mxu0 0.0
  %1008 = vmatpush1.msra.mxu0 0.0
  %1009 = vmatprep.subr.mxu0 0.0
  %1010 = vmatpush1.msra.mxu0 0.0
  %1011 = vmatprep.subr.mxu0 0.0
  %1012 = vmatpush1.msra.mxu0 0.0
  %1013 = vmatprep.subr.mxu0 0.0
  %1014 = vmatpush1.msra.mxu0 0.0
  %1015 = vmatprep.subr.mxu0 0.0
  %1016 = vmatpush1.msra.mxu0 0.0
  %1017 = vmatprep.subr.mxu0 0.0
  %1018 = vmatpush1.msra.mxu0 0.0
  %1019 = vmatprep.subr.mxu0 0.0
  %1020 = vmatpush1.msra.mxu0 0.0
  %1021 = vmatprep.subr.mxu0 0.0
  %1022 = vmatpush1.msra.mxu0 0.0
  %1023 = vmatprep.mubr.f32.mxu0 0.0
  %1024 = vmatmul.mubr.f32.gmra.mrb[0].mxu0 %v874
  %v1025 = vpop.f32.mrb[0].mxu0
  %v1026 = vadd.f32 0.0, %v1025
  %v1027 = vpop.f32.mrb[0].mxu0
  %v1028 = vadd.f32 0.0, %v1027
  %1029 = vdwg.mxu0
  %v1030 = vadd.f32 %v827, %v955
  %v1031 = vadd.f32 %v828, %v957
  %v1032 = vadd.f32 %v829, %v1026
  %v1033 = vadd.f32 %v830, %v1028
  %s1034 = scalar_lea.vmem %s2, 8
  %v1035 = vld [vmem:[%s1034] sm:$0x3]
  %v1037 = vsel %vm310, %v1035, 0
  %v1040 = vsel %vm314, %v214, 0
  %v1043 = vsel %vm314, %v215, 0
  %v1046 = vsel %vm314, %v216, 0
  %v1049 = vsel %vm314, %v217, 0
  %1051 = vmatprep.subr.mxu0 %v1043
  %1052 = vmatpush1.msra.mxu0 %v1040
  %1053 = vmatprep.subr.mxu0 0.0
  %1054 = vmatpush1.msra.mxu0 0.0
  %1055 = vmatprep.subr.mxu0 0.0
  %1056 = vmatpush1.msra.mxu0 0.0
  %1057 = vmatprep.subr.mxu0 0.0
  %1058 = vmatpush1.msra.mxu0 0.0
  %1059 = vmatprep.subr.mxu0 0.0
  %1060 = vmatpush1.msra.mxu0 0.0
  %1061 = vmatprep.subr.mxu0 0.0
  %1062 = vmatpush1.msra.mxu0 0.0
  %1063 = vmatprep.subr.mxu0 0.0
  %1064 = vmatpush1.msra.mxu0 0.0
  %1065 = vmatprep.subr.mxu0 0.0
  %1066 = vmatpush1.msra.mxu0 0.0
  %1067 = vmatprep.subr.mxu0 0.0
  %1068 = vmatpush1.msra.mxu0 0.0
  %1069 = vmatprep.subr.mxu0 0.0
  %1070 = vmatpush1.msra.mxu0 0.0
  %1071 = vmatprep.subr.mxu0 0.0
  %1072 = vmatpush1.msra.mxu0 0.0
  %1073 = vmatprep.subr.mxu0 0.0
  %1074 = vmatpush1.msra.mxu0 0.0
  %1075 = vmatprep.subr.mxu0 0.0
  %1076 = vmatpush1.msra.mxu0 0.0
  %1077 = vmatprep.subr.mxu0 0.0
  %1078 = vmatpush1.msra.mxu0 0.0
  %1079 = vmatprep.subr.mxu0 0.0
  %1080 = vmatpush1.msra.mxu0 0.0
  %1081 = vmatprep.subr.mxu0 0.0
  %1082 = vmatpush1.msra.mxu0 0.0
  %1083 = vmatprep.subr.mxu0 0.0
  %1084 = vmatpush1.msra.mxu0 0.0
  %1085 = vmatprep.subr.mxu0 0.0
  %1086 = vmatpush1.msra.mxu0 0.0
  %1087 = vmatprep.subr.mxu0 0.0
  %1088 = vmatpush1.msra.mxu0 0.0
  %1089 = vmatprep.subr.mxu0 0.0
  %1090 = vmatpush1.msra.mxu0 0.0
  %1091 = vmatprep.subr.mxu0 0.0
  %1092 = vmatpush1.msra.mxu0 0.0
  %1093 = vmatprep.subr.mxu0 0.0
  %1094 = vmatpush1.msra.mxu0 0.0
  %1095 = vmatprep.subr.mxu0 0.0
  %1096 = vmatpush1.msra.mxu0 0.0
  %1097 = vmatprep.subr.mxu0 0.0
  %1098 = vmatpush1.msra.mxu0 0.0
  %1099 = vmatprep.subr.mxu0 0.0
  %1100 = vmatpush1.msra.mxu0 0.0
  %1101 = vmatprep.subr.mxu0 0.0
  %1102 = vmatpush1.msra.mxu0 0.0
  %1103 = vmatprep.subr.mxu0 0.0
  %1104 = vmatpush1.msra.mxu0 0.0
  %1105 = vmatprep.subr.mxu0 0.0
  %1106 = vmatpush1.msra.mxu0 0.0
  %1107 = vmatprep.subr.mxu0 0.0
  %1108 = vmatpush1.msra.mxu0 0.0
  %1109 = vmatprep.subr.mxu0 0.0
  %1110 = vmatpush1.msra.mxu0 0.0
  %1111 = vmatprep.subr.mxu0 0.0
  %1112 = vmatpush1.msra.mxu0 0.0
  %1113 = vmatprep.subr.mxu0 0.0
  %1114 = vmatpush1.msra.mxu0 0.0
  %1115 = vmatprep.mubr.f32.mxu0 0.0
  %1116 = vmatmul.mubr.f32.gmra.mrb[0].mxu0 %v1037
  %v1117 = vpop.f32.mrb[0].mxu0
  %v1118 = vadd.f32 0.0, %v1117
  %v1119 = vpop.f32.mrb[0].mxu0
  %v1120 = vadd.f32 0.0, %v1119
  %1121 = vdwg.mxu0
  %1122 = vmatprep.subr.mxu0 %v1049
  %1123 = vmatpush1.msra.mxu0 %v1046
  %1124 = vmatprep.subr.mxu0 0.0
  %1125 = vmatpush1.msra.mxu0 0.0
  %1126 = vmatprep.subr.mxu0 0.0
  %1127 = vmatpush1.msra.mxu0 0.0
  %1128 = vmatprep.subr.mxu0 0.0
  %1129 = vmatpush1.msra.mxu0 0.0
  %1130 = vmatprep.subr.mxu0 0.0
  %1131 = vmatpush1.msra.mxu0 0.0
  %1132 = vmatprep.subr.mxu0 0.0
  %1133 = vmatpush1.msra.mxu0 0.0
  %1134 = vmatprep.subr.mxu0 0.0
  %1135 = vmatpush1.msra.mxu0 0.0
  %1136 = vmatprep.subr.mxu0 0.0
  %1137 = vmatpush1.msra.mxu0 0.0
  %1138 = vmatprep.subr.mxu0 0.0
  %1139 = vmatpush1.msra.mxu0 0.0
  %1140 = vmatprep.subr.mxu0 0.0
  %1141 = vmatpush1.msra.mxu0 0.0
  %1142 = vmatprep.subr.mxu0 0.0
  %1143 = vmatpush1.msra.mxu0 0.0
  %1144 = vmatprep.subr.mxu0 0.0
  %1145 = vmatpush1.msra.mxu0 0.0
  %1146 = vmatprep.subr.mxu0 0.0
  %1147 = vmatpush1.msra.mxu0 0.0
  %1148 = vmatprep.subr.mxu0 0.0
  %1149 = vmatpush1.msra.mxu0 0.0
  %1150 = vmatprep.subr.mxu0 0.0
  %1151 = vmatpush1.msra.mxu0 0.0
  %1152 = vmatprep.subr.mxu0 0.0
  %1153 = vmatpush1.msra.mxu0 0.0
  %1154 = vmatprep.subr.mxu0 0.0
  %1155 = vmatpush1.msra.mxu0 0.0
  %1156 = vmatprep.subr.mxu0 0.0
  %1157 = vmatpush1.msra.mxu0 0.0
  %1158 = vmatprep.subr.mxu0 0.0
  %1159 = vmatpush1.msra.mxu0 0.0
  %1160 = vmatprep.subr.mxu0 0.0
  %1161 = vmatpush1.msra.mxu0 0.0
  %1162 = vmatprep.subr.mxu0 0.0
  %1163 = vmatpush1.msra.mxu0 0.0
  %1164 = vmatprep.subr.mxu0 0.0
  %1165 = vmatpush1.msra.mxu0 0.0
  %1166 = vmatprep.subr.mxu0 0.0
  %1167 = vmatpush1.msra.mxu0 0.0
  %1168 = vmatprep.subr.mxu0 0.0
  %1169 = vmatpush1.msra.mxu0 0.0
  %1170 = vmatprep.subr.mxu0 0.0
  %1171 = vmatpush1.msra.mxu0 0.0
  %1172 = vmatprep.subr.mxu0 0.0
  %1173 = vmatpush1.msra.mxu0 0.0
  %1174 = vmatprep.subr.mxu0 0.0
  %1175 = vmatpush1.msra.mxu0 0.0
  %1176 = vmatprep.subr.mxu0 0.0
  %1177 = vmatpush1.msra.mxu0 0.0
  %1178 = vmatprep.subr.mxu0 0.0
  %1179 = vmatpush1.msra.mxu0 0.0
  %1180 = vmatprep.subr.mxu0 0.0
  %1181 = vmatpush1.msra.mxu0 0.0
  %1182 = vmatprep.subr.mxu0 0.0
  %1183 = vmatpush1.msra.mxu0 0.0
  %1184 = vmatprep.subr.mxu0 0.0
  %1185 = vmatpush1.msra.mxu0 0.0
  %1186 = vmatprep.mubr.f32.mxu0 0.0
  %1187 = vmatmul.mubr.f32.gmra.mrb[0].mxu0 %v1037
  %v1188 = vpop.f32.mrb[0].mxu0
  %v1189 = vadd.f32 0.0, %v1188
  %v1190 = vpop.f32.mrb[0].mxu0
  %v1191 = vadd.f32 0.0, %v1190
  %1192 = vdwg.mxu0
  %v1193 = vadd.f32 %v1030, %v1118
  %v1194 = vadd.f32 %v1031, %v1120
  %v1195 = vadd.f32 %v1032, %v1189
  %v1196 = vadd.f32 %v1033, %v1191
  %1197 = vrot.lane.b32.xlu0 %v214, 127
  %v1198 = vpop.permute.xlu0 %1197
  %1199 = vrot.lane.b32.xlu0 %v215, 127
  %v1200 = vpop.permute.xlu0 %1199
  %1201 = vrot.lane.b32.xlu0 %v216, 127
  %v1202 = vpop.permute.xlu0 %1201
  %1203 = vrot.lane.b32.xlu0 %v217, 127
  %v1204 = vpop.permute.xlu0 %1203
  %vm1205 = vcmp.lt.s32.totalorder %v231, 127
  %v1206 = vsel %vm1205, %v1202, %v1204
  %v1207 = vsel %vm1205, %v1200, %v1202
  %v1208 = vsel %vm1205, %v1198, %v1200
  %v1209 = vsel %vm1205, %v1204, %v1198
  %v1210 = vsel %vm639, 1, 0
  %v1211 = vcvt.s32.f32 %v1210
  %v1213 = vlaneseq
  %v1214 = vshrl.u32 %v1213, 7
  %v1215 = vsub.s32 0, %v1214
  %v1216 = vrot.slane %v1211, %v1215
  %v1217 = vlaneseq
  %v1218 = vshrl.u32 %v1217, 7
  %v1219 = vsub.s32 1, %v1218
  %v1220 = vrot.slane %v1211, %v1219
  %v1221 = vlaneseq
  %v1222 = vshrl.u32 %v1221, 7
  %v1223 = vsub.s32 2, %v1222
  %v1224 = vrot.slane %v1211, %v1223
  %v1225 = vlaneseq
  %v1226 = vshrl.u32 %v1225, 7
  %v1227 = vsub.s32 3, %v1226
  %v1228 = vrot.slane %v1211, %v1227
  %v1233 = vmul.f32 %v1208, %v1216
  %v1234 = vmul.f32 %v1207, %v1220
  %v1235 = vmul.f32 %v1206, %v1224
  %v1236 = vmul.f32 %v1209, %v1228
  %s1237 = scalar_lea.vmem %s2, 10
  %v1238 = vld [vmem:[%s1237] sm:$0x3]
  %v1240 = vsel %vm310, %v1238, 0
  %v1243 = vsel %vm314, %v1233, 0
  %v1246 = vsel %vm314, %v1234, 0
  %v1249 = vsel %vm314, %v1235, 0
  %v1252 = vsel %vm314, %v1236, 0
  %1254 = vmatprep.subr.mxu0 %v1246
  %1255 = vmatpush1.msra.mxu0 %v1243
  %1256 = vmatprep.subr.mxu0 0.0
  %1257 = vmatpush1.msra.mxu0 0.0
  %1258 = vmatprep.subr.mxu0 0.0
  %1259 = vmatpush1.msra.mxu0 0.0
  %1260 = vmatprep.subr.mxu0 0.0
  %1261 = vmatpush1.msra.mxu0 0.0
  %1262 = vmatprep.subr.mxu0 0.0
  %1263 = vmatpush1.msra.mxu0 0.0
  %1264 = vmatprep.subr.mxu0 0.0
  %1265 = vmatpush1.msra.mxu0 0.0
  %1266 = vmatprep.subr.mxu0 0.0
  %1267 = vmatpush1.msra.mxu0 0.0
  %1268 = vmatprep.subr.mxu0 0.0
  %1269 = vmatpush1.msra.mxu0 0.0
  %1270 = vmatprep.subr.mxu0 0.0
  %1271 = vmatpush1.msra.mxu0 0.0
  %1272 = vmatprep.subr.mxu0 0.0
  %1273 = vmatpush1.msra.mxu0 0.0
  %1274 = vmatprep.subr.mxu0 0.0
  %1275 = vmatpush1.msra.mxu0 0.0
  %1276 = vmatprep.subr.mxu0 0.0
  %1277 = vmatpush1.msra.mxu0 0.0
  %1278 = vmatprep.subr.mxu0 0.0
  %1279 = vmatpush1.msra.mxu0 0.0
  %1280 = vmatprep.subr.mxu0 0.0
  %1281 = vmatpush1.msra.mxu0 0.0
  %1282 = vmatprep.subr.mxu0 0.0
  %1283 = vmatpush1.msra.mxu0 0.0
  %1284 = vmatprep.subr.mxu0 0.0
  %1285 = vmatpush1.msra.mxu0 0.0
  %1286 = vmatprep.subr.mxu0 0.0
  %1287 = vmatpush1.msra.mxu0 0.0
  %1288 = vmatprep.subr.mxu0 0.0
  %1289 = vmatpush1.msra.mxu0 0.0
  %1290 = vmatprep.subr.mxu0 0.0
  %1291 = vmatpush1.msra.mxu0 0.0
  %1292 = vmatprep.subr.mxu0 0.0
  %1293 = vmatpush1.msra.mxu0 0.0
  %1294 = vmatprep.subr.mxu0 0.0
  %1295 = vmatpush1.msra.mxu0 0.0
  %1296 = vmatprep.subr.mxu0 0.0
  %1297 = vmatpush1.msra.mxu0 0.0
  %1298 = vmatprep.subr.mxu0 0.0
  %1299 = vmatpush1.msra.mxu0 0.0
  %1300 = vmatprep.subr.mxu0 0.0
  %1301 = vmatpush1.msra.mxu0 0.0
  %1302 = vmatprep.subr.mxu0 0.0
  %1303 = vmatpush1.msra.mxu0 0.0
  %1304 = vmatprep.subr.mxu0 0.0
  %1305 = vmatpush1.msra.mxu0 0.0
  %1306 = vmatprep.subr.mxu0 0.0
  %1307 = vmatpush1.msra.mxu0 0.0
  %1308 = vmatprep.subr.mxu0 0.0
  %1309 = vmatpush1.msra.mxu0 0.0
  %1310 = vmatprep.subr.mxu0 0.0
  %1311 = vmatpush1.msra.mxu0 0.0
  %1312 = vmatprep.subr.mxu0 0.0
  %1313 = vmatpush1.msra.mxu0 0.0
  %1314 = vmatprep.subr.mxu0 0.0
  %1315 = vmatpush1.msra.mxu0 0.0
  %1316 = vmatprep.subr.mxu0 0.0
  %1317 = vmatpush1.msra.mxu0 0.0
  %1318 = vmatprep.mubr.f32.mxu0 0.0
  %1319 = vmatmul.mubr.f32.gmra.mrb[0].mxu0 %v1240
  %v1320 = vpop.f32.mrb[0].mxu0
  %v1321 = vadd.f32 0.0, %v1320
  %v1322 = vpop.f32.mrb[0].mxu0
  %v1323 = vadd.f32 0.0, %v1322
  %1324 = vdwg.mxu0
  %1325 = vmatprep.subr.mxu0 %v1252
  %1326 = vmatpush1.msra.mxu0 %v1249
  %1327 = vmatprep.subr.mxu0 0.0
  %1328 = vmatpush1.msra.mxu0 0.0
  %1329 = vmatprep.subr.mxu0 0.0
  %1330 = vmatpush1.msra.mxu0 0.0
  %1331 = vmatprep.subr.mxu0 0.0
  %1332 = vmatpush1.msra.mxu0 0.0
  %1333 = vmatprep.subr.mxu0 0.0
  %1334 = vmatpush1.msra.mxu0 0.0
  %1335 = vmatprep.subr.mxu0 0.0
  %1336 = vmatpush1.msra.mxu0 0.0
  %1337 = vmatprep.subr.mxu0 0.0
  %1338 = vmatpush1.msra.mxu0 0.0
  %1339 = vmatprep.subr.mxu0 0.0
  %1340 = vmatpush1.msra.mxu0 0.0
  %1341 = vmatprep.subr.mxu0 0.0
  %1342 = vmatpush1.msra.mxu0 0.0
  %1343 = vmatprep.subr.mxu0 0.0
  %1344 = vmatpush1.msra.mxu0 0.0
  %1345 = vmatprep.subr.mxu0 0.0
  %1346 = vmatpush1.msra.mxu0 0.0
  %1347 = vmatprep.subr.mxu0 0.0
  %1348 = vmatpush1.msra.mxu0 0.0
  %1349 = vmatprep.subr.mxu0 0.0
  %1350 = vmatpush1.msra.mxu0 0.0
  %1351 = vmatprep.subr.mxu0 0.0
  %1352 = vmatpush1.msra.mxu0 0.0
  %1353 = vmatprep.subr.mxu0 0.0
  %1354 = vmatpush1.msra.mxu0 0.0
  %1355 = vmatprep.subr.mxu0 0.0
  %1356 = vmatpush1.msra.mxu0 0.0
  %1357 = vmatprep.subr.mxu0 0.0
  %1358 = vmatpush1.msra.mxu0 0.0
  %1359 = vmatprep.subr.mxu0 0.0
  %1360 = vmatpush1.msra.mxu0 0.0
  %1361 = vmatprep.subr.mxu0 0.0
  %1362 = vmatpush1.msra.mxu0 0.0
  %1363 = vmatprep.subr.mxu0 0.0
  %1364 = vmatpush1.msra.mxu0 0.0
  %1365 = vmatprep.subr.mxu0 0.0
  %1366 = vmatpush1.msra.mxu0 0.0
  %1367 = vmatprep.subr.mxu0 0.0
  %1368 = vmatpush1.msra.mxu0 0.0
  %1369 = vmatprep.subr.mxu0 0.0
  %1370 = vmatpush1.msra.mxu0 0.0
  %1371 = vmatprep.subr.mxu0 0.0
  %1372 = vmatpush1.msra.mxu0 0.0
  %1373 = vmatprep.subr.mxu0 0.0
  %1374 = vmatpush1.msra.mxu0 0.0
  %1375 = vmatprep.subr.mxu0 0.0
  %1376 = vmatpush1.msra.mxu0 0.0
  %1377 = vmatprep.subr.mxu0 0.0
  %1378 = vmatpush1.msra.mxu0 0.0
  %1379 = vmatprep.subr.mxu0 0.0
  %1380 = vmatpush1.msra.mxu0 0.0
  %1381 = vmatprep.subr.mxu0 0.0
  %1382 = vmatpush1.msra.mxu0 0.0
  %1383 = vmatprep.subr.mxu0 0.0
  %1384 = vmatpush1.msra.mxu0 0.0
  %1385 = vmatprep.subr.mxu0 0.0
  %1386 = vmatpush1.msra.mxu0 0.0
  %1387 = vmatprep.subr.mxu0 0.0
  %1388 = vmatpush1.msra.mxu0 0.0
  %1389 = vmatprep.mubr.f32.mxu0 0.0
  %1390 = vmatmul.mubr.f32.gmra.mrb[0].mxu0 %v1240
  %v1391 = vpop.f32.mrb[0].mxu0
  %v1392 = vadd.f32 0.0, %v1391
  %v1393 = vpop.f32.mrb[0].mxu0
  %v1394 = vadd.f32 0.0, %v1393
  %1395 = vdwg.mxu0
  %v1396 = vadd.f32 %v1193, %v1321
  %v1397 = vadd.f32 %v1194, %v1323
  %v1398 = vadd.f32 %v1195, %v1392
  %v1399 = vadd.f32 %v1196, %v1394
  %1400 = vrot.lane.b32.xlu0 %v214, 113
  %v1401 = vpop.permute.xlu0 %1400
  %1402 = vrot.lane.b32.xlu0 %v215, 113
  %v1403 = vpop.permute.xlu0 %1402
  %1404 = vrot.lane.b32.xlu0 %v216, 113
  %v1405 = vpop.permute.xlu0 %1404
  %1406 = vrot.lane.b32.xlu0 %v217, 113
  %v1407 = vpop.permute.xlu0 %1406
  %vm1408 = vcmp.lt.s32.totalorder %v231, 113
  %v1409 = vsel %vm1408, %v1405, %v1407
  %v1410 = vsel %vm1408, %v1403, %v1405
  %v1411 = vsel %vm1408, %v1401, %v1403
  %v1412 = vsel %vm1408, %v1407, %v1401
  %vm1413 = vcmp.le.s32.totalorder %v36, 14
  %vm1414 = vmand %vm1413, %vm238
  %v1415 = vsel %vm1414, 1, 0
  %v1416 = vcvt.s32.f32 %v1415
  %v1418 = vlaneseq
  %v1419 = vshrl.u32 %v1418, 7
  %v1420 = vsub.s32 0, %v1419
  %v1421 = vrot.slane %v1416, %v1420
  %v1422 = vlaneseq
  %v1423 = vshrl.u32 %v1422, 7
  %v1424 = vsub.s32 1, %v1423
  %v1425 = vrot.slane %v1416, %v1424
  %v1426 = vlaneseq
  %v1427 = vshrl.u32 %v1426, 7
  %v1428 = vsub.s32 2, %v1427
  %v1429 = vrot.slane %v1416, %v1428
  %v1430 = vlaneseq
  %v1431 = vshrl.u32 %v1430, 7
  %v1432 = vsub.s32 3, %v1431
  %v1433 = vrot.slane %v1416, %v1432
  %v1438 = vmul.f32 %v1411, %v1421
  %v1439 = vmul.f32 %v1410, %v1425
  %v1440 = vmul.f32 %v1409, %v1429
  %v1441 = vmul.f32 %v1412, %v1433
  %s1442 = scalar_lea.vmem %s2, 12
  %v1443 = vld [vmem:[%s1442] sm:$0x3]
  %v1445 = vsel %vm310, %v1443, 0
  %v1448 = vsel %vm314, %v1438, 0
  %v1451 = vsel %vm314, %v1439, 0
  %v1454 = vsel %vm314, %v1440, 0
  %v1457 = vsel %vm314, %v1441, 0
  %1459 = vmatprep.subr.mxu0 %v1451
  %1460 = vmatpush1.msra.mxu0 %v1448
  %1461 = vmatprep.subr.mxu0 0.0
  %1462 = vmatpush1.msra.mxu0 0.0
  %1463 = vmatprep.subr.mxu0 0.0
  %1464 = vmatpush1.msra.mxu0 0.0
  %1465 = vmatprep.subr.mxu0 0.0
  %1466 = vmatpush1.msra.mxu0 0.0
  %1467 = vmatprep.subr.mxu0 0.0
  %1468 = vmatpush1.msra.mxu0 0.0
  %1469 = vmatprep.subr.mxu0 0.0
  %1470 = vmatpush1.msra.mxu0 0.0
  %1471 = vmatprep.subr.mxu0 0.0
  %1472 = vmatpush1.msra.mxu0 0.0
  %1473 = vmatprep.subr.mxu0 0.0
  %1474 = vmatpush1.msra.mxu0 0.0
  %1475 = vmatprep.subr.mxu0 0.0
  %1476 = vmatpush1.msra.mxu0 0.0
  %1477 = vmatprep.subr.mxu0 0.0
  %1478 = vmatpush1.msra.mxu0 0.0
  %1479 = vmatprep.subr.mxu0 0.0
  %1480 = vmatpush1.msra.mxu0 0.0
  %1481 = vmatprep.subr.mxu0 0.0
  %1482 = vmatpush1.msra.mxu0 0.0
  %1483 = vmatprep.subr.mxu0 0.0
  %1484 = vmatpush1.msra.mxu0 0.0
  %1485 = vmatprep.subr.mxu0 0.0
  %1486 = vmatpush1.msra.mxu0 0.0
  %1487 = vmatprep.subr.mxu0 0.0
  %1488 = vmatpush1.msra.mxu0 0.0
  %1489 = vmatprep.subr.mxu0 0.0
  %1490 = vmatpush1.msra.mxu0 0.0
  %1491 = vmatprep.subr.mxu0 0.0
  %1492 = vmatpush1.msra.mxu0 0.0
  %1493 = vmatprep.subr.mxu0 0.0
  %1494 = vmatpush1.msra.mxu0 0.0
  %1495 = vmatprep.subr.mxu0 0.0
  %1496 = vmatpush1.msra.mxu0 0.0
  %1497 = vmatprep.subr.mxu0 0.0
  %1498 = vmatpush1.msra.mxu0 0.0
  %1499 = vmatprep.subr.mxu0 0.0
  %1500 = vmatpush1.msra.mxu0 0.0
  %1501 = vmatprep.subr.mxu0 0.0
  %1502 = vmatpush1.msra.mxu0 0.0
  %1503 = vmatprep.subr.mxu0 0.0
  %1504 = vmatpush1.msra.mxu0 0.0
  %1505 = vmatprep.subr.mxu0 0.0
  %1506 = vmatpush1.msra.mxu0 0.0
  %1507 = vmatprep.subr.mxu0 0.0
  %1508 = vmatpush1.msra.mxu0 0.0
  %1509 = vmatprep.subr.mxu0 0.0
  %1510 = vmatpush1.msra.mxu0 0.0
  %1511 = vmatprep.subr.mxu0 0.0
  %1512 = vmatpush1.msra.mxu0 0.0
  %1513 = vmatprep.subr.mxu0 0.0
  %1514 = vmatpush1.msra.mxu0 0.0
  %1515 = vmatprep.subr.mxu0 0.0
  %1516 = vmatpush1.msra.mxu0 0.0
  %1517 = vmatprep.subr.mxu0 0.0
  %1518 = vmatpush1.msra.mxu0 0.0
  %1519 = vmatprep.subr.mxu0 0.0
  %1520 = vmatpush1.msra.mxu0 0.0
  %1521 = vmatprep.subr.mxu0 0.0
  %1522 = vmatpush1.msra.mxu0 0.0
  %1523 = vmatprep.mubr.f32.mxu0 0.0
  %1524 = vmatmul.mubr.f32.gmra.mrb[0].mxu0 %v1445
  %v1525 = vpop.f32.mrb[0].mxu0
  %v1526 = vadd.f32 0.0, %v1525
  %v1527 = vpop.f32.mrb[0].mxu0
  %v1528 = vadd.f32 0.0, %v1527
  %1529 = vdwg.mxu0
  %1530 = vmatprep.subr.mxu0 %v1457
  %1531 = vmatpush1.msra.mxu0 %v1454
  %1532 = vmatprep.subr.mxu0 0.0
  %1533 = vmatpush1.msra.mxu0 0.0
  %1534 = vmatprep.subr.mxu0 0.0
  %1535 = vmatpush1.msra.mxu0 0.0
  %1536 = vmatprep.subr.mxu0 0.0
  %1537 = vmatpush1.msra.mxu0 0.0
  %1538 = vmatprep.subr.mxu0 0.0
  %1539 = vmatpush1.msra.mxu0 0.0
  %1540 = vmatprep.subr.mxu0 0.0
  %1541 = vmatpush1.msra.mxu0 0.0
  %1542 = vmatprep.subr.mxu0 0.0
  %1543 = vmatpush1.msra.mxu0 0.0
  %1544 = vmatprep.subr.mxu0 0.0
  %1545 = vmatpush1.msra.mxu0 0.0
  %1546 = vmatprep.subr.mxu0 0.0
  %1547 = vmatpush1.msra.mxu0 0.0
  %1548 = vmatprep.subr.mxu0 0.0
  %1549 = vmatpush1.msra.mxu0 0.0
  %1550 = vmatprep.subr.mxu0 0.0
  %1551 = vmatpush1.msra.mxu0 0.0
  %1552 = vmatprep.subr.mxu0 0.0
  %1553 = vmatpush1.msra.mxu0 0.0
  %1554 = vmatprep.subr.mxu0 0.0
  %1555 = vmatpush1.msra.mxu0 0.0
  %1556 = vmatprep.subr.mxu0 0.0
  %1557 = vmatpush1.msra.mxu0 0.0
  %1558 = vmatprep.subr.mxu0 0.0
  %1559 = vmatpush1.msra.mxu0 0.0
  %1560 = vmatprep.subr.mxu0 0.0
  %1561 = vmatpush1.msra.mxu0 0.0
  %1562 = vmatprep.subr.mxu0 0.0
  %1563 = vmatpush1.msra.mxu0 0.0
  %1564 = vmatprep.subr.mxu0 0.0
  %1565 = vmatpush1.msra.mxu0 0.0
  %1566 = vmatprep.subr.mxu0 0.0
  %1567 = vmatpush1.msra.mxu0 0.0
  %1568 = vmatprep.subr.mxu0 0.0
  %1569 = vmatpush1.msra.mxu0 0.0
  %1570 = vmatprep.subr.mxu0 0.0
  %1571 = vmatpush1.msra.mxu0 0.0
  %1572 = vmatprep.subr.mxu0 0.0
  %1573 = vmatpush1.msra.mxu0 0.0
  %1574 = vmatprep.subr.mxu0 0.0
  %1575 = vmatpush1.msra.mxu0 0.0
  %1576 = vmatprep.subr.mxu0 0.0
  %1577 = vmatpush1.msra.mxu0 0.0
  %1578 = vmatprep.subr.mxu0 0.0
  %1579 = vmatpush1.msra.mxu0 0.0
  %1580 = vmatprep.subr.mxu0 0.0
  %1581 = vmatpush1.msra.mxu0 0.0
  %1582 = vmatprep.subr.mxu0 0.0
  %1583 = vmatpush1.msra.mxu0 0.0
  %1584 = vmatprep.subr.mxu0 0.0
  %1585 = vmatpush1.msra.mxu0 0.0
  %1586 = vmatprep.subr.mxu0 0.0
  %1587 = vmatpush1.msra.mxu0 0.0
  %1588 = vmatprep.subr.mxu0 0.0
  %1589 = vmatpush1.msra.mxu0 0.0
  %1590 = vmatprep.subr.mxu0 0.0
  %1591 = vmatpush1.msra.mxu0 0.0
  %1592 = vmatprep.subr.mxu0 0.0
  %1593 = vmatpush1.msra.mxu0 0.0
  %1594 = vmatprep.mubr.f32.mxu0 0.0
  %1595 = vmatmul.mubr.f32.gmra.mrb[0].mxu0 %v1445
  %v1596 = vpop.f32.mrb[0].mxu0
  %v1597 = vadd.f32 0.0, %v1596
  %v1598 = vpop.f32.mrb[0].mxu0
  %v1599 = vadd.f32 0.0, %v1598
  %1600 = vdwg.mxu0
  %v1601 = vadd.f32 %v1396, %v1526
  %v1602 = vadd.f32 %v1397, %v1528
  %v1603 = vadd.f32 %v1398, %v1597
  %v1604 = vadd.f32 %v1399, %v1599
  %1605 = vrot.lane.b32.xlu0 %v214, 112
  %v1606 = vpop.permute.xlu0 %1605
  %1607 = vrot.lane.b32.xlu0 %v215, 112
  %v1608 = vpop.permute.xlu0 %1607
  %1609 = vrot.lane.b32.xlu0 %v216, 112
  %v1610 = vpop.permute.xlu0 %1609
  %1611 = vrot.lane.b32.xlu0 %v217, 112
  %v1612 = vpop.permute.xlu0 %1611
  %vm1613 = vcmp.lt.s32.totalorder %v231, 112
  %v1614 = vsel %vm1613, %v1610, %v1612
  %v1615 = vsel %vm1613, %v1608, %v1610
  %v1616 = vsel %vm1613, %v1606, %v1608
  %v1617 = vsel %vm1613, %v1612, %v1606
  %v1618 = vsel %vm1413, 1, 0
  %v1619 = vcvt.s32.f32 %v1618
  %v1621 = vlaneseq
  %v1622 = vshrl.u32 %v1621, 7
  %v1623 = vsub.s32 0, %v1622
  %v1624 = vrot.slane %v1619, %v1623
  %v1625 = vlaneseq
  %v1626 = vshrl.u32 %v1625, 7
  %v1627 = vsub.s32 1, %v1626
  %v1628 = vrot.slane %v1619, %v1627
  %v1629 = vlaneseq
  %v1630 = vshrl.u32 %v1629, 7
  %v1631 = vsub.s32 2, %v1630
  %v1632 = vrot.slane %v1619, %v1631
  %v1633 = vlaneseq
  %v1634 = vshrl.u32 %v1633, 7
  %v1635 = vsub.s32 3, %v1634
  %v1636 = vrot.slane %v1619, %v1635
  %v1641 = vmul.f32 %v1616, %v1624
  %v1642 = vmul.f32 %v1615, %v1628
  %v1643 = vmul.f32 %v1614, %v1632
  %v1644 = vmul.f32 %v1617, %v1636
  %s1645 = scalar_lea.vmem %s2, 14
  %v1646 = vld [vmem:[%s1645] sm:$0x3]
  %v1648 = vsel %vm310, %v1646, 0
  %v1651 = vsel %vm314, %v1641, 0
  %v1654 = vsel %vm314, %v1642, 0
  %v1657 = vsel %vm314, %v1643, 0
  %v1660 = vsel %vm314, %v1644, 0
  %1662 = vmatprep.subr.mxu0 %v1654
  %1663 = vmatpush1.msra.mxu0 %v1651
  %1664 = vmatprep.subr.mxu0 0.0
  %1665 = vmatpush1.msra.mxu0 0.0
  %1666 = vmatprep.subr.mxu0 0.0
  %1667 = vmatpush1.msra.mxu0 0.0
  %1668 = vmatprep.subr.mxu0 0.0
  %1669 = vmatpush1.msra.mxu0 0.0
  %1670 = vmatprep.subr.mxu0 0.0
  %1671 = vmatpush1.msra.mxu0 0.0
  %1672 = vmatprep.subr.mxu0 0.0
  %1673 = vmatpush1.msra.mxu0 0.0
  %1674 = vmatprep.subr.mxu0 0.0
  %1675 = vmatpush1.msra.mxu0 0.0
  %1676 = vmatprep.subr.mxu0 0.0
  %1677 = vmatpush1.msra.mxu0 0.0
  %1678 = vmatprep.subr.mxu0 0.0
  %1679 = vmatpush1.msra.mxu0 0.0
  %1680 = vmatprep.subr.mxu0 0.0
  %1681 = vmatpush1.msra.mxu0 0.0
  %1682 = vmatprep.subr.mxu0 0.0
  %1683 = vmatpush1.msra.mxu0 0.0
  %1684 = vmatprep.subr.mxu0 0.0
  %1685 = vmatpush1.msra.mxu0 0.0
  %1686 = vmatprep.subr.mxu0 0.0
  %1687 = vmatpush1.msra.mxu0 0.0
  %1688 = vmatprep.subr.mxu0 0.0
  %1689 = vmatpush1.msra.mxu0 0.0
  %1690 = vmatprep.subr.mxu0 0.0
  %1691 = vmatpush1.msra.mxu0 0.0
  %1692 = vmatprep.subr.mxu0 0.0
  %1693 = vmatpush1.msra.mxu0 0.0
  %1694 = vmatprep.subr.mxu0 0.0
  %1695 = vmatpush1.msra.mxu0 0.0
  %1696 = vmatprep.subr.mxu0 0.0
  %1697 = vmatpush1.msra.mxu0 0.0
  %1698 = vmatprep.subr.mxu0 0.0
  %1699 = vmatpush1.msra.mxu0 0.0
  %1700 = vmatprep.subr.mxu0 0.0
  %1701 = vmatpush1.msra.mxu0 0.0
  %1702 = vmatprep.subr.mxu0 0.0
  %1703 = vmatpush1.msra.mxu0 0.0
  %1704 = vmatprep.subr.mxu0 0.0
  %1705 = vmatpush1.msra.mxu0 0.0
  %1706 = vmatprep.subr.mxu0 0.0
  %1707 = vmatpush1.msra.mxu0 0.0
  %1708 = vmatprep.subr.mxu0 0.0
  %1709 = vmatpush1.msra.mxu0 0.0
  %1710 = vmatprep.subr.mxu0 0.0
  %1711 = vmatpush1.msra.mxu0 0.0
  %1712 = vmatprep.subr.mxu0 0.0
  %1713 = vmatpush1.msra.mxu0 0.0
  %1714 = vmatprep.subr.mxu0 0.0
  %1715 = vmatpush1.msra.mxu0 0.0
  %1716 = vmatprep.subr.mxu0 0.0
  %1717 = vmatpush1.msra.mxu0 0.0
  %1718 = vmatprep.subr.mxu0 0.0
  %1719 = vmatpush1.msra.mxu0 0.0
  %1720 = vmatprep.subr.mxu0 0.0
  %1721 = vmatpush1.msra.mxu0 0.0
  %1722 = vmatprep.subr.mxu0 0.0
  %1723 = vmatpush1.msra.mxu0 0.0
  %1724 = vmatprep.subr.mxu0 0.0
  %1725 = vmatpush1.msra.mxu0 0.0
  %1726 = vmatprep.mubr.f32.mxu0 0.0
  %1727 = vmatmul.mubr.f32.gmra.mrb[0].mxu0 %v1648
  %v1728 = vpop.f32.mrb[0].mxu0
  %v1729 = vadd.f32 0.0, %v1728
  %v1730 = vpop.f32.mrb[0].mxu0
  %v1731 = vadd.f32 0.0, %v1730
  %1732 = vdwg.mxu0
  %1733 = vmatprep.subr.mxu0 %v1660
  %1734 = vmatpush1.msra.mxu0 %v1657
  %1735 = vmatprep.subr.mxu0 0.0
  %1736 = vmatpush1.msra.mxu0 0.0
  %1737 = vmatprep.subr.mxu0 0.0
  %1738 = vmatpush1.msra.mxu0 0.0
  %1739 = vmatprep.subr.mxu0 0.0
  %1740 = vmatpush1.msra.mxu0 0.0
  %1741 = vmatprep.subr.mxu0 0.0
  %1742 = vmatpush1.msra.mxu0 0.0
  %1743 = vmatprep.subr.mxu0 0.0
  %1744 = vmatpush1.msra.mxu0 0.0
  %1745 = vmatprep.subr.mxu0 0.0
  %1746 = vmatpush1.msra.mxu0 0.0
  %1747 = vmatprep.subr.mxu0 0.0
  %1748 = vmatpush1.msra.mxu0 0.0
  %1749 = vmatprep.subr.mxu0 0.0
  %1750 = vmatpush1.msra.mxu0 0.0
  %1751 = vmatprep.subr.mxu0 0.0
  %1752 = vmatpush1.msra.mxu0 0.0
  %1753 = vmatprep.subr.mxu0 0.0
  %1754 = vmatpush1.msra.mxu0 0.0
  %1755 = vmatprep.subr.mxu0 0.0
  %1756 = vmatpush1.msra.mxu0 0.0
  %1757 = vmatprep.subr.mxu0 0.0
  %1758 = vmatpush1.msra.mxu0 0.0
  %1759 = vmatprep.subr.mxu0 0.0
  %1760 = vmatpush1.msra.mxu0 0.0
  %1761 = vmatprep.subr.mxu0 0.0
  %1762 = vmatpush1.msra.mxu0 0.0
  %1763 = vmatprep.subr.mxu0 0.0
  %1764 = vmatpush1.msra.mxu0 0.0
  %1765 = vmatprep.subr.mxu0 0.0
  %1766 = vmatpush1.msra.mxu0 0.0
  %1767 = vmatprep.subr.mxu0 0.0
  %1768 = vmatpush1.msra.mxu0 0.0
  %1769 = vmatprep.subr.mxu0 0.0
  %1770 = vmatpush1.msra.mxu0 0.0
  %1771 = vmatprep.subr.mxu0 0.0
  %1772 = vmatpush1.msra.mxu0 0.0
  %1773 = vmatprep.subr.mxu0 0.0
  %1774 = vmatpush1.msra.mxu0 0.0
  %1775 = vmatprep.subr.mxu0 0.0
  %1776 = vmatpush1.msra.mxu0 0.0
  %1777 = vmatprep.subr.mxu0 0.0
  %1778 = vmatpush1.msra.mxu0 0.0
  %1779 = vmatprep.subr.mxu0 0.0
  %1780 = vmatpush1.msra.mxu0 0.0
  %1781 = vmatprep.subr.mxu0 0.0
  %1782 = vmatpush1.msra.mxu0 0.0
  %1783 = vmatprep.subr.mxu0 0.0
  %1784 = vmatpush1.msra.mxu0 0.0
  %1785 = vmatprep.subr.mxu0 0.0
  %1786 = vmatpush1.msra.mxu0 0.0
  %1787 = vmatprep.subr.mxu0 0.0
  %1788 = vmatpush1.msra.mxu0 0.0
  %1789 = vmatprep.subr.mxu0 0.0
  %1790 = vmatpush1.msra.mxu0 0.0
  %1791 = vmatprep.subr.mxu0 0.0
  %1792 = vmatpush1.msra.mxu0 0.0
  %1793 = vmatprep.subr.mxu0 0.0
  %1794 = vmatpush1.msra.mxu0 0.0
  %1795 = vmatprep.subr.mxu0 0.0
  %1796 = vmatpush1.msra.mxu0 0.0
  %1797 = vmatprep.mubr.f32.mxu0 0.0
  %1798 = vmatmul.mubr.f32.gmra.mrb[0].mxu0 %v1648
  %v1799 = vpop.f32.mrb[0].mxu0
  %v1800 = vadd.f32 0.0, %v1799
  %v1801 = vpop.f32.mrb[0].mxu0
  %v1802 = vadd.f32 0.0, %v1801
  %1803 = vdwg.mxu0
  %v1804 = vadd.f32 %v1601, %v1729
  %v1805 = vadd.f32 %v1602, %v1731
  %v1806 = vadd.f32 %v1603, %v1800
  %v1807 = vadd.f32 %v1604, %v1802
  %1808 = vrot.lane.b32.xlu0 %v214, 111
  %v1809 = vpop.permute.xlu0 %1808
  %1810 = vrot.lane.b32.xlu0 %v215, 111
  %v1811 = vpop.permute.xlu0 %1810
  %1812 = vrot.lane.b32.xlu0 %v216, 111
  %v1813 = vpop.permute.xlu0 %1812
  %1814 = vrot.lane.b32.xlu0 %v217, 111
  %v1815 = vpop.permute.xlu0 %1814
  %vm1816 = vcmp.lt.s32.totalorder %v231, 111
  %v1817 = vsel %vm1816, %v1813, %v1815
  %v1818 = vsel %vm1816, %v1811, %v1813
  %v1819 = vsel %vm1816, %v1809, %v1811
  %v1820 = vsel %vm1816, %v1815, %v1809
  %vm1821 = vmand %vm1413, %vm639
  %v1822 = vsel %vm1821, 1, 0
  %v1823 = vcvt.s32.f32 %v1822
  %v1825 = vlaneseq
  %v1826 = vshrl.u32 %v1825, 7
  %v1827 = vsub.s32 0, %v1826
  %v1828 = vrot.slane %v1823, %v1827
  %v1829 = vlaneseq
  %v1830 = vshrl.u32 %v1829, 7
  %v1831 = vsub.s32 1, %v1830
  %v1832 = vrot.slane %v1823, %v1831
  %v1833 = vlaneseq
  %v1834 = vshrl.u32 %v1833, 7
  %v1835 = vsub.s32 2, %v1834
  %v1836 = vrot.slane %v1823, %v1835
  %v1837 = vlaneseq
  %v1838 = vshrl.u32 %v1837, 7
  %v1839 = vsub.s32 3, %v1838
  %v1840 = vrot.slane %v1823, %v1839
  %v1845 = vmul.f32 %v1819, %v1828
  %v1846 = vmul.f32 %v1818, %v1832
  %v1847 = vmul.f32 %v1817, %v1836
  %v1848 = vmul.f32 %v1820, %v1840
  %s1849 = scalar_lea.vmem %s2, 16
  %v1850 = vld [vmem:[%s1849] sm:$0x3]
  %v1852 = vsel %vm310, %v1850, 0
  %v1855 = vsel %vm314, %v1845, 0
  %v1858 = vsel %vm314, %v1846, 0
  %v1861 = vsel %vm314, %v1847, 0
  %v1864 = vsel %vm314, %v1848, 0
  %1866 = vmatprep.subr.mxu0 %v1858
  %1867 = vmatpush1.msra.mxu0 %v1855
  %1868 = vmatprep.subr.mxu0 0.0
  %1869 = vmatpush1.msra.mxu0 0.0
  %1870 = vmatprep.subr.mxu0 0.0
  %1871 = vmatpush1.msra.mxu0 0.0
  %1872 = vmatprep.subr.mxu0 0.0
  %1873 = vmatpush1.msra.mxu0 0.0
  %1874 = vmatprep.subr.mxu0 0.0
  %1875 = vmatpush1.msra.mxu0 0.0
  %1876 = vmatprep.subr.mxu0 0.0
  %1877 = vmatpush1.msra.mxu0 0.0
  %1878 = vmatprep.subr.mxu0 0.0
  %1879 = vmatpush1.msra.mxu0 0.0
  %1880 = vmatprep.subr.mxu0 0.0
  %1881 = vmatpush1.msra.mxu0 0.0
  %1882 = vmatprep.subr.mxu0 0.0
  %1883 = vmatpush1.msra.mxu0 0.0
  %1884 = vmatprep.subr.mxu0 0.0
  %1885 = vmatpush1.msra.mxu0 0.0
  %1886 = vmatprep.subr.mxu0 0.0
  %1887 = vmatpush1.msra.mxu0 0.0
  %1888 = vmatprep.subr.mxu0 0.0
  %1889 = vmatpush1.msra.mxu0 0.0
  %1890 = vmatprep.subr.mxu0 0.0
  %1891 = vmatpush1.msra.mxu0 0.0
  %1892 = vmatprep.subr.mxu0 0.0
  %1893 = vmatpush1.msra.mxu0 0.0
  %1894 = vmatprep.subr.mxu0 0.0
  %1895 = vmatpush1.msra.mxu0 0.0
  %1896 = vmatprep.subr.mxu0 0.0
  %1897 = vmatpush1.msra.mxu0 0.0
  %1898 = vmatprep.subr.mxu0 0.0
  %1899 = vmatpush1.msra.mxu0 0.0
  %1900 = vmatprep.subr.mxu0 0.0
  %1901 = vmatpush1.msra.mxu0 0.0
  %1902 = vmatprep.subr.mxu0 0.0
  %1903 = vmatpush1.msra.mxu0 0.0
  %1904 = vmatprep.subr.mxu0 0.0
  %1905 = vmatpush1.msra.mxu0 0.0
  %1906 = vmatprep.subr.mxu0 0.0
  %1907 = vmatpush1.msra.mxu0 0.0
  %1908 = vmatprep.subr.mxu0 0.0
  %1909 = vmatpush1.msra.mxu0 0.0
  %1910 = vmatprep.subr.mxu0 0.0
  %1911 = vmatpush1.msra.mxu0 0.0
  %1912 = vmatprep.subr.mxu0 0.0
  %1913 = vmatpush1.msra.mxu0 0.0
  %1914 = vmatprep.subr.mxu0 0.0
  %1915 = vmatpush1.msra.mxu0 0.0
  %1916 = vmatprep.subr.mxu0 0.0
  %1917 = vmatpush1.msra.mxu0 0.0
  %1918 = vmatprep.subr.mxu0 0.0
  %1919 = vmatpush1.msra.mxu0 0.0
  %1920 = vmatprep.subr.mxu0 0.0
  %1921 = vmatpush1.msra.mxu0 0.0
  %1922 = vmatprep.subr.mxu0 0.0
  %1923 = vmatpush1.msra.mxu0 0.0
  %1924 = vmatprep.subr.mxu0 0.0
  %1925 = vmatpush1.msra.mxu0 0.0
  %1926 = vmatprep.subr.mxu0 0.0
  %1927 = vmatpush1.msra.mxu0 0.0
  %1928 = vmatprep.subr.mxu0 0.0
  %1929 = vmatpush1.msra.mxu0 0.0
  %1930 = vmatprep.mubr.f32.mxu0 0.0
  %1931 = vmatmul.mubr.f32.gmra.mrb[0].mxu0 %v1852
  %v1932 = vpop.f32.mrb[0].mxu0
  %v1933 = vadd.f32 0.0, %v1932
  %v1934 = vpop.f32.mrb[0].mxu0
  %v1935 = vadd.f32 0.0, %v1934
  %1936 = vdwg.mxu0
  %1937 = vmatprep.subr.mxu0 %v1864
  %1938 = vmatpush1.msra.mxu0 %v1861
  %1939 = vmatprep.subr.mxu0 0.0
  %1940 = vmatpush1.msra.mxu0 0.0
  %1941 = vmatprep.subr.mxu0 0.0
  %1942 = vmatpush1.msra.mxu0 0.0
  %1943 = vmatprep.subr.mxu0 0.0
  %1944 = vmatpush1.msra.mxu0 0.0
  %1945 = vmatprep.subr.mxu0 0.0
  %1946 = vmatpush1.msra.mxu0 0.0
  %1947 = vmatprep.subr.mxu0 0.0
  %1948 = vmatpush1.msra.mxu0 0.0
  %1949 = vmatprep.subr.mxu0 0.0
  %1950 = vmatpush1.msra.mxu0 0.0
  %1951 = vmatprep.subr.mxu0 0.0
  %1952 = vmatpush1.msra.mxu0 0.0
  %1953 = vmatprep.subr.mxu0 0.0
  %1954 = vmatpush1.msra.mxu0 0.0
  %1955 = vmatprep.subr.mxu0 0.0
  %1956 = vmatpush1.msra.mxu0 0.0
  %1957 = vmatprep.subr.mxu0 0.0
  %1958 = vmatpush1.msra.mxu0 0.0
  %1959 = vmatprep.subr.mxu0 0.0
  %1960 = vmatpush1.msra.mxu0 0.0
  %1961 = vmatprep.subr.mxu0 0.0
  %1962 = vmatpush1.msra.mxu0 0.0
  %1963 = vmatprep.subr.mxu0 0.0
  %1964 = vmatpush1.msra.mxu0 0.0
  %1965 = vmatprep.subr.mxu0 0.0
  %1966 = vmatpush1.msra.mxu0 0.0
  %1967 = vmatprep.subr.mxu0 0.0
  %1968 = vmatpush1.msra.mxu0 0.0
  %1969 = vmatprep.subr.mxu0 0.0
  %1970 = vmatpush1.msra.mxu0 0.0
  %1971 = vmatprep.subr.mxu0 0.0
  %1972 = vmatpush1.msra.mxu0 0.0
  %1973 = vmatprep.subr.mxu0 0.0
  %1974 = vmatpush1.msra.mxu0 0.0
  %1975 = vmatprep.subr.mxu0 0.0
  %1976 = vmatpush1.msra.mxu0 0.0
  %1977 = vmatprep.subr.mxu0 0.0
  %1978 = vmatpush1.msra.mxu0 0.0
  %1979 = vmatprep.subr.mxu0 0.0
  %1980 = vmatpush1.msra.mxu0 0.0
  %1981 = vmatprep.subr.mxu0 0.0
  %1982 = vmatpush1.msra.mxu0 0.0
  %1983 = vmatprep.subr.mxu0 0.0
  %1984 = vmatpush1.msra.mxu0 0.0
  %1985 = vmatprep.subr.mxu0 0.0
  %1986 = vmatpush1.msra.mxu0 0.0
  %1987 = vmatprep.subr.mxu0 0.0
  %1988 = vmatpush1.msra.mxu0 0.0
  %1989 = vmatprep.subr.mxu0 0.0
  %1990 = vmatpush1.msra.mxu0 0.0
  %1991 = vmatprep.subr.mxu0 0.0
  %1992 = vmatpush1.msra.mxu0 0.0
  %1993 = vmatprep.subr.mxu0 0.0
  %1994 = vmatpush1.msra.mxu0 0.0
  %1995 = vmatprep.subr.mxu0 0.0
  %1996 = vmatpush1.msra.mxu0 0.0
  %1997 = vmatprep.subr.mxu0 0.0
  %1998 = vmatpush1.msra.mxu0 0.0
  %1999 = vmatprep.subr.mxu0 0.0
  %2000 = vmatpush1.msra.mxu0 0.0
  %2001 = vmatprep.mubr.f32.mxu0 0.0
  %2002 = vmatmul.mubr.f32.gmra.mrb[0].mxu0 %v1852
  %v2003 = vpop.f32.mrb[0].mxu0
  %v2004 = vadd.f32 0.0, %v2003
  %v2005 = vpop.f32.mrb[0].mxu0
  %v2006 = vadd.f32 0.0, %v2005
  %2007 = vdwg.mxu0
  %v2008 = vadd.f32 %v1804, %v1933
  %v2009 = vadd.f32 %v1805, %v1935
  %v2010 = vadd.f32 %v1806, %v2004
  %v2011 = vadd.f32 %v1807, %v2006
  %vm2016 = vcmask 1045504
  %v2017 = vrot.slane %v214, 2
  %v2018 = vrot.slane %v218, 2
  %v2019 = vsel %vm2016, %v2017, %v2018
  %v2020 = vrot.slane %v215, 2
  %v2021 = vrot.slane %v219, 2
  %v2022 = vsel %vm2016, %v2020, %v2021
  %v2023 = vrot.slane %v216, 2
  %v2024 = vrot.slane %v220, 2
  %v2025 = vsel %vm2016, %v2023, %v2024
  %v2026 = vrot.slane %v217, 2
  %v2027 = vrot.slane %v221, 2
  %v2028 = vsel %vm2016, %v2026, %v2027
  %2033 = vrot.lane.b32.xlu0 %v2019, 127
  %v2034 = vpop.permute.xlu0 %2033
  %2035 = vrot.lane.b32.xlu0 %v2022, 127
  %v2036 = vpop.permute.xlu0 %2035
  %2037 = vrot.lane.b32.xlu0 %v2025, 127
  %v2038 = vpop.permute.xlu0 %2037
  %2039 = vrot.lane.b32.xlu0 %v2028, 127
  %v2040 = vpop.permute.xlu0 %2039
  %v2041 = vsel %vm1205, %v2038, %v2040
  %v2042 = vsel %vm1205, %v2036, %v2038
  %v2043 = vsel %vm1205, %v2034, %v2036
  %v2044 = vsel %vm1205, %v2040, %v2034
  %vm2045 = vcmp.lt.s32.totalorder %v37, 15
  %v2046 = vsel %vm2045, 1, 0
  %v2047 = vcvt.s32.f32 %v2046
  %v2049 = vlaneseq
  %v2050 = vshrl.u32 %v2049, 7
  %v2051 = vsub.s32 0, %v2050
  %v2052 = vrot.slane %v2047, %v2051
  %v2053 = vlaneseq
  %v2054 = vshrl.u32 %v2053, 7
  %v2055 = vsub.s32 1, %v2054
  %v2056 = vrot.slane %v2047, %v2055
  %v2057 = vlaneseq
  %v2058 = vshrl.u32 %v2057, 7
  %v2059 = vsub.s32 2, %v2058
  %v2060 = vrot.slane %v2047, %v2059
  %v2061 = vlaneseq
  %v2062 = vshrl.u32 %v2061, 7
  %v2063 = vsub.s32 3, %v2062
  %v2064 = vrot.slane %v2047, %v2063
  %v2069 = vmul.f32 %v2043, %v2052
  %v2070 = vmul.f32 %v2042, %v2056
  %v2071 = vmul.f32 %v2041, %v2060
  %v2072 = vmul.f32 %v2044, %v2064
  %v2077 = vrot.slane %v2069, 6
  %v2078 = vrot.slane %v2070, 6
  %v2079 = vrot.slane %v2071, 6
  %v2080 = vrot.slane %v2072, 6
  %v2085 = vmax.f32 %v214, %v2077
  %v2086 = vmax.f32 %v215, %v2078
  %v2087 = vmax.f32 %v216, %v2079
  %v2088 = vmax.f32 %v217, %v2080
  %v2089 = vmax.f32 %v218, %v2077
  %v2090 = vmax.f32 %v219, %v2078
  %v2091 = vmax.f32 %v220, %v2079
  %v2092 = vmax.f32 %v221, %v2080
  %2093 = vrot.lane.b32.xlu0 %v2019, 126
  %v2094 = vpop.permute.xlu0 %2093
  %2095 = vrot.lane.b32.xlu0 %v2022, 126
  %v2096 = vpop.permute.xlu0 %2095
  %2097 = vrot.lane.b32.xlu0 %v2025, 126
  %v2098 = vpop.permute.xlu0 %2097
  %2099 = vrot.lane.b32.xlu0 %v2028, 126
  %v2100 = vpop.permute.xlu0 %2099
  %vm2101 = vcmp.lt.s32.totalorder %v231, 126
  %v2102 = vsel %vm2101, %v2098, %v2100
  %v2103 = vsel %vm2101, %v2096, %v2098
  %v2104 = vsel %vm2101, %v2094, %v2096
  %v2105 = vsel %vm2101, %v2100, %v2094
  %vm2106 = vcmp.lt.s32.totalorder %v37, 14
  %v2107 = vsel %vm2106, 1, 0
  %v2108 = vcvt.s32.f32 %v2107
  %v2110 = vlaneseq
  %v2111 = vshrl.u32 %v2110, 7
  %v2112 = vsub.s32 0, %v2111
  %v2113 = vrot.slane %v2108, %v2112
  %v2114 = vlaneseq
  %v2115 = vshrl.u32 %v2114, 7
  %v2116 = vsub.s32 1, %v2115
  %v2117 = vrot.slane %v2108, %v2116
  %v2118 = vlaneseq
  %v2119 = vshrl.u32 %v2118, 7
  %v2120 = vsub.s32 2, %v2119
  %v2121 = vrot.slane %v2108, %v2120
  %v2122 = vlaneseq
  %v2123 = vshrl.u32 %v2122, 7
  %v2124 = vsub.s32 3, %v2123
  %v2125 = vrot.slane %v2108, %v2124
  %v2130 = vmul.f32 %v2104, %v2113
  %v2131 = vmul.f32 %v2103, %v2117
  %v2132 = vmul.f32 %v2102, %v2121
  %v2133 = vmul.f32 %v2105, %v2125
  %v2138 = vrot.slane %v2130, 6
  %v2139 = vrot.slane %v2131, 6
  %v2140 = vrot.slane %v2132, 6
  %v2141 = vrot.slane %v2133, 6
  %v2146 = vmax.f32 %v2085, %v2138
  %v2147 = vmax.f32 %v2086, %v2139
  %v2148 = vmax.f32 %v2087, %v2140
  %v2149 = vmax.f32 %v2088, %v2141
  %v2150 = vmax.f32 %v2089, %v2138
  %v2151 = vmax.f32 %v2090, %v2139
  %v2152 = vmax.f32 %v2091, %v2140
  %v2153 = vmax.f32 %v2092, %v2141
  %2154 = vrot.lane.b32.xlu0 %v2019, 112
  %v2155 = vpop.permute.xlu0 %2154
  %2156 = vrot.lane.b32.xlu0 %v2022, 112
  %v2157 = vpop.permute.xlu0 %2156
  %2158 = vrot.lane.b32.xlu0 %v2025, 112
  %v2159 = vpop.permute.xlu0 %2158
  %2160 = vrot.lane.b32.xlu0 %v2028, 112
  %v2161 = vpop.permute.xlu0 %2160
  %v2162 = vsel %vm1613, %v2159, %v2161
  %v2163 = vsel %vm1613, %v2157, %v2159
  %v2164 = vsel %vm1613, %v2155, %v2157
  %v2165 = vsel %vm1613, %v2161, %v2155
  %vm2166 = vcmp.lt.s32.totalorder %v36, 15
  %v2167 = vsel %vm2166, 1, 0
  %v2168 = vcvt.s32.f32 %v2167
  %v2170 = vlaneseq
  %v2171 = vshrl.u32 %v2170, 7
  %v2172 = vsub.s32 0, %v2171
  %v2173 = vrot.slane %v2168, %v2172
  %v2174 = vlaneseq
  %v2175 = vshrl.u32 %v2174, 7
  %v2176 = vsub.s32 1, %v2175
  %v2177 = vrot.slane %v2168, %v2176
  %v2178 = vlaneseq
  %v2179 = vshrl.u32 %v2178, 7
  %v2180 = vsub.s32 2, %v2179
  %v2181 = vrot.slane %v2168, %v2180
  %v2182 = vlaneseq
  %v2183 = vshrl.u32 %v2182, 7
  %v2184 = vsub.s32 3, %v2183
  %v2185 = vrot.slane %v2168, %v2184
  %v2190 = vmul.f32 %v2164, %v2173
  %v2191 = vmul.f32 %v2163, %v2177
  %v2192 = vmul.f32 %v2162, %v2181
  %v2193 = vmul.f32 %v2165, %v2185
  %v2198 = vrot.slane %v2190, 6
  %v2199 = vrot.slane %v2191, 6
  %v2200 = vrot.slane %v2192, 6
  %v2201 = vrot.slane %v2193, 6
  %v2206 = vmax.f32 %v2146, %v2198
  %v2207 = vmax.f32 %v2147, %v2199
  %v2208 = vmax.f32 %v2148, %v2200
  %v2209 = vmax.f32 %v2149, %v2201
  %v2210 = vmax.f32 %v2150, %v2198
  %v2211 = vmax.f32 %v2151, %v2199
  %v2212 = vmax.f32 %v2152, %v2200
  %v2213 = vmax.f32 %v2153, %v2201
  %2214 = vrot.lane.b32.xlu0 %v2019, 111
  %v2215 = vpop.permute.xlu0 %2214
  %2216 = vrot.lane.b32.xlu0 %v2022, 111
  %v2217 = vpop.permute.xlu0 %2216
  %2218 = vrot.lane.b32.xlu0 %v2025, 111
  %v2219 = vpop.permute.xlu0 %2218
  %2220 = vrot.lane.b32.xlu0 %v2028, 111
  %v2221 = vpop.permute.xlu0 %2220
  %v2222 = vsel %vm1816, %v2219, %v2221
  %v2223 = vsel %vm1816, %v2217, %v2219
  %v2224 = vsel %vm1816, %v2215, %v2217
  %v2225 = vsel %vm1816, %v2221, %v2215
  %vm2226 = vmand %vm2166, %vm2045
  %v2227 = vsel %vm2226, 1, 0
  %v2228 = vcvt.s32.f32 %v2227
  %v2230 = vlaneseq
  %v2231 = vshrl.u32 %v2230, 7
  %v2232 = vsub.s32 0, %v2231
  %v2233 = vrot.slane %v2228, %v2232
  %v2234 = vlaneseq
  %v2235 = vshrl.u32 %v2234, 7
  %v2236 = vsub.s32 1, %v2235
  %v2237 = vrot.slane %v2228, %v2236
  %v2238 = vlaneseq
  %v2239 = vshrl.u32 %v2238, 7
  %v2240 = vsub.s32 2, %v2239
  %v2241 = vrot.slane %v2228, %v2240
  %v2242 = vlaneseq
  %v2243 = vshrl.u32 %v2242, 7
  %v2244 = vsub.s32 3, %v2243
  %v2245 = vrot.slane %v2228, %v2244
  %v2250 = vmul.f32 %v2224, %v2233
  %v2251 = vmul.f32 %v2223, %v2237
  %v2252 = vmul.f32 %v2222, %v2241
  %v2253 = vmul.f32 %v2225, %v2245
  %v2258 = vrot.slane %v2250, 6
  %v2259 = vrot.slane %v2251, 6
  %v2260 = vrot.slane %v2252, 6
  %v2261 = vrot.slane %v2253, 6
  %v2266 = vmax.f32 %v2206, %v2258
  %v2267 = vmax.f32 %v2207, %v2259
  %v2268 = vmax.f32 %v2208, %v2260
  %v2269 = vmax.f32 %v2209, %v2261
  %v2270 = vmax.f32 %v2210, %v2258
  %v2271 = vmax.f32 %v2211, %v2259
  %v2272 = vmax.f32 %v2212, %v2260
  %v2273 = vmax.f32 %v2213, %v2261
  %2274 = vrot.lane.b32.xlu0 %v2019, 110
  %v2275 = vpop.permute.xlu0 %2274
  %2276 = vrot.lane.b32.xlu0 %v2022, 110
  %v2277 = vpop.permute.xlu0 %2276
  %2278 = vrot.lane.b32.xlu0 %v2025, 110
  %v2279 = vpop.permute.xlu0 %2278
  %2280 = vrot.lane.b32.xlu0 %v2028, 110
  %v2281 = vpop.permute.xlu0 %2280
  %vm2282 = vcmp.lt.s32.totalorder %v231, 110
  %v2283 = vsel %vm2282, %v2279, %v2281
  %v2284 = vsel %vm2282, %v2277, %v2279
  %v2285 = vsel %vm2282, %v2275, %v2277
  %v2286 = vsel %vm2282, %v2281, %v2275
  %vm2287 = vmand %vm2166, %vm2106
  %v2288 = vsel %vm2287, 1, 0
  %v2289 = vcvt.s32.f32 %v2288
  %v2291 = vlaneseq
  %v2292 = vshrl.u32 %v2291, 7
  %v2293 = vsub.s32 0, %v2292
  %v2294 = vrot.slane %v2289, %v2293
  %v2295 = vlaneseq
  %v2296 = vshrl.u32 %v2295, 7
  %v2297 = vsub.s32 1, %v2296
  %v2298 = vrot.slane %v2289, %v2297
  %v2299 = vlaneseq
  %v2300 = vshrl.u32 %v2299, 7
  %v2301 = vsub.s32 2, %v2300
  %v2302 = vrot.slane %v2289, %v2301
  %v2303 = vlaneseq
  %v2304 = vshrl.u32 %v2303, 7
  %v2305 = vsub.s32 3, %v2304
  %v2306 = vrot.slane %v2289, %v2305
  %v2311 = vmul.f32 %v2285, %v2294
  %v2312 = vmul.f32 %v2284, %v2298
  %v2313 = vmul.f32 %v2283, %v2302
  %v2314 = vmul.f32 %v2286, %v2306
  %v2319 = vrot.slane %v2311, 6
  %v2320 = vrot.slane %v2312, 6
  %v2321 = vrot.slane %v2313, 6
  %v2322 = vrot.slane %v2314, 6
  %v2327 = vmax.f32 %v2266, %v2319
  %v2328 = vmax.f32 %v2267, %v2320
  %v2329 = vmax.f32 %v2268, %v2321
  %v2330 = vmax.f32 %v2269, %v2322
  %v2331 = vmax.f32 %v2270, %v2319
  %v2332 = vmax.f32 %v2271, %v2320
  %v2333 = vmax.f32 %v2272, %v2321
  %v2334 = vmax.f32 %v2273, %v2322
  %2335 = vrot.lane.b32.xlu0 %v2019, 96
  %v2336 = vpop.permute.xlu0 %2335
  %2337 = vrot.lane.b32.xlu0 %v2022, 96
  %v2338 = vpop.permute.xlu0 %2337
  %2339 = vrot.lane.b32.xlu0 %v2025, 96
  %v2340 = vpop.permute.xlu0 %2339
  %2341 = vrot.lane.b32.xlu0 %v2028, 96
  %v2342 = vpop.permute.xlu0 %2341
  %vm2343 = vcmp.lt.s32.totalorder %v231, 96
  %v2344 = vsel %vm2343, %v2340, %v2342
  %v2345 = vsel %vm2343, %v2338, %v2340
  %v2346 = vsel %vm2343, %v2336, %v2338
  %v2347 = vsel %vm2343, %v2342, %v2336
  %vm2348 = vcmp.lt.s32.totalorder %v36, 14
  %v2349 = vsel %vm2348, 1, 0
  %v2350 = vcvt.s32.f32 %v2349
  %v2352 = vlaneseq
  %v2353 = vshrl.u32 %v2352, 7
  %v2354 = vsub.s32 0, %v2353
  %v2355 = vrot.slane %v2350, %v2354
  %v2356 = vlaneseq
  %v2357 = vshrl.u32 %v2356, 7
  %v2358 = vsub.s32 1, %v2357
  %v2359 = vrot.slane %v2350, %v2358
  %v2360 = vlaneseq
  %v2361 = vshrl.u32 %v2360, 7
  %v2362 = vsub.s32 2, %v2361
  %v2363 = vrot.slane %v2350, %v2362
  %v2364 = vlaneseq
  %v2365 = vshrl.u32 %v2364, 7
  %v2366 = vsub.s32 3, %v2365
  %v2367 = vrot.slane %v2350, %v2366
  %v2372 = vmul.f32 %v2346, %v2355
  %v2373 = vmul.f32 %v2345, %v2359
  %v2374 = vmul.f32 %v2344, %v2363
  %v2375 = vmul.f32 %v2347, %v2367
  %v2380 = vrot.slane %v2372, 6
  %v2381 = vrot.slane %v2373, 6
  %v2382 = vrot.slane %v2374, 6
  %v2383 = vrot.slane %v2375, 6
  %v2388 = vmax.f32 %v2327, %v2380
  %v2389 = vmax.f32 %v2328, %v2381
  %v2390 = vmax.f32 %v2329, %v2382
  %v2391 = vmax.f32 %v2330, %v2383
  %v2392 = vmax.f32 %v2331, %v2380
  %v2393 = vmax.f32 %v2332, %v2381
  %v2394 = vmax.f32 %v2333, %v2382
  %v2395 = vmax.f32 %v2334, %v2383
  %2396 = vrot.lane.b32.xlu0 %v2019, 95
  %v2397 = vpop.permute.xlu0 %2396
  %2398 = vrot.lane.b32.xlu0 %v2022, 95
  %v2399 = vpop.permute.xlu0 %2398
  %2400 = vrot.lane.b32.xlu0 %v2025, 95
  %v2401 = vpop.permute.xlu0 %2400
  %2402 = vrot.lane.b32.xlu0 %v2028, 95
  %v2403 = vpop.permute.xlu0 %2402
  %vm2404 = vcmp.lt.s32.totalorder %v231, 95
  %v2405 = vsel %vm2404, %v2401, %v2403
  %v2406 = vsel %vm2404, %v2399, %v2401
  %v2407 = vsel %vm2404, %v2397, %v2399
  %v2408 = vsel %vm2404, %v2403, %v2397
  %vm2409 = vmand %vm2348, %vm2045
  %v2410 = vsel %vm2409, 1, 0
  %v2411 = vcvt.s32.f32 %v2410
  %v2413 = vlaneseq
  %v2414 = vshrl.u32 %v2413, 7
  %v2415 = vsub.s32 0, %v2414
  %v2416 = vrot.slane %v2411, %v2415
  %v2417 = vlaneseq
  %v2418 = vshrl.u32 %v2417, 7
  %v2419 = vsub.s32 1, %v2418
  %v2420 = vrot.slane %v2411, %v2419
  %v2421 = vlaneseq
  %v2422 = vshrl.u32 %v2421, 7
  %v2423 = vsub.s32 2, %v2422
  %v2424 = vrot.slane %v2411, %v2423
  %v2425 = vlaneseq
  %v2426 = vshrl.u32 %v2425, 7
  %v2427 = vsub.s32 3, %v2426
  %v2428 = vrot.slane %v2411, %v2427
  %v2433 = vmul.f32 %v2407, %v2416
  %v2434 = vmul.f32 %v2406, %v2420
  %v2435 = vmul.f32 %v2405, %v2424
  %v2436 = vmul.f32 %v2408, %v2428
  %v2441 = vrot.slane %v2433, 6
  %v2442 = vrot.slane %v2434, 6
  %v2443 = vrot.slane %v2435, 6
  %v2444 = vrot.slane %v2436, 6
  %v2449 = vmax.f32 %v2388, %v2441
  %v2450 = vmax.f32 %v2389, %v2442
  %v2451 = vmax.f32 %v2390, %v2443
  %v2452 = vmax.f32 %v2391, %v2444
  %v2453 = vmax.f32 %v2392, %v2441
  %v2454 = vmax.f32 %v2393, %v2442
  %v2455 = vmax.f32 %v2394, %v2443
  %v2456 = vmax.f32 %v2395, %v2444
  %2457 = vrot.lane.b32.xlu0 %v2019, 94
  %v2458 = vpop.permute.xlu0 %2457
  %2459 = vrot.lane.b32.xlu0 %v2022, 94
  %v2460 = vpop.permute.xlu0 %2459
  %2461 = vrot.lane.b32.xlu0 %v2025, 94
  %v2462 = vpop.permute.xlu0 %2461
  %2463 = vrot.lane.b32.xlu0 %v2028, 94
  %v2464 = vpop.permute.xlu0 %2463
  %vm2465 = vcmp.lt.s32.totalorder %v231, 94
  %v2466 = vsel %vm2465, %v2462, %v2464
  %v2467 = vsel %vm2465, %v2460, %v2462
  %v2468 = vsel %vm2465, %v2458, %v2460
  %v2469 = vsel %vm2465, %v2464, %v2458
  %vm2470 = vmand %vm2348, %vm2106
  %v2471 = vsel %vm2470, 1, 0
  %v2472 = vcvt.s32.f32 %v2471
  %v2474 = vlaneseq
  %v2475 = vshrl.u32 %v2474, 7
  %v2476 = vsub.s32 0, %v2475
  %v2477 = vrot.slane %v2472, %v2476
  %v2478 = vlaneseq
  %v2479 = vshrl.u32 %v2478, 7
  %v2480 = vsub.s32 1, %v2479
  %v2481 = vrot.slane %v2472, %v2480
  %v2482 = vlaneseq
  %v2483 = vshrl.u32 %v2482, 7
  %v2484 = vsub.s32 2, %v2483
  %v2485 = vrot.slane %v2472, %v2484
  %v2486 = vlaneseq
  %v2487 = vshrl.u32 %v2486, 7
  %v2488 = vsub.s32 3, %v2487
  %v2489 = vrot.slane %v2472, %v2488
  %v2494 = vmul.f32 %v2468, %v2477
  %v2495 = vmul.f32 %v2467, %v2481
  %v2496 = vmul.f32 %v2466, %v2485
  %v2497 = vmul.f32 %v2469, %v2489
  %v2502 = vrot.slane %v2494, 6
  %v2503 = vrot.slane %v2495, 6
  %v2504 = vrot.slane %v2496, 6
  %v2505 = vrot.slane %v2497, 6
  %v2510 = vmax.f32 %v2449, %v2502
  %v2511 = vmax.f32 %v2450, %v2503
  %v2512 = vmax.f32 %v2451, %v2504
  %v2513 = vmax.f32 %v2452, %v2505
  %v2514 = vmax.f32 %v2453, %v2502
  %v2515 = vmax.f32 %v2454, %v2503
  %v2516 = vmax.f32 %v2455, %v2504
  %v2517 = vmax.f32 %v2456, %v2505
  %v2518 = vlaneseq
  %v2519 = vshrl.u32 %v2518, 7
  %v2520 = vadd.s32 %v2519, 8
  %v2521 = vadd.s32 %v2519, 16
  %v2522 = vadd.s32 %v2519, 24
  %v2523 = vadd.s32 %v2519, 32
  %v2524 = vadd.s32 %v2519, 40
  %v2525 = vadd.s32 %v2519, 48
  %v2526 = vadd.s32 %v2519, 56
  %v2527 = vadd.s32 %v2519, 64
  %v2528 = vadd.s32 %v2519, 72
  %v2529 = vadd.s32 %v2519, 80
  %v2530 = vadd.s32 %v2519, 88
  %v2531 = vadd.s32 %v2519, 96
  %v2532 = vadd.s32 %v2519, 104
  %v2533 = vadd.s32 %v2519, 112
  %v2534 = vadd.s32 %v2519, 120
  %v2535 = vadd.s32 %v2519, 128
  %v2536 = vadd.s32 %v2519, 136
  %v2537 = vadd.s32 %v2519, 144
  %v2538 = vadd.s32 %v2519, 152
  %v2539 = vadd.s32 %v2519, 160
  %v2540 = vadd.s32 %v2519, 168
  %v2541 = vadd.s32 %v2519, 176
  %v2542 = vadd.s32 %v2519, 184
  %v2543 = vadd.s32 %v2519, 192
  %v2544 = vadd.s32 %v2519, 200
  %v2545 = vadd.s32 %v2519, 208
  %v2546 = vadd.s32 %v2519, 216
  %v2547 = vadd.s32 %v2519, 224
  %v2548 = vadd.s32 %v2519, 232
  %v2549 = vadd.s32 %v2519, 240
  %v2550 = vadd.s32 %v2519, 248
  %v2551 = vadd.s32 %v2519, 256
  %v2552 = vadd.s32 %v2519, 264
  %v2553 = vadd.s32 %v2519, 272
  %v2554 = vadd.s32 %v2519, 280
  %v2555 = vadd.s32 %v2519, 288
  %v2556 = vadd.s32 %v2519, 296
  %v2557 = vadd.s32 %v2519, 304
  %v2558 = vadd.s32 %v2519, 312
  %v2559 = vadd.s32 %v2519, 320
  %v2560 = vadd.s32 %v2519, 328
  %v2561 = vadd.s32 %v2519, 336
  %v2562 = vadd.s32 %v2519, 344
  %v2563 = vadd.s32 %v2519, 352
  %v2564 = vadd.s32 %v2519, 360
  %v2565 = vadd.s32 %v2519, 368
  %v2566 = vadd.s32 %v2519, 376
  %v2567 = vadd.s32 %v2519, 384
  %v2568 = vadd.s32 %v2519, 392
  %v2569 = vadd.s32 %v2519, 400
  %v2570 = vadd.s32 %v2519, 408
  %v2571 = vadd.s32 %v2519, 416
  %v2572 = vadd.s32 %v2519, 424
  %v2573 = vadd.s32 %v2519, 432
  %v2574 = vadd.s32 %v2519, 440
  %v2575 = vadd.s32 %v2519, 448
  %v2576 = vadd.s32 %v2519, 456
  %v2577 = vadd.s32 %v2519, 464
  %v2578 = vadd.s32 %v2519, 472
  %v2579 = vadd.s32 %v2519, 480
  %v2580 = vadd.s32 %v2519, 488
  %v2581 = vadd.s32 %v2519, 496
  %v2582 = vadd.s32 %v2519, 504
  %v2583 = vld [vmem:[%s8] sm:$0x1]
  %v2584 = vlaneseq
  %v2585 = vshrl.u32 %v2584, 7
  %v2586 = vsub.s32 0, %v2585
  %v2587 = vrot.slane %v2583, %v2586
  %vm2588 = vcmp.eq.s32.totalorder %v2519, %v2587
  %vm2589 = vcmp.eq.s32.totalorder %v2520, %v2587
  %vm2590 = vcmp.eq.s32.totalorder %v2521, %v2587
  %vm2591 = vcmp.eq.s32.totalorder %v2522, %v2587
  %vm2592 = vcmp.eq.s32.totalorder %v2523, %v2587
  %vm2593 = vcmp.eq.s32.totalorder %v2524, %v2587
  %vm2594 = vcmp.eq.s32.totalorder %v2525, %v2587
  %vm2595 = vcmp.eq.s32.totalorder %v2526, %v2587
  %vm2596 = vcmp.eq.s32.totalorder %v2527, %v2587
  %vm2597 = vcmp.eq.s32.totalorder %v2528, %v2587
  %vm2598 = vcmp.eq.s32.totalorder %v2529, %v2587
  %vm2599 = vcmp.eq.s32.totalorder %v2530, %v2587
  %vm2600 = vcmp.eq.s32.totalorder %v2531, %v2587
  %vm2601 = vcmp.eq.s32.totalorder %v2532, %v2587
  %vm2602 = vcmp.eq.s32.totalorder %v2533, %v2587
  %vm2603 = vcmp.eq.s32.totalorder %v2534, %v2587
  %vm2604 = vcmp.eq.s32.totalorder %v2535, %v2587
  %vm2605 = vcmp.eq.s32.totalorder %v2536, %v2587
  %vm2606 = vcmp.eq.s32.totalorder %v2537, %v2587
  %vm2607 = vcmp.eq.s32.totalorder %v2538, %v2587
  %vm2608 = vcmp.eq.s32.totalorder %v2539, %v2587
  %vm2609 = vcmp.eq.s32.totalorder %v2540, %v2587
  %vm2610 = vcmp.eq.s32.totalorder %v2541, %v2587
  %vm2611 = vcmp.eq.s32.totalorder %v2542, %v2587
  %vm2612 = vcmp.eq.s32.totalorder %v2543, %v2587
  %vm2613 = vcmp.eq.s32.totalorder %v2544, %v2587
  %vm2614 = vcmp.eq.s32.totalorder %v2545, %v2587
  %vm2615 = vcmp.eq.s32.totalorder %v2546, %v2587
  %vm2616 = vcmp.eq.s32.totalorder %v2547, %v2587
  %vm2617 = vcmp.eq.s32.totalorder %v2548, %v2587
  %vm2618 = vcmp.eq.s32.totalorder %v2549, %v2587
  %vm2619 = vcmp.eq.s32.totalorder %v2550, %v2587
  %vm2620 = vcmp.eq.s32.totalorder %v2551, %v2587
  %vm2621 = vcmp.eq.s32.totalorder %v2552, %v2587
  %vm2622 = vcmp.eq.s32.totalorder %v2553, %v2587
  %vm2623 = vcmp.eq.s32.totalorder %v2554, %v2587
  %vm2624 = vcmp.eq.s32.totalorder %v2555, %v2587
  %vm2625 = vcmp.eq.s32.totalorder %v2556, %v2587
  %vm2626 = vcmp.eq.s32.totalorder %v2557, %v2587
  %vm2627 = vcmp.eq.s32.totalorder %v2558, %v2587
  %vm2628 = vcmp.eq.s32.totalorder %v2559, %v2587
  %vm2629 = vcmp.eq.s32.totalorder %v2560, %v2587
  %vm2630 = vcmp.eq.s32.totalorder %v2561, %v2587
  %vm2631 = vcmp.eq.s32.totalorder %v2562, %v2587
  %vm2632 = vcmp.eq.s32.totalorder %v2563, %v2587
  %vm2633 = vcmp.eq.s32.totalorder %v2564, %v2587
  %vm2634 = vcmp.eq.s32.totalorder %v2565, %v2587
  %vm2635 = vcmp.eq.s32.totalorder %v2566, %v2587
  %vm2636 = vcmp.eq.s32.totalorder %v2567, %v2587
  %vm2637 = vcmp.eq.s32.totalorder %v2568, %v2587
  %vm2638 = vcmp.eq.s32.totalorder %v2569, %v2587
  %vm2639 = vcmp.eq.s32.totalorder %v2570, %v2587
  %vm2640 = vcmp.eq.s32.totalorder %v2571, %v2587
  %vm2641 = vcmp.eq.s32.totalorder %v2572, %v2587
  %vm2642 = vcmp.eq.s32.totalorder %v2573, %v2587
  %vm2643 = vcmp.eq.s32.totalorder %v2574, %v2587
  %vm2644 = vcmp.eq.s32.totalorder %v2575, %v2587
  %vm2645 = vcmp.eq.s32.totalorder %v2576, %v2587
  %vm2646 = vcmp.eq.s32.totalorder %v2577, %v2587
  %vm2647 = vcmp.eq.s32.totalorder %v2578, %v2587
  %vm2648 = vcmp.eq.s32.totalorder %v2579, %v2587
  %vm2649 = vcmp.eq.s32.totalorder %v2580, %v2587
  %vm2650 = vcmp.eq.s32.totalorder %v2581, %v2587
  %vm2651 = vcmp.eq.s32.totalorder %v2582, %v2587
  %v2652 = vsel %vm2588, 1, 0
  %v2653 = vsel %vm2589, 1, 0
  %v2654 = vsel %vm2590, 1, 0
  %v2655 = vsel %vm2591, 1, 0
  %v2656 = vsel %vm2592, 1, 0
  %v2657 = vsel %vm2593, 1, 0
  %v2658 = vsel %vm2594, 1, 0
  %v2659 = vsel %vm2595, 1, 0
  %v2660 = vsel %vm2596, 1, 0
  %v2661 = vsel %vm2597, 1, 0
  %v2662 = vsel %vm2598, 1, 0
  %v2663 = vsel %vm2599, 1, 0
  %v2664 = vsel %vm2600, 1, 0
  %v2665 = vsel %vm2601, 1, 0
  %v2666 = vsel %vm2602, 1, 0
  %v2667 = vsel %vm2603, 1, 0
  %v2668 = vsel %vm2604, 1, 0
  %v2669 = vsel %vm2605, 1, 0
  %v2670 = vsel %vm2606, 1, 0
  %v2671 = vsel %vm2607, 1, 0
  %v2672 = vsel %vm2608, 1, 0
  %v2673 = vsel %vm2609, 1, 0
  %v2674 = vsel %vm2610, 1, 0
  %v2675 = vsel %vm2611, 1, 0
  %v2676 = vsel %vm2612, 1, 0
  %v2677 = vsel %vm2613, 1, 0
  %v2678 = vsel %vm2614, 1, 0
  %v2679 = vsel %vm2615, 1, 0
  %v2680 = vsel %vm2616, 1, 0
  %v2681 = vsel %vm2617, 1, 0
  %v2682 = vsel %vm2618, 1, 0
  %v2683 = vsel %vm2619, 1, 0
  %v2684 = vsel %vm2620, 1, 0
  %v2685 = vsel %vm2621, 1, 0
  %v2686 = vsel %vm2622, 1, 0
  %v2687 = vsel %vm2623, 1, 0
  %v2688 = vsel %vm2624, 1, 0
  %v2689 = vsel %vm2625, 1, 0
  %v2690 = vsel %vm2626, 1, 0
  %v2691 = vsel %vm2627, 1, 0
  %v2692 = vsel %vm2628, 1, 0
  %v2693 = vsel %vm2629, 1, 0
  %v2694 = vsel %vm2630, 1, 0
  %v2695 = vsel %vm2631, 1, 0
  %v2696 = vsel %vm2632, 1, 0
  %v2697 = vsel %vm2633, 1, 0
  %v2698 = vsel %vm2634, 1, 0
  %v2699 = vsel %vm2635, 1, 0
  %v2700 = vsel %vm2636, 1, 0
  %v2701 = vsel %vm2637, 1, 0
  %v2702 = vsel %vm2638, 1, 0
  %v2703 = vsel %vm2639, 1, 0
  %v2704 = vsel %vm2640, 1, 0
  %v2705 = vsel %vm2641, 1, 0
  %v2706 = vsel %vm2642, 1, 0
  %v2707 = vsel %vm2643, 1, 0
  %v2708 = vsel %vm2644, 1, 0
  %v2709 = vsel %vm2645, 1, 0
  %v2710 = vsel %vm2646, 1, 0
  %v2711 = vsel %vm2647, 1, 0
  %v2712 = vsel %vm2648, 1, 0
  %v2713 = vsel %vm2649, 1, 0
  %v2714 = vsel %vm2650, 1, 0
  %v2715 = vsel %vm2651, 1, 0
  %v2716 = vcvt.s32.f32 %v2652
  %v2717 = vcvt.s32.f32 %v2653
  %v2718 = vcvt.s32.f32 %v2654
  %v2719 = vcvt.s32.f32 %v2655
  %v2720 = vcvt.s32.f32 %v2656
  %v2721 = vcvt.s32.f32 %v2657
  %v2722 = vcvt.s32.f32 %v2658
  %v2723 = vcvt.s32.f32 %v2659
  %v2724 = vcvt.s32.f32 %v2660
  %v2725 = vcvt.s32.f32 %v2661
  %v2726 = vcvt.s32.f32 %v2662
  %v2727 = vcvt.s32.f32 %v2663
  %v2728 = vcvt.s32.f32 %v2664
  %v2729 = vcvt.s32.f32 %v2665
  %v2730 = vcvt.s32.f32 %v2666
  %v2731 = vcvt.s32.f32 %v2667
  %v2732 = vcvt.s32.f32 %v2668
  %v2733 = vcvt.s32.f32 %v2669
  %v2734 = vcvt.s32.f32 %v2670
  %v2735 = vcvt.s32.f32 %v2671
  %v2736 = vcvt.s32.f32 %v2672
  %v2737 = vcvt.s32.f32 %v2673
  %v2738 = vcvt.s32.f32 %v2674
  %v2739 = vcvt.s32.f32 %v2675
  %v2740 = vcvt.s32.f32 %v2676
  %v2741 = vcvt.s32.f32 %v2677
  %v2742 = vcvt.s32.f32 %v2678
  %v2743 = vcvt.s32.f32 %v2679
  %v2744 = vcvt.s32.f32 %v2680
  %v2745 = vcvt.s32.f32 %v2681
  %v2746 = vcvt.s32.f32 %v2682
  %v2747 = vcvt.s32.f32 %v2683
  %v2748 = vcvt.s32.f32 %v2684
  %v2749 = vcvt.s32.f32 %v2685
  %v2750 = vcvt.s32.f32 %v2686
  %v2751 = vcvt.s32.f32 %v2687
  %v2752 = vcvt.s32.f32 %v2688
  %v2753 = vcvt.s32.f32 %v2689
  %v2754 = vcvt.s32.f32 %v2690
  %v2755 = vcvt.s32.f32 %v2691
  %v2756 = vcvt.s32.f32 %v2692
  %v2757 = vcvt.s32.f32 %v2693
  %v2758 = vcvt.s32.f32 %v2694
  %v2759 = vcvt.s32.f32 %v2695
  %v2760 = vcvt.s32.f32 %v2696
  %v2761 = vcvt.s32.f32 %v2697
  %v2762 = vcvt.s32.f32 %v2698
  %v2763 = vcvt.s32.f32 %v2699
  %v2764 = vcvt.s32.f32 %v2700
  %v2765 = vcvt.s32.f32 %v2701
  %v2766 = vcvt.s32.f32 %v2702
  %v2767 = vcvt.s32.f32 %v2703
  %v2768 = vcvt.s32.f32 %v2704
  %v2769 = vcvt.s32.f32 %v2705
  %v2770 = vcvt.s32.f32 %v2706
  %v2771 = vcvt.s32.f32 %v2707
  %v2772 = vcvt.s32.f32 %v2708
  %v2773 = vcvt.s32.f32 %v2709
  %v2774 = vcvt.s32.f32 %v2710
  %v2775 = vcvt.s32.f32 %v2711
  %v2776 = vcvt.s32.f32 %v2712
  %v2777 = vcvt.s32.f32 %v2713
  %v2778 = vcvt.s32.f32 %v2714
  %v2779 = vcvt.s32.f32 %v2715
  %v2780 = vsel %vm314, %v2008, %v2510
  %v2781 = vsel %vm314, %v2009, %v2511
  %v2782 = vsel %vm314, %v2010, %v2512
  %v2783 = vsel %vm314, %v2011, %v2513
  %2784 = vmatprep.subr.mxu0 0.0
  %2785 = vmatpush1.msra.mxu0 %v2716
  %2786 = vmatprep.subr.mxu0 0.0
  %2787 = vmatpush1.msra.mxu0 %v2717
  %2788 = vmatprep.subr.mxu0 0.0
  %2789 = vmatpush1.msra.mxu0 %v2718
  %2790 = vmatprep.subr.mxu0 0.0
  %2791 = vmatpush1.msra.mxu0 %v2719
  %2792 = vmatprep.subr.mxu0 0.0
  %2793 = vmatpush1.msra.mxu0 %v2720
  %2794 = vmatprep.subr.mxu0 0.0
  %2795 = vmatpush1.msra.mxu0 %v2721
  %2796 = vmatprep.subr.mxu0 0.0
  %2797 = vmatpush1.msra.mxu0 %v2722
  %2798 = vmatprep.subr.mxu0 0.0
  %2799 = vmatpush1.msra.mxu0 %v2723
  %2800 = vmatprep.subr.mxu0 0.0
  %2801 = vmatpush1.msra.mxu0 %v2724
  %2802 = vmatprep.subr.mxu0 0.0
  %2803 = vmatpush1.msra.mxu0 %v2725
  %2804 = vmatprep.subr.mxu0 0.0
  %2805 = vmatpush1.msra.mxu0 %v2726
  %2806 = vmatprep.subr.mxu0 0.0
  %2807 = vmatpush1.msra.mxu0 %v2727
  %2808 = vmatprep.subr.mxu0 0.0
  %2809 = vmatpush1.msra.mxu0 %v2728
  %2810 = vmatprep.subr.mxu0 0.0
  %2811 = vmatpush1.msra.mxu0 %v2729
  %2812 = vmatprep.subr.mxu0 0.0
  %2813 = vmatpush1.msra.mxu0 %v2730
  %2814 = vmatprep.subr.mxu0 0.0
  %2815 = vmatpush1.msra.mxu0 %v2731
  %2816 = vmatprep.subr.mxu0 0.0
  %2817 = vmatpush1.msra.mxu0 %v2732
  %2818 = vmatprep.subr.mxu0 0.0
  %2819 = vmatpush1.msra.mxu0 %v2733
  %2820 = vmatprep.subr.mxu0 0.0
  %2821 = vmatpush1.msra.mxu0 %v2734
  %2822 = vmatprep.subr.mxu0 0.0
  %2823 = vmatpush1.msra.mxu0 %v2735
  %2824 = vmatprep.subr.mxu0 0.0
  %2825 = vmatpush1.msra.mxu0 %v2736
  %2826 = vmatprep.subr.mxu0 0.0
  %2827 = vmatpush1.msra.mxu0 %v2737
  %2828 = vmatprep.subr.mxu0 0.0
  %2829 = vmatpush1.msra.mxu0 %v2738
  %2830 = vmatprep.subr.mxu0 0.0
  %2831 = vmatpush1.msra.mxu0 %v2739
  %2832 = vmatprep.subr.mxu0 0.0
  %2833 = vmatpush1.msra.mxu0 %v2740
  %2834 = vmatprep.subr.mxu0 0.0
  %2835 = vmatpush1.msra.mxu0 %v2741
  %2836 = vmatprep.subr.mxu0 0.0
  %2837 = vmatpush1.msra.mxu0 %v2742
  %2838 = vmatprep.subr.mxu0 0.0
  %2839 = vmatpush1.msra.mxu0 %v2743
  %2840 = vmatprep.subr.mxu0 0.0
  %2841 = vmatpush1.msra.mxu0 %v2744
  %2842 = vmatprep.subr.mxu0 0.0
  %2843 = vmatpush1.msra.mxu0 %v2745
  %2844 = vmatprep.subr.mxu0 0.0
  %2845 = vmatpush1.msra.mxu0 %v2746
  %2846 = vmatprep.subr.mxu0 0.0
  %2847 = vmatpush1.msra.mxu0 %v2747
  %2848 = vmatprep.mubr.f32.mxu0 %v2781
  %2849 = vmatmul.mubr.f32.gmra.mrb[0].mxu0 %v2780
  %v2850 = vpop.f32.mrb[0].mxu0
  %v2851 = vadd.f32 0.0, %v2850
  %v2852 = vpop.f32.mrb[0].mxu0
  %2853 = vmatprep.mubr.f32.mxu0 %v2515
  %2854 = vmatmul.mubr.f32.gmra.mrb[0].mxu0 %v2514
  %v2855 = vpop.f32.mrb[0].mxu0
  %v2856 = vadd.f32 0.0, %v2855
  %v2857 = vpop.f32.mrb[0].mxu0
  %2858 = vdwg.mxu0
  %2859 = vmatprep.subr.mxu0 0.0
  %2860 = vmatpush1.msra.mxu0 %v2748
  %2861 = vmatprep.subr.mxu0 0.0
  %2862 = vmatpush1.msra.mxu0 %v2749
  %2863 = vmatprep.subr.mxu0 0.0
  %2864 = vmatpush1.msra.mxu0 %v2750
  %2865 = vmatprep.subr.mxu0 0.0
  %2866 = vmatpush1.msra.mxu0 %v2751
  %2867 = vmatprep.subr.mxu0 0.0
  %2868 = vmatpush1.msra.mxu0 %v2752
  %2869 = vmatprep.subr.mxu0 0.0
  %2870 = vmatpush1.msra.mxu0 %v2753
  %2871 = vmatprep.subr.mxu0 0.0
  %2872 = vmatpush1.msra.mxu0 %v2754
  %2873 = vmatprep.subr.mxu0 0.0
  %2874 = vmatpush1.msra.mxu0 %v2755
  %2875 = vmatprep.subr.mxu0 0.0
  %2876 = vmatpush1.msra.mxu0 %v2756
  %2877 = vmatprep.subr.mxu0 0.0
  %2878 = vmatpush1.msra.mxu0 %v2757
  %2879 = vmatprep.subr.mxu0 0.0
  %2880 = vmatpush1.msra.mxu0 %v2758
  %2881 = vmatprep.subr.mxu0 0.0
  %2882 = vmatpush1.msra.mxu0 %v2759
  %2883 = vmatprep.subr.mxu0 0.0
  %2884 = vmatpush1.msra.mxu0 %v2760
  %2885 = vmatprep.subr.mxu0 0.0
  %2886 = vmatpush1.msra.mxu0 %v2761
  %2887 = vmatprep.subr.mxu0 0.0
  %2888 = vmatpush1.msra.mxu0 %v2762
  %2889 = vmatprep.subr.mxu0 0.0
  %2890 = vmatpush1.msra.mxu0 %v2763
  %2891 = vmatprep.subr.mxu0 0.0
  %2892 = vmatpush1.msra.mxu0 %v2764
  %2893 = vmatprep.subr.mxu0 0.0
  %2894 = vmatpush1.msra.mxu0 %v2765
  %2895 = vmatprep.subr.mxu0 0.0
  %2896 = vmatpush1.msra.mxu0 %v2766
  %2897 = vmatprep.subr.mxu0 0.0
  %2898 = vmatpush1.msra.mxu0 %v2767
  %2899 = vmatprep.subr.mxu0 0.0
  %2900 = vmatpush1.msra.mxu0 %v2768
  %2901 = vmatprep.subr.mxu0 0.0
  %2902 = vmatpush1.msra.mxu0 %v2769
  %2903 = vmatprep.subr.mxu0 0.0
  %2904 = vmatpush1.msra.mxu0 %v2770
  %2905 = vmatprep.subr.mxu0 0.0
  %2906 = vmatpush1.msra.mxu0 %v2771
  %2907 = vmatprep.subr.mxu0 0.0
  %2908 = vmatpush1.msra.mxu0 %v2772
  %2909 = vmatprep.subr.mxu0 0.0
  %2910 = vmatpush1.msra.mxu0 %v2773
  %2911 = vmatprep.subr.mxu0 0.0
  %2912 = vmatpush1.msra.mxu0 %v2774
  %2913 = vmatprep.subr.mxu0 0.0
  %2914 = vmatpush1.msra.mxu0 %v2775
  %2915 = vmatprep.subr.mxu0 0.0
  %2916 = vmatpush1.msra.mxu0 %v2776
  %2917 = vmatprep.subr.mxu0 0.0
  %2918 = vmatpush1.msra.mxu0 %v2777
  %2919 = vmatprep.subr.mxu0 0.0
  %2920 = vmatpush1.msra.mxu0 %v2778
  %2921 = vmatprep.subr.mxu0 0.0
  %2922 = vmatpush1.msra.mxu0 %v2779
  %2923 = vmatprep.mubr.f32.mxu0 %v2783
  %2924 = vmatmul.mubr.f32.gmra.mrb[0].mxu0 %v2782
  %v2925 = vpop.f32.mrb[0].mxu0
  %v2926 = vadd.f32 %v2851, %v2925
  %v2927 = vpop.f32.mrb[0].mxu0
  %2928 = vmatprep.mubr.f32.mxu0 %v2517
  %2929 = vmatmul.mubr.f32.gmra.mrb[0].mxu0 %v2516
  %v2930 = vpop.f32.mrb[0].mxu0
  %v2931 = vadd.f32 %v2856, %v2930
  %v2932 = vpop.f32.mrb[0].mxu0
  %2933 = vdwg.mxu0
  %v2934 = vld [vmem:[%s3] sm:$0x3]
  %2936 = vset.pattern.permute.xlu0 0
  %2937 = vperm.xlu0 %2936, %v2934
  %v2938 = vpop.permute.xlu0 %2937
  %v2940 = vadd.f32 %v2926, %v2938
  %v2941 = vmax.f32 %v2940, 0.0
  %v2942 = vld [vmem:[%s4] sm:$0xff]
  %v2943 = vld [vmem:[%s5] sm:$0xff]
  %2945 = vset.pattern.permute.xlu0 0
  %2946 = vperm.xlu0 %2945, %v2943
  %v2947 = vpop.permute.xlu0 %2946
  %v2950 = vsel %vm310, %v2942, 0
  %v2953 = vsel %vm314, %v2941, 0
  %2955 = vmatprep.subr.mxu0 0.0
  %2956 = vmatpush1.msra.mxu0 %v2953
  %2957 = vmatprep.subr.mxu0 0.0
  %2958 = vmatpush1.msra.mxu0 0.0
  %2959 = vmatprep.subr.mxu0 0.0
  %2960 = vmatpush1.msra.mxu0 0.0
  %2961 = vmatprep.subr.mxu0 0.0
  %2962 = vmatpush1.msra.mxu0 0.0
  %2963 = vmatprep.subr.mxu0 0.0
  %2964 = vmatpush1.msra.mxu0 0.0
  %2965 = vmatprep.subr.mxu0 0.0
  %2966 = vmatpush1.msra.mxu0 0.0
  %2967 = vmatprep.subr.mxu0 0.0
  %2968 = vmatpush1.msra.mxu0 0.0
  %2969 = vmatprep.subr.mxu0 0.0
  %2970 = vmatpush1.msra.mxu0 0.0
  %2971 = vmatprep.subr.mxu0 0.0
  %2972 = vmatpush1.msra.mxu0 0.0
  %2973 = vmatprep.subr.mxu0 0.0
  %2974 = vmatpush1.msra.mxu0 0.0
  %2975 = vmatprep.subr.mxu0 0.0
  %2976 = vmatpush1.msra.mxu0 0.0
  %2977 = vmatprep.subr.mxu0 0.0
  %2978 = vmatpush1.msra.mxu0 0.0
  %2979 = vmatprep.subr.mxu0 0.0
  %2980 = vmatpush1.msra.mxu0 0.0
  %2981 = vmatprep.subr.mxu0 0.0
  %2982 = vmatpush1.msra.mxu0 0.0
  %2983 = vmatprep.subr.mxu0 0.0
  %2984 = vmatpush1.msra.mxu0 0.0
  %2985 = vmatprep.subr.mxu0 0.0
  %2986 = vmatpush1.msra.mxu0 0.0
  %2987 = vmatprep.subr.mxu0 0.0
  %2988 = vmatpush1.msra.mxu0 0.0
  %2989 = vmatprep.subr.mxu0 0.0
  %2990 = vmatpush1.msra.mxu0 0.0
  %2991 = vmatprep.subr.mxu0 0.0
  %2992 = vmatpush1.msra.mxu0 0.0
  %2993 = vmatprep.subr.mxu0 0.0
  %2994 = vmatpush1.msra.mxu0 0.0
  %2995 = vmatprep.subr.mxu0 0.0
  %2996 = vmatpush1.msra.mxu0 0.0
  %2997 = vmatprep.subr.mxu0 0.0
  %2998 = vmatpush1.msra.mxu0 0.0
  %2999 = vmatprep.subr.mxu0 0.0
  %3000 = vmatpush1.msra.mxu0 0.0
  %3001 = vmatprep.subr.mxu0 0.0
  %3002 = vmatpush1.msra.mxu0 0.0
  %3003 = vmatprep.subr.mxu0 0.0
  %3004 = vmatpush1.msra.mxu0 0.0
  %3005 = vmatprep.subr.mxu0 0.0
  %3006 = vmatpush1.msra.mxu0 0.0
  %3007 = vmatprep.subr.mxu0 0.0
  %3008 = vmatpush1.msra.mxu0 0.0
  %3009 = vmatprep.subr.mxu0 0.0
  %3010 = vmatpush1.msra.mxu0 0.0
  %3011 = vmatprep.subr.mxu0 0.0
  %3012 = vmatpush1.msra.mxu0 0.0
  %3013 = vmatprep.subr.mxu0 0.0
  %3014 = vmatpush1.msra.mxu0 0.0
  %3015 = vmatprep.subr.mxu0 0.0
  %3016 = vmatpush1.msra.mxu0 0.0
  %3017 = vmatprep.subr.mxu0 0.0
  %3018 = vmatpush1.msra.mxu0 0.0
  %3019 = vmatprep.mubr.f32.mxu0 0.0
  %3020 = vmatmul.mubr.f32.gmra.mrb[0].mxu0 %v2950
  %v3021 = vpop.f32.mrb[0].mxu0
  %v3022 = vadd.f32 %v2947, %v3021
  %v3023 = vpop.f32.mrb[0].mxu0
  %3024 = vdwg.mxu0
  %v3025 = vmax.f32 %v3022, 0.0
  %3026 = vst [vmem:[%s9] sm:$0xff] %v3025
  %3027 = vst [vmem:[%s9 + $0x6] sm:$0xfc] %v2926
  %3028 = vst [vmem:[%s9 + $0xe] sm:$0x3] %v2931
  // Predicated region
  $region38: #{bottleneck_forward.1} parent=0 // pred_check
    _
  $region39: #{bottleneck_forward.1} parent=0 // pred_check_branch
    %3030 = sbr.rel (0) target = $region41
  $region40: #{bottleneck_forward.1} parent=0 // pred_region
    _
  $region41: #{bottleneck_forward.1} parent=0 // pred_fallthru
    _
  // Predicated region
  $region42: #{bottleneck_forward.1} parent=0 // pred_check
    _
  $region43: #{bottleneck_forward.1} parent=0 // pred_check_branch
    %3032 = sbr.rel (0) target = $region45
  $region44: #{bottleneck_forward.1} parent=0 // pred_region
    _
  $region45: #{bottleneck_forward.1} parent=0 // pred_fallthru
    _

</llo_original>
